<compile_context>
chip_gen: v7x
topology: tpu7x:2x2x1
jax: 0.10.0
libtpu: 0.0.40
codegen_flags: <defaults>
</compile_context>

<pallas_src>
import functools

import jax
import jax.numpy as jnp
from jax import lax
from jax.experimental import pallas as pl
from jax.experimental.pallas import tpu as pltpu


# ----------------------------------------------------------------------------
# Wavelet channel-mixing matrices for the pixel-unshuffled layout.
# Pixel chunk order along the channel axis: [(0,0), (0,1), (1,0), (1,1)]
# == [x1, x3, x2, x4] in the PyTorch dwt() naming.  Subband order: [LL,LH,HL,HH].
# ----------------------------------------------------------------------------
def wavelet_matrices(channels):
    # rows: input pixel chunks [x1, x3, x2, x4]; cols: subbands [LL, LH, HL, HH]
    t_dwt = jnp.array([[1., -1., -1.,  1.],
                       [1., -1.,  1., -1.],
                       [1.,  1., -1., -1.],
                       [1.,  1.,  1.,  1.]], jnp.float32)
    # rows: subbands [LL, LH, HL, HH]; cols: output pixel chunks [x1, x3, x2, x4]
    t_iwt = 0.25 * jnp.array([[ 1.,  1.,  1.,  1.],
                              [-1.,  1., -1.,  1.],
                              [-1., -1.,  1.,  1.],
                              [ 1., -1., -1.,  1.]], jnp.float32)
    eye = jnp.eye(channels, dtype=jnp.float32)
    return jnp.kron(t_dwt, eye), jnp.kron(t_iwt, eye)


# ----------------------------------------------------------------------------
# Fused WTResBlock kernel:
#   (DWT*BNscale0) -> [+bias -> swish -> 3x3 conv] x n (last conv folded w/ IWT)
#   -> + residual
# ----------------------------------------------------------------------------
def _wt_resblock_kernel(x_ref, dwtb_ref, scale_ref, bias_ref, w_ref, cb_ref,
                        o_ref, pad_ref, *, hs, ws, nconv):
    # x_ref:     (1, HW, C4)        pixel-unshuffled map (one batch elem), f32
    # dwtb_ref:  (C4, C4)           DWT channel mix with stage-0 BN scale folded, f32
    # scale_ref: (nconv, C4)        folded BN scale (row 0 unused -- folded into dwtb)
    # bias_ref:  (nconv, C4)        folded BN bias
    # w_ref:     (nconv, 9, C4, C4) per-tap conv weights, bf16 (last stage pre-mult by IWT)
    # cb_ref:    (nconv, C4)        conv biases (last stage pre-mult by IWT)
    # o_ref:     (1, HW, C4)        output, f32
    # pad_ref:   (hs+2, ws+2, C4)   VMEM scratch: bf16 zero-halo padded activation map
    C4 = x_ref.shape[-1]
    HW = hs * ws

    # Zero only the 1-pixel halo (the interior is fully rewritten every stage).
    # Done per grid step so megacore sharding of the batch axis stays correct.
    pad_ref[0:1, :, :] = jnp.zeros((1, ws + 2, C4), jnp.bfloat16)
    pad_ref[hs + 1:hs + 2, :, :] = jnp.zeros((1, ws + 2, C4), jnp.bfloat16)
    pad_ref[:, 0:1, :] = jnp.zeros((hs + 2, 1, C4), jnp.bfloat16)
    pad_ref[:, ws + 1:ws + 2, :] = jnp.zeros((hs + 2, 1, C4), jnp.bfloat16)

    xin = x_ref[0]                                      # (HW, C4) f32 identity
    # Stage 0: DWT and stage-0 BN scale in ONE f32 channel-mix matmul.
    # TODO(synk): on v5e with small C4 this could be +/- sums of the four
    # C-channel groups on the VPU instead of an f32 MXU matmul.
    a = jnp.dot(xin, dwtb_ref[...], preferred_element_type=jnp.float32)
    a = a + bias_ref[0:1, :]

    u = None
    for i in range(nconv):                              # static unroll
        if i > 0:
            # Folded inference BatchNorm affine (f32, VPU).
            a = u * scale_ref[i:i + 1, :] + bias_ref[i:i + 1, :]
        a = a * jax.nn.sigmoid(a)                       # swish (f32, VPU/EUP)

        # Single bf16 cast at the pad-scratch store; halo stays zero.
        pad_ref[1:hs + 1, 1:ws + 1, :] = (
            a.astype(jnp.bfloat16).reshape(hs, ws, C4))

        # 3x3 conv as 9 accumulating MXU matmuls over statically shifted
        # windows read straight from the padded scratch (no im2col slab,
        # no extra VMEM round trip), f32 accumulation.
        u = jnp.dot(pad_ref[0:hs, 0:ws, :].reshape(HW, C4), w_ref[i, 0],
                    preferred_element_type=jnp.float32)
        for t in range(1, 9):
            kh, kw = t // 3, t % 3
            tap = pad_ref[kh:kh + hs, kw:kw + ws, :].reshape(HW, C4)
            u = u + jnp.dot(tap, w_ref[i, t],
                            preferred_element_type=jnp.float32)
        u = u + cb_ref[i:i + 1, :]

    # The last stage's weights/bias were pre-multiplied by the IWT matrix
    # host-side, so `u` is already back in pixel space: just add the residual.
    o_ref[0] = xin + u


def _padded_vmem_bytes(shape, dtype):
    """Rough VMEM footprint of one buffer after (sublane, lane) tile padding."""
    itemsize = jnp.dtype(dtype).itemsize
    s = (1, 1) + tuple(int(d) for d in shape)
    lead = 1
    for d in s[:-2]:
        lead *= d
    sub_tile = 8 * (4 // itemsize)          # 8 rows for f32, 16 for bf16
    sub = pl.cdiv(s[-2], sub_tile) * sub_tile
    lanes = pl.cdiv(s[-1], 128) * 128
    return lead * sub * lanes * itemsize


def wt_resblock_fused(xp, blk, hs, ws):
    """xp: (B, hs*ws, 4C) pixel-unshuffled f32 map.  One fused WTResBlock."""
    B, HW, C4 = xp.shape
    nconv = blk["bn_scale"].shape[0]

    # Explicit scoped-VMEM budget: double-buffered in/out blocks + (double-
    # buffered) params + the padded-activation scratch, with margin.  Clamped
    # well under v7x's 64 MiB physical VMEM.
    work = 0
    work += 2 * 2 * _padded_vmem_bytes((1, HW, C4), jnp.float32)       # x, out
    work += 2 * _padded_vmem_bytes((C4, C4), jnp.float32)
    work += 2 * 3 * _padded_vmem_bytes((nconv, C4), jnp.float32)
    work += 2 * _padded_vmem_bytes((nconv, 9, C4, C4), jnp.bfloat16)
    work += _padded_vmem_bytes((hs + 2, ws + 2, C4), jnp.bfloat16)
    vmem_limit = int(min(48 * 1024 * 1024, max(16 * 1024 * 1024, 3 * work)))

    kernel = functools.partial(_wt_resblock_kernel, hs=hs, ws=ws, nconv=nconv)
    return pl.pallas_call(
        kernel,
        out_shape=jax.ShapeDtypeStruct((B, HW, C4), jnp.float32),
        grid_spec=pltpu.PrefetchScalarGridSpec(
            num_scalar_prefetch=0,
            grid=(B,),
            in_specs=[
                pl.BlockSpec((1, HW, C4), lambda b: (b, 0, 0)),
                pl.BlockSpec((C4, C4), lambda b: (0, 0)),
                pl.BlockSpec((nconv, C4), lambda b: (0, 0)),
                pl.BlockSpec((nconv, C4), lambda b: (0, 0)),
                pl.BlockSpec((nconv, 9, C4, C4), lambda b: (0, 0, 0, 0)),
                pl.BlockSpec((nconv, C4), lambda b: (0, 0)),
            ],
            out_specs=pl.BlockSpec((1, HW, C4), lambda b: (b, 0, 0)),
            scratch_shapes=[pltpu.VMEM((hs + 2, ws + 2, C4), jnp.bfloat16)],
        ),
        compiler_params=pltpu.CompilerParams(
            dimension_semantics=("parallel",),
            vmem_limit_bytes=vmem_limit),
    )(xp, blk["dwt_scaled"], blk["bn_scale"], blk["bn_bias"],
      blk["w_taps"], blk["conv_bias"])


# ----------------------------------------------------------------------------
# WTBottleneck forward (res_type='spatial_res')
# ----------------------------------------------------------------------------
def wt_bottleneck_forward(x_nchw, kernel_params):
    B, C, H, W = x_nchw.shape
    hs, ws, C4 = H // 2, W // 2, 4 * C
    # NCHW -> NHWC -> pixel-unshuffled (B, hs*ws, 4C).  These boundary
    # transposes are the only layout ops outside the Pallas kernels.
    x = jnp.transpose(x_nchw, (0, 2, 3, 1)).astype(jnp.float32)
    xp = (x.reshape(B, hs, 2, ws, 2, C)
            .transpose(0, 1, 3, 2, 4, 5)
            .reshape(B, hs * ws, C4))
    for blk in kernel_params:               # one fused kernel per WTResBlock
        xp = wt_resblock_fused(xp, blk, hs, ws)
    x = (xp.reshape(B, hs, ws, 2, 2, C)
            .transpose(0, 1, 3, 2, 4, 5)
            .reshape(B, H, W, C))
    return jnp.transpose(x, (0, 3, 1, 2))   # back to NCHW


# ----------------------------------------------------------------------------
# Deterministic synthetic parameters (PyTorch-layout) + host-side packing
# ----------------------------------------------------------------------------
def init_params(key, in_channels, conv_nums, block_nums):
    C4 = 4 * in_channels
    eps = 1e-5
    blocks = []
    for _ in range(block_nums):
        stages = []
        for _ in range(conv_nums):
            key, k1, k2, k3, k4, k5, k6 = jax.random.split(key, 7)
            gamma = 1.0 + 0.1 * jax.random.normal(k1, (C4,), jnp.float32)
            beta = 0.1 * jax.random.normal(k2, (C4,), jnp.float32)
            rmean = 0.05 * jax.random.normal(k3, (C4,), jnp.float32)
            rvar = 1.0 + 0.1 * jax.random.uniform(k4, (C4,), jnp.float32)
            scale = gamma / jnp.sqrt(rvar + eps)      # folded eval-mode BN
            bias = beta - rmean * scale
            w = jax.random.normal(k5, (C4, C4, 3, 3), jnp.float32) / jnp.sqrt(9.0 * C4)
            b = 0.01 * jax.random.normal(k6, (C4,), jnp.float32)
            stages.append(dict(scale=scale, bias=bias, w=w, b=b))
        blocks.append(stages)
    return blocks


def pack_params(raw_blocks):
    """Stack/reorder raw (PyTorch-layout) params into the kernel layouts,
    folding the DWT into stage-0's BN scale and the IWT into the last conv."""
    packed = []
    for stages in raw_blocks:
        C4 = stages[0]["w"].shape[0]
        C = C4 // 4
        dwt_m, iwt_m = wavelet_matrices(C)
        bn_scale = jnp.stack([s["scale"] for s in stages])           # (nconv, C4)
        bn_bias = jnp.stack([s["bias"] for s in stages])             # (nconv, C4)
        # (Cout, Cin, kh, kw) -> (kh, kw, Cin, Cout) -> (9, Cin, Cout)
        w9 = [jnp.transpose(s["w"], (2, 3, 1, 0)).reshape(9, C4, C4)
              for s in stages]
        cb = [s["b"] for s in stages]
        # Fold the IWT channel mix into the last stage's conv weights/bias.
        w9[-1] = jnp.matmul(w9[-1], iwt_m)                           # f32 fold
        cb[-1] = cb[-1] @ iwt_m
        # Fold stage-0's BN scale into the DWT channel-mix matrix (both affine).
        dwt_scaled = dwt_m * bn_scale[0][None, :]
        packed.append(dict(
            dwt_scaled=dwt_scaled,                                   # (C4, C4) f32
            bn_scale=bn_scale, bn_bias=bn_bias,                      # (nconv, C4)
            w_taps=jnp.stack(w9).astype(jnp.bfloat16),               # (nconv, 9, C4, C4)
            conv_bias=jnp.stack(cb)))                                # (nconv, C4)
    return packed


# ----------------------------------------------------------------------------
# Pure-JAX f32 reference (mirrors the PyTorch module, eval-mode BN)
# ----------------------------------------------------------------------------
def reference_forward(x_nchw, raw_blocks):
    x = jnp.transpose(x_nchw, (0, 2, 3, 1)).astype(jnp.float32)   # NHWC
    for stages in raw_blocks:
        identity = x
        x1 = x[:, 0::2, 0::2, :]
        x2 = x[:, 1::2, 0::2, :]
        x3 = x[:, 0::2, 1::2, :]
        x4 = x[:, 1::2, 1::2, :]
        y = jnp.concatenate([x1 + x2 + x3 + x4,
                             -x1 - x3 + x2 + x4,
                             -x1 + x3 - x2 + x4,
                             x1 - x3 - x2 + x4], axis=-1)
        for s in stages:
            a = y * s["scale"] + s["bias"]
            a = a * jax.nn.sigmoid(a)
            y = lax.conv_general_dilated(
                a, s["w"], window_strides=(1, 1), padding="SAME",
                dimension_numbers=("NHWC", "OIHW", "NHWC")) + s["b"]
        C = y.shape[-1] // 4
        LL, LH, HL, HH = (y[..., :C], y[..., C:2 * C],
                          y[..., 2 * C:3 * C], y[..., 3 * C:])
        Bb, h, w, _ = LL.shape
        up = jnp.zeros((Bb, 2 * h, 2 * w, C), jnp.float32)
        up = up.at[:, 0::2, 0::2, :].set((LL - LH - HL + HH) / 4.0)
        up = up.at[:, 1::2, 0::2, :].set((LL - LH + HL - HH) / 4.0)
        up = up.at[:, 0::2, 1::2, :].set((LL + LH - HL - HH) / 4.0)
        up = up.at[:, 1::2, 1::2, :].set((LL + LH + HL + HH) / 4.0)
        x = identity + up
    return jnp.transpose(x, (0, 3, 1, 2))


if __name__ == "__main__":
    key = jax.random.PRNGKey(0)
    kx, kp = jax.random.split(key)

    B, C, H, W = 2, 4, 16, 16            # NCHW, matches the PyTorch module
    conv_nums, block_nums = 2, 2

    x = jax.random.normal(kx, (B, C, H, W), jnp.float32)
    raw = init_params(kp, in_channels=C, conv_nums=conv_nums,
                      block_nums=block_nums)
    params = pack_params(raw)

    out = jax.jit(wt_bottleneck_forward)(x, params)
    out = jax.block_until_ready(out)
    assert out.shape == (B, C, H, W), out.shape
    assert bool(jnp.all(jnp.isfinite(out)))

    # Loose numerical check vs. the pure-JAX f32 reference (the kernel feeds
    # bf16 operands to the MXU and the IWT is folded into bf16 conv weights,
    # hence the tolerance).
    ref = reference_forward(x, raw)
    err = float(jnp.max(jnp.abs(out - ref)))
    assert err < 0.3, f"max abs err vs reference: {err}"
    print("KERNEL_OK")
</pallas_src>

<mosaic_0001>
module attributes {stable_mosaic.version = 11 : i64} {
  func.func @_wt_resblock_kernel(%arg0: i32, %arg1: memref<1x64x16xf32, #tpu.memory_space<vmem>>, %arg2: memref<16x16xf32, #tpu.memory_space<vmem>>, %arg3: memref<2x16xf32, #tpu.memory_space<vmem>>, %arg4: memref<2x16xf32, #tpu.memory_space<vmem>>, %arg5: memref<2x9x16x16xbf16, #tpu.memory_space<vmem>>, %arg6: memref<2x16xf32, #tpu.memory_space<vmem>>, %arg7: memref<1x64x16xf32, #tpu.memory_space<vmem>>, %arg8: memref<10x10x16xbf16, #tpu.memory_space<vmem>>) attributes {dimension_semantics = [#tpu.dimension_semantics<parallel>], iteration_bounds = array<i64: 2>, scalar_prefetch = 0 : i64, scratch_operands = 1 : i64, tpu.core_type = #tpu.core_type<tc>, window_params = [{transform_indices = @transform_0, window_bounds = array<i64: 1, 64, 16>}, {pipeline_mode = #tpu.pipeline_mode<synchronous>, transform_indices = @transform_1, window_bounds = array<i64: 16, 16>}, {pipeline_mode = #tpu.pipeline_mode<synchronous>, transform_indices = @transform_2, window_bounds = array<i64: 2, 16>}, {pipeline_mode = #tpu.pipeline_mode<synchronous>, transform_indices = @transform_3, window_bounds = array<i64: 2, 16>}, {pipeline_mode = #tpu.pipeline_mode<synchronous>, transform_indices = @transform_4, window_bounds = array<i64: 2, 9, 16, 16>}, {pipeline_mode = #tpu.pipeline_mode<synchronous>, transform_indices = @transform_5, window_bounds = array<i64: 2, 16>}, {transform_indices = @transform_6, window_bounds = array<i64: 1, 64, 16>}]} {
    %cst = arith.constant 0.000000e+00 : bf16
    %0 = vector.broadcast %cst : bf16 to vector<1x10x16xbf16>
    %c0 = arith.constant 0 : index
    %c0_0 = arith.constant 0 : index
    %c0_1 = arith.constant 0 : index
    %1 = vector.load %arg8[%c0, %c0_0, %c0_1] : memref<10x10x16xbf16, #tpu.memory_space<vmem>>, vector<1x10x16xbf16>
    tpu.vector_store %arg8[%c0, %c0_0, %c0_1], %0 {strides = array<i32>} : memref<10x10x16xbf16, #tpu.memory_space<vmem>>, vector<1x10x16xbf16>,
    %cst_2 = arith.constant 0.000000e+00 : bf16
    %2 = vector.broadcast %cst_2 : bf16 to vector<1x10x16xbf16>
    %c9 = arith.constant 9 : index
    %c0_3 = arith.constant 0 : index
    %c0_4 = arith.constant 0 : index
    %3 = vector.load %arg8[%c9, %c0_3, %c0_4] : memref<10x10x16xbf16, #tpu.memory_space<vmem>>, vector<1x10x16xbf16>
    tpu.vector_store %arg8[%c9, %c0_3, %c0_4], %2 {strides = array<i32>} : memref<10x10x16xbf16, #tpu.memory_space<vmem>>, vector<1x10x16xbf16>,
    %cst_5 = arith.constant 0.000000e+00 : bf16
    %4 = vector.broadcast %cst_5 : bf16 to vector<10x1x16xbf16>
    %c0_6 = arith.constant 0 : index
    %c0_7 = arith.constant 0 : index
    %c0_8 = arith.constant 0 : index
    %5 = vector.load %arg8[%c0_6, %c0_7, %c0_8] : memref<10x10x16xbf16, #tpu.memory_space<vmem>>, vector<10x1x16xbf16>
    tpu.vector_store %arg8[%c0_6, %c0_7, %c0_8], %4 {strides = array<i32>} : memref<10x10x16xbf16, #tpu.memory_space<vmem>>, vector<10x1x16xbf16>,
    %cst_9 = arith.constant 0.000000e+00 : bf16
    %6 = vector.broadcast %cst_9 : bf16 to vector<10x1x16xbf16>
    %c0_10 = arith.constant 0 : index
    %c9_11 = arith.constant 9 : index
    %c0_12 = arith.constant 0 : index
    %7 = vector.load %arg8[%c0_10, %c9_11, %c0_12] : memref<10x10x16xbf16, #tpu.memory_space<vmem>>, vector<10x1x16xbf16>
    tpu.vector_store %arg8[%c0_10, %c9_11, %c0_12], %6 {strides = array<i32>} : memref<10x10x16xbf16, #tpu.memory_space<vmem>>, vector<10x1x16xbf16>,
    %c0_13 = arith.constant 0 : index
    %c0_14 = arith.constant 0 : index
    %c0_15 = arith.constant 0 : index
    %8 = vector.load %arg1[%c0_13, %c0_14, %c0_15] : memref<1x64x16xf32, #tpu.memory_space<vmem>>, vector<1x64x16xf32>
    %9 = vector.shape_cast %8 : vector<1x64x16xf32> to vector<64x16xf32>
    %c0_16 = arith.constant 0 : index
    %c0_17 = arith.constant 0 : index
    %10 = vector.load %arg2[%c0_16, %c0_17] : memref<16x16xf32, #tpu.memory_space<vmem>>, vector<16x16xf32>
    %cst_18 = arith.constant dense<0.000000e+00> : vector<64x16xf32>
    %11 = tpu.matmul %9, %10, %cst_18 {dimension_numbers = #tpu.dot_dimension_numbers<[1], [0], [0], [1], [0, 0, 1, 1], [], []>} : vector<64x16xf32>, vector<16x16xf32>, vector<64x16xf32> -> vector<64x16xf32>
    %c0_19 = arith.constant 0 : index
    %c0_20 = arith.constant 0 : index
    %12 = vector.load %arg4[%c0_19, %c0_20] : memref<2x16xf32, #tpu.memory_space<vmem>>, vector<1x16xf32>
    %13 = vector.broadcast %12 : vector<1x16xf32> to vector<64x16xf32>
    %14 = arith.addf %11, %13 : vector<64x16xf32>
    %15 = arith.negf %14 : vector<64x16xf32>
    %16 = math.exp %15 : vector<64x16xf32>
    %cst_21 = arith.constant 1.000000e+00 : f32
    %17 = vector.broadcast %cst_21 : f32 to vector<64x16xf32>
    %18 = arith.addf %17, %16 : vector<64x16xf32>
    %19 = arith.divf %17, %18 : vector<64x16xf32>
    %20 = arith.mulf %14, %19 : vector<64x16xf32>
    %21 = arith.truncf %20 : vector<64x16xf32> to vector<64x16xbf16>
    %22 = vector.shape_cast %21 : vector<64x16xbf16> to vector<8x8x16xbf16>
    %c1 = arith.constant 1 : index
    %c1_22 = arith.constant 1 : index
    %c0_23 = arith.constant 0 : index
    %23 = vector.load %arg8[%c1, %c1_22, %c0_23] : memref<10x10x16xbf16, #tpu.memory_space<vmem>>, vector<8x8x16xbf16>
    tpu.vector_store %arg8[%c1, %c1_22, %c0_23], %22 {strides = array<i32>} : memref<10x10x16xbf16, #tpu.memory_space<vmem>>, vector<8x8x16xbf16>,
    %c0_24 = arith.constant 0 : index
    %c0_25 = arith.constant 0 : index
    %c0_26 = arith.constant 0 : index
    %24 = vector.load %arg8[%c0_24, %c0_25, %c0_26] : memref<10x10x16xbf16, #tpu.memory_space<vmem>>, vector<8x8x16xbf16>
    %25 = vector.shape_cast %24 : vector<8x8x16xbf16> to vector<64x16xbf16>
    %c0_27 = arith.constant 0 : index
    %c0_28 = arith.constant 0 : index
    %c0_29 = arith.constant 0 : index
    %c0_30 = arith.constant 0 : index
    %26 = vector.load %arg5[%c0_27, %c0_28, %c0_29, %c0_30] : memref<2x9x16x16xbf16, #tpu.memory_space<vmem>>, vector<1x1x16x16xbf16>
    %27 = vector.shape_cast %26 : vector<1x1x16x16xbf16> to vector<16x16xbf16>
    %cst_31 = arith.constant dense<0.000000e+00> : vector<64x16xf32>
    %28 = tpu.matmul %25, %27, %cst_31 {dimension_numbers = #tpu.dot_dimension_numbers<[1], [0], [0], [1], [0, 0, 1, 1], [], []>} : vector<64x16xbf16>, vector<16x16xbf16>, vector<64x16xf32> -> vector<64x16xf32>
    %c0_32 = arith.constant 0 : index
    %c1_33 = arith.constant 1 : index
    %c0_34 = arith.constant 0 : index
    %29 = vector.load %arg8[%c0_32, %c1_33, %c0_34] : memref<10x10x16xbf16, #tpu.memory_space<vmem>>, vector<8x8x16xbf16>
    %30 = vector.shape_cast %29 : vector<8x8x16xbf16> to vector<64x16xbf16>
    %c0_35 = arith.constant 0 : index
    %c1_36 = arith.constant 1 : index
    %c0_37 = arith.constant 0 : index
    %c0_38 = arith.constant 0 : index
    %31 = vector.load %arg5[%c0_35, %c1_36, %c0_37, %c0_38] : memref<2x9x16x16xbf16, #tpu.memory_space<vmem>>, vector<1x1x16x16xbf16>
    %32 = vector.shape_cast %31 : vector<1x1x16x16xbf16> to vector<16x16xbf16>
    %cst_39 = arith.constant dense<0.000000e+00> : vector<64x16xf32>
    %33 = tpu.matmul %30, %32, %cst_39 {dimension_numbers = #tpu.dot_dimension_numbers<[1], [0], [0], [1], [0, 0, 1, 1], [], []>} : vector<64x16xbf16>, vector<16x16xbf16>, vector<64x16xf32> -> vector<64x16xf32>
    %34 = arith.addf %28, %33 : vector<64x16xf32>
    %c0_40 = arith.constant 0 : index
    %c2 = arith.constant 2 : index
    %c0_41 = arith.constant 0 : index
    %35 = vector.load %arg8[%c0_40, %c2, %c0_41] : memref<10x10x16xbf16, #tpu.memory_space<vmem>>, vector<8x8x16xbf16>
    %36 = vector.shape_cast %35 : vector<8x8x16xbf16> to vector<64x16xbf16>
    %c0_42 = arith.constant 0 : index
    %c2_43 = arith.constant 2 : index
    %c0_44 = arith.constant 0 : index
    %c0_45 = arith.constant 0 : index
    %37 = vector.load %arg5[%c0_42, %c2_43, %c0_44, %c0_45] : memref<2x9x16x16xbf16, #tpu.memory_space<vmem>>, vector<1x1x16x16xbf16>
    %38 = vector.shape_cast %37 : vector<1x1x16x16xbf16> to vector<16x16xbf16>
    %cst_46 = arith.constant dense<0.000000e+00> : vector<64x16xf32>
    %39 = tpu.matmul %36, %38, %cst_46 {dimension_numbers = #tpu.dot_dimension_numbers<[1], [0], [0], [1], [0, 0, 1, 1], [], []>} : vector<64x16xbf16>, vector<16x16xbf16>, vector<64x16xf32> -> vector<64x16xf32>
    %40 = arith.addf %34, %39 : vector<64x16xf32>
    %c1_47 = arith.constant 1 : index
    %c0_48 = arith.constant 0 : index
    %c0_49 = arith.constant 0 : index
    %41 = vector.load %arg8[%c1_47, %c0_48, %c0_49] : memref<10x10x16xbf16, #tpu.memory_space<vmem>>, vector<8x8x16xbf16>
    %42 = vector.shape_cast %41 : vector<8x8x16xbf16> to vector<64x16xbf16>
    %c0_50 = arith.constant 0 : index
    %c3 = arith.constant 3 : index
    %c0_51 = arith.constant 0 : index
    %c0_52 = arith.constant 0 : index
    %43 = vector.load %arg5[%c0_50, %c3, %c0_51, %c0_52] : memref<2x9x16x16xbf16, #tpu.memory_space<vmem>>, vector<1x1x16x16xbf16>
    %44 = vector.shape_cast %43 : vector<1x1x16x16xbf16> to vector<16x16xbf16>
    %cst_53 = arith.constant dense<0.000000e+00> : vector<64x16xf32>
    %45 = tpu.matmul %42, %44, %cst_53 {dimension_numbers = #tpu.dot_dimension_numbers<[1], [0], [0], [1], [0, 0, 1, 1], [], []>} : vector<64x16xbf16>, vector<16x16xbf16>, vector<64x16xf32> -> vector<64x16xf32>
    %46 = arith.addf %40, %45 : vector<64x16xf32>
    %c1_54 = arith.constant 1 : index
    %c1_55 = arith.constant 1 : index
    %c0_56 = arith.constant 0 : index
    %47 = vector.load %arg8[%c1_54, %c1_55, %c0_56] : memref<10x10x16xbf16, #tpu.memory_space<vmem>>, vector<8x8x16xbf16>
    %48 = vector.shape_cast %47 : vector<8x8x16xbf16> to vector<64x16xbf16>
    %c0_57 = arith.constant 0 : index
    %c4 = arith.constant 4 : index
    %c0_58 = arith.constant 0 : index
    %c0_59 = arith.constant 0 : index
    %49 = vector.load %arg5[%c0_57, %c4, %c0_58, %c0_59] : memref<2x9x16x16xbf16, #tpu.memory_space<vmem>>, vector<1x1x16x16xbf16>
    %50 = vector.shape_cast %49 : vector<1x1x16x16xbf16> to vector<16x16xbf16>
    %cst_60 = arith.constant dense<0.000000e+00> : vector<64x16xf32>
    %51 = tpu.matmul %48, %50, %cst_60 {dimension_numbers = #tpu.dot_dimension_numbers<[1], [0], [0], [1], [0, 0, 1, 1], [], []>} : vector<64x16xbf16>, vector<16x16xbf16>, vector<64x16xf32> -> vector<64x16xf32>
    %52 = arith.addf %46, %51 : vector<64x16xf32>
    %c1_61 = arith.constant 1 : index
    %c2_62 = arith.constant 2 : index
    %c0_63 = arith.constant 0 : index
    %53 = vector.load %arg8[%c1_61, %c2_62, %c0_63] : memref<10x10x16xbf16, #tpu.memory_space<vmem>>, vector<8x8x16xbf16>
    %54 = vector.shape_cast %53 : vector<8x8x16xbf16> to vector<64x16xbf16>
    %c0_64 = arith.constant 0 : index
    %c5 = arith.constant 5 : index
    %c0_65 = arith.constant 0 : index
    %c0_66 = arith.constant 0 : index
    %55 = vector.load %arg5[%c0_64, %c5, %c0_65, %c0_66] : memref<2x9x16x16xbf16, #tpu.memory_space<vmem>>, vector<1x1x16x16xbf16>
    %56 = vector.shape_cast %55 : vector<1x1x16x16xbf16> to vector<16x16xbf16>
    %cst_67 = arith.constant dense<0.000000e+00> : vector<64x16xf32>
    %57 = tpu.matmul %54, %56, %cst_67 {dimension_numbers = #tpu.dot_dimension_numbers<[1], [0], [0], [1], [0, 0, 1, 1], [], []>} : vector<64x16xbf16>, vector<16x16xbf16>, vector<64x16xf32> -> vector<64x16xf32>
    %58 = arith.addf %52, %57 : vector<64x16xf32>
    %c2_68 = arith.constant 2 : index
    %c0_69 = arith.constant 0 : index
    %c0_70 = arith.constant 0 : index
    %59 = vector.load %arg8[%c2_68, %c0_69, %c0_70] : memref<10x10x16xbf16, #tpu.memory_space<vmem>>, vector<8x8x16xbf16>
    %60 = vector.shape_cast %59 : vector<8x8x16xbf16> to vector<64x16xbf16>
    %c0_71 = arith.constant 0 : index
    %c6 = arith.constant 6 : index
    %c0_72 = arith.constant 0 : index
    %c0_73 = arith.constant 0 : index
    %61 = vector.load %arg5[%c0_71, %c6, %c0_72, %c0_73] : memref<2x9x16x16xbf16, #tpu.memory_space<vmem>>, vector<1x1x16x16xbf16>
    %62 = vector.shape_cast %61 : vector<1x1x16x16xbf16> to vector<16x16xbf16>
    %cst_74 = arith.constant dense<0.000000e+00> : vector<64x16xf32>
    %63 = tpu.matmul %60, %62, %cst_74 {dimension_numbers = #tpu.dot_dimension_numbers<[1], [0], [0], [1], [0, 0, 1, 1], [], []>} : vector<64x16xbf16>, vector<16x16xbf16>, vector<64x16xf32> -> vector<64x16xf32>
    %64 = arith.addf %58, %63 : vector<64x16xf32>
    %c2_75 = arith.constant 2 : index
    %c1_76 = arith.constant 1 : index
    %c0_77 = arith.constant 0 : index
    %65 = vector.load %arg8[%c2_75, %c1_76, %c0_77] : memref<10x10x16xbf16, #tpu.memory_space<vmem>>, vector<8x8x16xbf16>
    %66 = vector.shape_cast %65 : vector<8x8x16xbf16> to vector<64x16xbf16>
    %c0_78 = arith.constant 0 : index
    %c7 = arith.constant 7 : index
    %c0_79 = arith.constant 0 : index
    %c0_80 = arith.constant 0 : index
    %67 = vector.load %arg5[%c0_78, %c7, %c0_79, %c0_80] : memref<2x9x16x16xbf16, #tpu.memory_space<vmem>>, vector<1x1x16x16xbf16>
    %68 = vector.shape_cast %67 : vector<1x1x16x16xbf16> to vector<16x16xbf16>
    %cst_81 = arith.constant dense<0.000000e+00> : vector<64x16xf32>
    %69 = tpu.matmul %66, %68, %cst_81 {dimension_numbers = #tpu.dot_dimension_numbers<[1], [0], [0], [1], [0, 0, 1, 1], [], []>} : vector<64x16xbf16>, vector<16x16xbf16>, vector<64x16xf32> -> vector<64x16xf32>
    %70 = arith.addf %64, %69 : vector<64x16xf32>
    %c2_82 = arith.constant 2 : index
    %c2_83 = arith.constant 2 : index
    %c0_84 = arith.constant 0 : index
    %71 = vector.load %arg8[%c2_82, %c2_83, %c0_84] : memref<10x10x16xbf16, #tpu.memory_space<vmem>>, vector<8x8x16xbf16>
    %72 = vector.shape_cast %71 : vector<8x8x16xbf16> to vector<64x16xbf16>
    %c0_85 = arith.constant 0 : index
    %c8 = arith.constant 8 : index
    %c0_86 = arith.constant 0 : index
    %c0_87 = arith.constant 0 : index
    %73 = vector.load %arg5[%c0_85, %c8, %c0_86, %c0_87] : memref<2x9x16x16xbf16, #tpu.memory_space<vmem>>, vector<1x1x16x16xbf16>
    %74 = vector.shape_cast %73 : vector<1x1x16x16xbf16> to vector<16x16xbf16>
    %cst_88 = arith.constant dense<0.000000e+00> : vector<64x16xf32>
    %75 = tpu.matmul %72, %74, %cst_88 {dimension_numbers = #tpu.dot_dimension_numbers<[1], [0], [0], [1], [0, 0, 1, 1], [], []>} : vector<64x16xbf16>, vector<16x16xbf16>, vector<64x16xf32> -> vector<64x16xf32>
    %76 = arith.addf %70, %75 : vector<64x16xf32>
    %c0_89 = arith.constant 0 : index
    %c0_90 = arith.constant 0 : index
    %77 = vector.load %arg6[%c0_89, %c0_90] : memref<2x16xf32, #tpu.memory_space<vmem>>, vector<1x16xf32>
    %78 = vector.broadcast %77 : vector<1x16xf32> to vector<64x16xf32>
    %79 = arith.addf %76, %78 : vector<64x16xf32>
    %c1_91 = arith.constant 1 : index
    %c0_92 = arith.constant 0 : index
    %80 = vector.load %arg3[%c1_91, %c0_92] : memref<2x16xf32, #tpu.memory_space<vmem>>, vector<1x16xf32>
    %81 = vector.broadcast %80 : vector<1x16xf32> to vector<64x16xf32>
    %82 = arith.mulf %79, %81 : vector<64x16xf32>
    %c1_93 = arith.constant 1 : index
    %c0_94 = arith.constant 0 : index
    %83 = vector.load %arg4[%c1_93, %c0_94] : memref<2x16xf32, #tpu.memory_space<vmem>>, vector<1x16xf32>
    %84 = vector.broadcast %83 : vector<1x16xf32> to vector<64x16xf32>
    %85 = arith.addf %82, %84 : vector<64x16xf32>
    %86 = arith.negf %85 : vector<64x16xf32>
    %87 = math.exp %86 : vector<64x16xf32>
    %cst_95 = arith.constant 1.000000e+00 : f32
    %88 = vector.broadcast %cst_95 : f32 to vector<64x16xf32>
    %89 = arith.addf %88, %87 : vector<64x16xf32>
    %90 = arith.divf %88, %89 : vector<64x16xf32>
    %91 = arith.mulf %85, %90 : vector<64x16xf32>
    %92 = arith.truncf %91 : vector<64x16xf32> to vector<64x16xbf16>
    %93 = vector.shape_cast %92 : vector<64x16xbf16> to vector<8x8x16xbf16>
    %c1_96 = arith.constant 1 : index
    %c1_97 = arith.constant 1 : index
    %c0_98 = arith.constant 0 : index
    %94 = vector.load %arg8[%c1_96, %c1_97, %c0_98] : memref<10x10x16xbf16, #tpu.memory_space<vmem>>, vector<8x8x16xbf16>
    tpu.vector_store %arg8[%c1_96, %c1_97, %c0_98], %93 {strides = array<i32>} : memref<10x10x16xbf16, #tpu.memory_space<vmem>>, vector<8x8x16xbf16>,
    %c0_99 = arith.constant 0 : index
    %c0_100 = arith.constant 0 : index
    %c0_101 = arith.constant 0 : index
    %95 = vector.load %arg8[%c0_99, %c0_100, %c0_101] : memref<10x10x16xbf16, #tpu.memory_space<vmem>>, vector<8x8x16xbf16>
    %96 = vector.shape_cast %95 : vector<8x8x16xbf16> to vector<64x16xbf16>
    %c1_102 = arith.constant 1 : index
    %c0_103 = arith.constant 0 : index
    %c0_104 = arith.constant 0 : index
    %c0_105 = arith.constant 0 : index
    %97 = vector.load %arg5[%c1_102, %c0_103, %c0_104, %c0_105] : memref<2x9x16x16xbf16, #tpu.memory_space<vmem>>, vector<1x1x16x16xbf16>
    %98 = vector.shape_cast %97 : vector<1x1x16x16xbf16> to vector<16x16xbf16>
    %cst_106 = arith.constant dense<0.000000e+00> : vector<64x16xf32>
    %99 = tpu.matmul %96, %98, %cst_106 {dimension_numbers = #tpu.dot_dimension_numbers<[1], [0], [0], [1], [0, 0, 1, 1], [], []>} : vector<64x16xbf16>, vector<16x16xbf16>, vector<64x16xf32> -> vector<64x16xf32>
    %c0_107 = arith.constant 0 : index
    %c1_108 = arith.constant 1 : index
    %c0_109 = arith.constant 0 : index
    %100 = vector.load %arg8[%c0_107, %c1_108, %c0_109] : memref<10x10x16xbf16, #tpu.memory_space<vmem>>, vector<8x8x16xbf16>
    %101 = vector.shape_cast %100 : vector<8x8x16xbf16> to vector<64x16xbf16>
    %c1_110 = arith.constant 1 : index
    %c1_111 = arith.constant 1 : index
    %c0_112 = arith.constant 0 : index
    %c0_113 = arith.constant 0 : index
    %102 = vector.load %arg5[%c1_110, %c1_111, %c0_112, %c0_113] : memref<2x9x16x16xbf16, #tpu.memory_space<vmem>>, vector<1x1x16x16xbf16>
    %103 = vector.shape_cast %102 : vector<1x1x16x16xbf16> to vector<16x16xbf16>
    %cst_114 = arith.constant dense<0.000000e+00> : vector<64x16xf32>
    %104 = tpu.matmul %101, %103, %cst_114 {dimension_numbers = #tpu.dot_dimension_numbers<[1], [0], [0], [1], [0, 0, 1, 1], [], []>} : vector<64x16xbf16>, vector<16x16xbf16>, vector<64x16xf32> -> vector<64x16xf32>
    %105 = arith.addf %99, %104 : vector<64x16xf32>
    %c0_115 = arith.constant 0 : index
    %c2_116 = arith.constant 2 : index
    %c0_117 = arith.constant 0 : index
    %106 = vector.load %arg8[%c0_115, %c2_116, %c0_117] : memref<10x10x16xbf16, #tpu.memory_space<vmem>>, vector<8x8x16xbf16>
    %107 = vector.shape_cast %106 : vector<8x8x16xbf16> to vector<64x16xbf16>
    %c1_118 = arith.constant 1 : index
    %c2_119 = arith.constant 2 : index
    %c0_120 = arith.constant 0 : index
    %c0_121 = arith.constant 0 : index
    %108 = vector.load %arg5[%c1_118, %c2_119, %c0_120, %c0_121] : memref<2x9x16x16xbf16, #tpu.memory_space<vmem>>, vector<1x1x16x16xbf16>
    %109 = vector.shape_cast %108 : vector<1x1x16x16xbf16> to vector<16x16xbf16>
    %cst_122 = arith.constant dense<0.000000e+00> : vector<64x16xf32>
    %110 = tpu.matmul %107, %109, %cst_122 {dimension_numbers = #tpu.dot_dimension_numbers<[1], [0], [0], [1], [0, 0, 1, 1], [], []>} : vector<64x16xbf16>, vector<16x16xbf16>, vector<64x16xf32> -> vector<64x16xf32>
    %111 = arith.addf %105, %110 : vector<64x16xf32>
    %c1_123 = arith.constant 1 : index
    %c0_124 = arith.constant 0 : index
    %c0_125 = arith.constant 0 : index
    %112 = vector.load %arg8[%c1_123, %c0_124, %c0_125] : memref<10x10x16xbf16, #tpu.memory_space<vmem>>, vector<8x8x16xbf16>
    %113 = vector.shape_cast %112 : vector<8x8x16xbf16> to vector<64x16xbf16>
    %c1_126 = arith.constant 1 : index
    %c3_127 = arith.constant 3 : index
    %c0_128 = arith.constant 0 : index
    %c0_129 = arith.constant 0 : index
    %114 = vector.load %arg5[%c1_126, %c3_127, %c0_128, %c0_129] : memref<2x9x16x16xbf16, #tpu.memory_space<vmem>>, vector<1x1x16x16xbf16>
    %115 = vector.shape_cast %114 : vector<1x1x16x16xbf16> to vector<16x16xbf16>
    %cst_130 = arith.constant dense<0.000000e+00> : vector<64x16xf32>
    %116 = tpu.matmul %113, %115, %cst_130 {dimension_numbers = #tpu.dot_dimension_numbers<[1], [0], [0], [1], [0, 0, 1, 1], [], []>} : vector<64x16xbf16>, vector<16x16xbf16>, vector<64x16xf32> -> vector<64x16xf32>
    %117 = arith.addf %111, %116 : vector<64x16xf32>
    %c1_131 = arith.constant 1 : index
    %c1_132 = arith.constant 1 : index
    %c0_133 = arith.constant 0 : index
    %118 = vector.load %arg8[%c1_131, %c1_132, %c0_133] : memref<10x10x16xbf16, #tpu.memory_space<vmem>>, vector<8x8x16xbf16>
    %119 = vector.shape_cast %118 : vector<8x8x16xbf16> to vector<64x16xbf16>
    %c1_134 = arith.constant 1 : index
    %c4_135 = arith.constant 4 : index
    %c0_136 = arith.constant 0 : index
    %c0_137 = arith.constant 0 : index
    %120 = vector.load %arg5[%c1_134, %c4_135, %c0_136, %c0_137] : memref<2x9x16x16xbf16, #tpu.memory_space<vmem>>, vector<1x1x16x16xbf16>
    %121 = vector.shape_cast %120 : vector<1x1x16x16xbf16> to vector<16x16xbf16>
    %cst_138 = arith.constant dense<0.000000e+00> : vector<64x16xf32>
    %122 = tpu.matmul %119, %121, %cst_138 {dimension_numbers = #tpu.dot_dimension_numbers<[1], [0], [0], [1], [0, 0, 1, 1], [], []>} : vector<64x16xbf16>, vector<16x16xbf16>, vector<64x16xf32> -> vector<64x16xf32>
    %123 = arith.addf %117, %122 : vector<64x16xf32>
    %c1_139 = arith.constant 1 : index
    %c2_140 = arith.constant 2 : index
    %c0_141 = arith.constant 0 : index
    %124 = vector.load %arg8[%c1_139, %c2_140, %c0_141] : memref<10x10x16xbf16, #tpu.memory_space<vmem>>, vector<8x8x16xbf16>
    %125 = vector.shape_cast %124 : vector<8x8x16xbf16> to vector<64x16xbf16>
    %c1_142 = arith.constant 1 : index
    %c5_143 = arith.constant 5 : index
    %c0_144 = arith.constant 0 : index
    %c0_145 = arith.constant 0 : index
    %126 = vector.load %arg5[%c1_142, %c5_143, %c0_144, %c0_145] : memref<2x9x16x16xbf16, #tpu.memory_space<vmem>>, vector<1x1x16x16xbf16>
    %127 = vector.shape_cast %126 : vector<1x1x16x16xbf16> to vector<16x16xbf16>
    %cst_146 = arith.constant dense<0.000000e+00> : vector<64x16xf32>
    %128 = tpu.matmul %125, %127, %cst_146 {dimension_numbers = #tpu.dot_dimension_numbers<[1], [0], [0], [1], [0, 0, 1, 1], [], []>} : vector<64x16xbf16>, vector<16x16xbf16>, vector<64x16xf32> -> vector<64x16xf32>
    %129 = arith.addf %123, %128 : vector<64x16xf32>
    %c2_147 = arith.constant 2 : index
    %c0_148 = arith.constant 0 : index
    %c0_149 = arith.constant 0 : index
    %130 = vector.load %arg8[%c2_147, %c0_148, %c0_149] : memref<10x10x16xbf16, #tpu.memory_space<vmem>>, vector<8x8x16xbf16>
    %131 = vector.shape_cast %130 : vector<8x8x16xbf16> to vector<64x16xbf16>
    %c1_150 = arith.constant 1 : index
    %c6_151 = arith.constant 6 : index
    %c0_152 = arith.constant 0 : index
    %c0_153 = arith.constant 0 : index
    %132 = vector.load %arg5[%c1_150, %c6_151, %c0_152, %c0_153] : memref<2x9x16x16xbf16, #tpu.memory_space<vmem>>, vector<1x1x16x16xbf16>
    %133 = vector.shape_cast %132 : vector<1x1x16x16xbf16> to vector<16x16xbf16>
    %cst_154 = arith.constant dense<0.000000e+00> : vector<64x16xf32>
    %134 = tpu.matmul %131, %133, %cst_154 {dimension_numbers = #tpu.dot_dimension_numbers<[1], [0], [0], [1], [0, 0, 1, 1], [], []>} : vector<64x16xbf16>, vector<16x16xbf16>, vector<64x16xf32> -> vector<64x16xf32>
    %135 = arith.addf %129, %134 : vector<64x16xf32>
    %c2_155 = arith.constant 2 : index
    %c1_156 = arith.constant 1 : index
    %c0_157 = arith.constant 0 : index
    %136 = vector.load %arg8[%c2_155, %c1_156, %c0_157] : memref<10x10x16xbf16, #tpu.memory_space<vmem>>, vector<8x8x16xbf16>
    %137 = vector.shape_cast %136 : vector<8x8x16xbf16> to vector<64x16xbf16>
    %c1_158 = arith.constant 1 : index
    %c7_159 = arith.constant 7 : index
    %c0_160 = arith.constant 0 : index
    %c0_161 = arith.constant 0 : index
    %138 = vector.load %arg5[%c1_158, %c7_159, %c0_160, %c0_161] : memref<2x9x16x16xbf16, #tpu.memory_space<vmem>>, vector<1x1x16x16xbf16>
    %139 = vector.shape_cast %138 : vector<1x1x16x16xbf16> to vector<16x16xbf16>
    %cst_162 = arith.constant dense<0.000000e+00> : vector<64x16xf32>
    %140 = tpu.matmul %137, %139, %cst_162 {dimension_numbers = #tpu.dot_dimension_numbers<[1], [0], [0], [1], [0, 0, 1, 1], [], []>} : vector<64x16xbf16>, vector<16x16xbf16>, vector<64x16xf32> -> vector<64x16xf32>
    %141 = arith.addf %135, %140 : vector<64x16xf32>
    %c2_163 = arith.constant 2 : index
    %c2_164 = arith.constant 2 : index
    %c0_165 = arith.constant 0 : index
    %142 = vector.load %arg8[%c2_163, %c2_164, %c0_165] : memref<10x10x16xbf16, #tpu.memory_space<vmem>>, vector<8x8x16xbf16>
    %143 = vector.shape_cast %142 : vector<8x8x16xbf16> to vector<64x16xbf16>
    %c1_166 = arith.constant 1 : index
    %c8_167 = arith.constant 8 : index
    %c0_168 = arith.constant 0 : index
    %c0_169 = arith.constant 0 : index
    %144 = vector.load %arg5[%c1_166, %c8_167, %c0_168, %c0_169] : memref<2x9x16x16xbf16, #tpu.memory_space<vmem>>, vector<1x1x16x16xbf16>
    %145 = vector.shape_cast %144 : vector<1x1x16x16xbf16> to vector<16x16xbf16>
    %cst_170 = arith.constant dense<0.000000e+00> : vector<64x16xf32>
    %146 = tpu.matmul %143, %145, %cst_170 {dimension_numbers = #tpu.dot_dimension_numbers<[1], [0], [0], [1], [0, 0, 1, 1], [], []>} : vector<64x16xbf16>, vector<16x16xbf16>, vector<64x16xf32> -> vector<64x16xf32>
    %147 = arith.addf %141, %146 : vector<64x16xf32>
    %c1_171 = arith.constant 1 : index
    %c0_172 = arith.constant 0 : index
    %148 = vector.load %arg6[%c1_171, %c0_172] : memref<2x16xf32, #tpu.memory_space<vmem>>, vector<1x16xf32>
    %149 = vector.broadcast %148 : vector<1x16xf32> to vector<64x16xf32>
    %150 = arith.addf %147, %149 : vector<64x16xf32>
    %151 = arith.addf %9, %150 : vector<64x16xf32>
    %c0_173 = arith.constant 0 : index
    %c0_174 = arith.constant 0 : index
    %c0_175 = arith.constant 0 : index
    %152 = vector.load %arg7[%c0_173, %c0_174, %c0_175] : memref<1x64x16xf32, #tpu.memory_space<vmem>>, vector<1x64x16xf32>
    %153 = vector.shape_cast %152 : vector<1x64x16xf32> to vector<64x16xf32>
    %154 = vector.shape_cast %151 : vector<64x16xf32> to vector<1x64x16xf32>
    tpu.vector_store %arg7[%c0_173, %c0_174, %c0_175], %154 {strides = array<i32>} : memref<1x64x16xf32, #tpu.memory_space<vmem>>, vector<1x64x16xf32>,
    return
  }
  func.func @transform_0(%arg0: i32) -> (i32, i32, i32) {
    %c0_i32 = arith.constant 0 : i32
    %c0_i32_0 = arith.constant 0 : i32
    %c0_i32_1 = arith.constant 0 : i32
    return %arg0, %c0_i32, %c0_i32_0 : i32, i32, i32
  }
  func.func @transform_1(%arg0: i32) -> (i32, i32) {
    %c0_i32 = arith.constant 0 : i32
    %c0_i32_0 = arith.constant 0 : i32
    %c0_i32_1 = arith.constant 0 : i32
    return %c0_i32, %c0_i32_0 : i32, i32
  }
  func.func @transform_2(%arg0: i32) -> (i32, i32) {
    %c0_i32 = arith.constant 0 : i32
    %c0_i32_0 = arith.constant 0 : i32
    %c0_i32_1 = arith.constant 0 : i32
    return %c0_i32, %c0_i32_0 : i32, i32
  }
  func.func @transform_3(%arg0: i32) -> (i32, i32) {
    %c0_i32 = arith.constant 0 : i32
    %c0_i32_0 = arith.constant 0 : i32
    %c0_i32_1 = arith.constant 0 : i32
    return %c0_i32, %c0_i32_0 : i32, i32
  }
  func.func @transform_4(%arg0: i32) -> (i32, i32, i32, i32) {
    %c0_i32 = arith.constant 0 : i32
    %c0_i32_0 = arith.constant 0 : i32
    %c0_i32_1 = arith.constant 0 : i32
    %c0_i32_2 = arith.constant 0 : i32
    %c0_i32_3 = arith.constant 0 : i32
    return %c0_i32, %c0_i32_0, %c0_i32_1, %c0_i32_2 : i32, i32, i32, i32
  }
  func.func @transform_5(%arg0: i32) -> (i32, i32) {
    %c0_i32 = arith.constant 0 : i32
    %c0_i32_0 = arith.constant 0 : i32
    %c0_i32_1 = arith.constant 0 : i32
    return %c0_i32, %c0_i32_0 : i32, i32
  }
  func.func @transform_6(%arg0: i32) -> (i32, i32, i32) {
    %c0_i32 = arith.constant 0 : i32
    %c0_i32_0 = arith.constant 0 : i32
    %c0_i32_1 = arith.constant 0 : i32
    return %arg0, %c0_i32, %c0_i32_0 : i32, i32, i32
  }
}

</mosaic_0001>

<llo_original>
// kernel: wt_bottleneck_forward.2
$region0: #{wt_bottleneck_forward.2}
  #allocation0 [shape = 'u32[]', space=smem, size = 0x4, offset = 0x4, fixed_abs, tag = 'smem constant byte address 0x4 - core index']
  #allocation1 [shape = 'u32[144,128]{1,0:T(1,128)}', space=vmem, size = 0x12000, scoped, tag = 'internal scratch']
  #allocation2 [shape = 'bf16[10,10,16]{2,1,0:T(8,128)(2,1)}', space=vmem, size = 0xa000, scoped, tag = 'scratch operand']
  %s0 = inlined_call_operand.vmem [shape: f32[2,64,16], index: 0, kind: input, shape index: {}]
  %s1 = inlined_call_operand.vmem [shape: f32[16,16], index: 1, kind: input, shape index: {}]
  %s2 = inlined_call_operand.vmem [shape: f32[2,16], index: 2, kind: input, shape index: {}]
  %s3 = inlined_call_operand.vmem [shape: f32[2,16], index: 3, kind: input, shape index: {}]
  %s4 = inlined_call_operand.vmem [shape: bf16[2,9,16,16], index: 4, kind: input, shape index: {}]
  %s5 = inlined_call_operand.vmem [shape: f32[2,16], index: 5, kind: input, shape index: {}]
  %s6 = inlined_call_operand.vmem [shape: f32[2,64,16], index: 6, kind: output, shape index: {}]
  %s7 = sld [smem:[#allocation0]]
  $region57: #{wt_bottleneck_forward.2} parent=0
    _
  %s9 = ssub.s32 1, %s7
  %s10 = scalar_select 0, %s9, %s7
  loop: start=0, step=1, limit=4
  $region2: #{wt_bottleneck_forward.2} parent=0 // loop_pre_header
    _
  $region3: #{wt_bottleneck_forward.2} parent=0 // loop_header
    %s12 = sphi 0, %s16
    %p13 = scmp.ge.s32.totalorder %s12, 4
    %s22 = sphi 0, %s24
    %s25 = sphi 0, %s22
    %s26 = sphi 0, %s25
    %s42 = sphi 0, %s26
    %s46 = sphi 0, %s46
    %s48 = sphi 0, %s46
    %s49 = sphi 0, %s48
    %s63 = sphi 0, %s49
    %s67 = sphi 0, %s67
    %s69 = sphi 0, %s67
    %s70 = sphi 0, %s69
    %s84 = sphi 0, %s70
    %s88 = sphi 0, %s88
    %s90 = sphi 0, %s88
    %s91 = sphi 0, %s90
    %s105 = sphi 0, %s91
    %s109 = sphi 0, %s109
    %s111 = sphi 0, %s109
    %s112 = sphi 0, %s111
    %s126 = sphi 0, %s112
    %s130 = sphi 0, %s130
    %s132 = sphi 0, %s130
    %s133 = sphi 0, %s132
    %s147 = sphi 0, %s133
    %s153 = sphi 0, %s155
    %s156 = sphi 0, %s153
    %s157 = sphi 0, %s156
    %s173 = sphi 0, %s157
  $region4: #{wt_bottleneck_forward.2} parent=0 // loop_header_branch
    %15 = sbr.rel (%p13) target = $region8
  $region5: #{wt_bottleneck_forward.2} parent=0 // loop_body
    %s17 = ssub.s32 %s12, 1
    %s18 = ssub.s32 %s12, 2
    %s19 = sadd.s32 %s12, 1
    %s20 = ssub.s32 %s12, %s19
    %p21 = scmp.eq.s32.totalorder %s20, 0
    %s23 = sadd.s32 %s22, 1
    %s24 = scalar_select %p21, %s22, %s23
    %p27 = pneg %p21
    %p28 = scmp.eq.s32.totalorder %s12, 1
    %p29 = por %p27, %p28
    %p30 = scmp.ne.s32.totalorder %s22, %s25
    %p31 = scmp.eq.s32.totalorder %s12, 0
    %p32 = por %p30, %p31
    %p33 = scmp.ne.s32.totalorder %s22, %s25
    %p34 = scmp.eq.s32.totalorder %s17, 1
    %p35 = por %p33, %p34
    %p36 = scmp.ne.s32.totalorder %s25, %s26
    %p37 = scmp.eq.s32.totalorder %s17, 0
    %p38 = por %p36, %p37
    %p39 = scmp.ne.s32.totalorder %s25, %s26
    %p40 = scmp.eq.s32.totalorder %s18, 1
    %p41 = por %p39, %p40
    %p43 = scmp.ne.s32.totalorder %s26, %s42
    %p44 = scmp.eq.s32.totalorder %s18, 0
    %p45 = por %p43, %p44
    %s47 = sadd.s32 %s46, 1
    %p50 = scmp.eq.s32.totalorder %s12, 1
    %p51 = scmp.ne.s32.totalorder %s46, %s48
    %p52 = scmp.eq.s32.totalorder %s12, 0
    %p53 = por %p51, %p52
    %p54 = scmp.ne.s32.totalorder %s46, %s48
    %p55 = scmp.eq.s32.totalorder %s17, 1
    %p56 = por %p54, %p55
    %p57 = scmp.ne.s32.totalorder %s48, %s49
    %p58 = scmp.eq.s32.totalorder %s17, 0
    %p59 = por %p57, %p58
    %p60 = scmp.ne.s32.totalorder %s48, %s49
    %p61 = scmp.eq.s32.totalorder %s18, 1
    %p62 = por %p60, %p61
    %p64 = scmp.ne.s32.totalorder %s49, %s63
    %p65 = scmp.eq.s32.totalorder %s18, 0
    %p66 = por %p64, %p65
    %s68 = sadd.s32 %s67, 1
    %p71 = scmp.eq.s32.totalorder %s12, 1
    %p72 = scmp.ne.s32.totalorder %s67, %s69
    %p73 = scmp.eq.s32.totalorder %s12, 0
    %p74 = por %p72, %p73
    %p75 = scmp.ne.s32.totalorder %s67, %s69
    %p76 = scmp.eq.s32.totalorder %s17, 1
    %p77 = por %p75, %p76
    %p78 = scmp.ne.s32.totalorder %s69, %s70
    %p79 = scmp.eq.s32.totalorder %s17, 0
    %p80 = por %p78, %p79
    %p81 = scmp.ne.s32.totalorder %s69, %s70
    %p82 = scmp.eq.s32.totalorder %s18, 1
    %p83 = por %p81, %p82
    %p85 = scmp.ne.s32.totalorder %s70, %s84
    %p86 = scmp.eq.s32.totalorder %s18, 0
    %p87 = por %p85, %p86
    %s89 = sadd.s32 %s88, 1
    %p92 = scmp.eq.s32.totalorder %s12, 1
    %p93 = scmp.ne.s32.totalorder %s88, %s90
    %p94 = scmp.eq.s32.totalorder %s12, 0
    %p95 = por %p93, %p94
    %p96 = scmp.ne.s32.totalorder %s88, %s90
    %p97 = scmp.eq.s32.totalorder %s17, 1
    %p98 = por %p96, %p97
    %p99 = scmp.ne.s32.totalorder %s90, %s91
    %p100 = scmp.eq.s32.totalorder %s17, 0
    %p101 = por %p99, %p100
    %p102 = scmp.ne.s32.totalorder %s90, %s91
    %p103 = scmp.eq.s32.totalorder %s18, 1
    %p104 = por %p102, %p103
    %p106 = scmp.ne.s32.totalorder %s91, %s105
    %p107 = scmp.eq.s32.totalorder %s18, 0
    %p108 = por %p106, %p107
    %s110 = sadd.s32 %s109, 1
    %p113 = scmp.eq.s32.totalorder %s12, 1
    %p114 = scmp.ne.s32.totalorder %s109, %s111
    %p115 = scmp.eq.s32.totalorder %s12, 0
    %p116 = por %p114, %p115
    %p117 = scmp.ne.s32.totalorder %s109, %s111
    %p118 = scmp.eq.s32.totalorder %s17, 1
    %p119 = por %p117, %p118
    %p120 = scmp.ne.s32.totalorder %s111, %s112
    %p121 = scmp.eq.s32.totalorder %s17, 0
    %p122 = por %p120, %p121
    %p123 = scmp.ne.s32.totalorder %s111, %s112
    %p124 = scmp.eq.s32.totalorder %s18, 1
    %p125 = por %p123, %p124
    %p127 = scmp.ne.s32.totalorder %s112, %s126
    %p128 = scmp.eq.s32.totalorder %s18, 0
    %p129 = por %p127, %p128
    %s131 = sadd.s32 %s130, 1
    %p134 = scmp.eq.s32.totalorder %s12, 1
    %p135 = scmp.ne.s32.totalorder %s130, %s132
    %p136 = scmp.eq.s32.totalorder %s12, 0
    %p137 = por %p135, %p136
    %p138 = scmp.ne.s32.totalorder %s130, %s132
    %p139 = scmp.eq.s32.totalorder %s17, 1
    %p140 = por %p138, %p139
    %p141 = scmp.ne.s32.totalorder %s132, %s133
    %p142 = scmp.eq.s32.totalorder %s17, 0
    %p143 = por %p141, %p142
    %p144 = scmp.ne.s32.totalorder %s132, %s133
    %p145 = scmp.eq.s32.totalorder %s18, 1
    %p146 = por %p144, %p145
    %p148 = scmp.ne.s32.totalorder %s133, %s147
    %p149 = scmp.eq.s32.totalorder %s18, 0
    %p150 = por %p148, %p149
    %s151 = ssub.s32 %s12, %s19
    %p152 = scmp.eq.s32.totalorder %s151, 0
    %s154 = sadd.s32 %s153, 1
    %s155 = scalar_select %p152, %s153, %s154
    %p158 = pneg %p152
    %p159 = scmp.eq.s32.totalorder %s12, 1
    %p160 = por %p158, %p159
    %p161 = scmp.ne.s32.totalorder %s153, %s156
    %p162 = scmp.eq.s32.totalorder %s12, 0
    %p163 = por %p161, %p162
    %p164 = scmp.ne.s32.totalorder %s153, %s156
    %p165 = scmp.eq.s32.totalorder %s17, 1
    %p166 = por %p164, %p165
    %p167 = scmp.ne.s32.totalorder %s156, %s157
    %p168 = scmp.eq.s32.totalorder %s17, 0
    %p169 = por %p167, %p168
    %p170 = scmp.ne.s32.totalorder %s156, %s157
    %p171 = scmp.eq.s32.totalorder %s18, 1
    %p172 = por %p170, %p171
    %p174 = scmp.ne.s32.totalorder %s157, %s173
    %p175 = scmp.eq.s32.totalorder %s18, 0
    %p176 = por %p174, %p175
    %p177 = scmp.le.s32.totalorder 1, %s12
    %p178 = scmp.lt.s32.totalorder %s12, 3
    %p179 = pnand %p177, %p178
    %p180 = pneg %p179
    // Predicated region
    $region9: #{wt_bottleneck_forward.2} parent=5 // pred_check
      _
    $region10: #{wt_bottleneck_forward.2} parent=5 // pred_check_branch
      %182 = sbr.rel (%p179) target = $region12
    $region11: #{wt_bottleneck_forward.2} parent=5 // pred_region
      %s183 = ssub.s32 %s12, 1
      // Predicated region
      $region13: #{wt_bottleneck_forward.2} parent=11 // pred_check
        %p184 = pneg %p59
      $region14: #{wt_bottleneck_forward.2} parent=11 // pred_check_branch
        %186 = sbr.rel (%p184) target = $region16
      $region15: #{wt_bottleneck_forward.2} parent=11 // pred_region
        _
      $region16: #{wt_bottleneck_forward.2} parent=11 // pred_fallthru
        _
      // Predicated region
      $region17: #{wt_bottleneck_forward.2} parent=11 // pred_check
        %p187 = pneg %p80
      $region18: #{wt_bottleneck_forward.2} parent=11 // pred_check_branch
        %189 = sbr.rel (%p187) target = $region20
      $region19: #{wt_bottleneck_forward.2} parent=11 // pred_region
        _
      $region20: #{wt_bottleneck_forward.2} parent=11 // pred_fallthru
        _
      // Predicated region
      $region21: #{wt_bottleneck_forward.2} parent=11 // pred_check
        %p190 = pneg %p101
      $region22: #{wt_bottleneck_forward.2} parent=11 // pred_check_branch
        %192 = sbr.rel (%p190) target = $region24
      $region23: #{wt_bottleneck_forward.2} parent=11 // pred_region
        _
      $region24: #{wt_bottleneck_forward.2} parent=11 // pred_fallthru
        _
      // Predicated region
      $region25: #{wt_bottleneck_forward.2} parent=11 // pred_check
        %p193 = pneg %p122
      $region26: #{wt_bottleneck_forward.2} parent=11 // pred_check_branch
        %195 = sbr.rel (%p193) target = $region28
      $region27: #{wt_bottleneck_forward.2} parent=11 // pred_region
        _
      $region28: #{wt_bottleneck_forward.2} parent=11 // pred_fallthru
        _
      // Predicated region
      $region29: #{wt_bottleneck_forward.2} parent=11 // pred_check
        %p196 = pneg %p143
      $region30: #{wt_bottleneck_forward.2} parent=11 // pred_check_branch
        %198 = sbr.rel (%p196) target = $region32
      $region31: #{wt_bottleneck_forward.2} parent=11 // pred_region
        _
      $region32: #{wt_bottleneck_forward.2} parent=11 // pred_fallthru
        _
    $region12: #{wt_bottleneck_forward.2} parent=5 // pred_fallthru
      _
    %p199 = scmp.lt.s32.totalorder %s12, 2
    // Predicated region
    $region33: #{wt_bottleneck_forward.2} parent=5 // pred_check
      %p200 = pneg %p199
    $region34: #{wt_bottleneck_forward.2} parent=5 // pred_check_branch
      %202 = sbr.rel (%p200) target = $region36
    $region35: #{wt_bottleneck_forward.2} parent=5 // pred_region
      // Predicated region
      $region37: #{wt_bottleneck_forward.2} parent=35 // pred_check
        %p203 = pneg %p32
      $region38: #{wt_bottleneck_forward.2} parent=35 // pred_check_branch
        %205 = sbr.rel (%p203) target = $region40
      $region39: #{wt_bottleneck_forward.2} parent=35 // pred_region
        %p206 = scmp.lt.s32.totalorder %s12, 1
        %s207 = scalar_select %p206, %s12, 1
        %s208 = smul.addr %s207, 8
        %s209 = smul.addr %s208, 8
        %s210 = scalar_lea.vmem %s0, %s209
      $region40: #{wt_bottleneck_forward.2} parent=35 // pred_fallthru
        _
    $region36: #{wt_bottleneck_forward.2} parent=5 // pred_fallthru
      _
    %p211 = scmp.le.s32.totalorder 1, %s12
    %p212 = scmp.lt.s32.totalorder %s12, 3
    %p213 = pnand %p211, %p212
    %p214 = pneg %p213
    // Predicated region
    $region41: #{wt_bottleneck_forward.2} parent=5 // pred_check
      _
    $region42: #{wt_bottleneck_forward.2} parent=5 // pred_check_branch
      %216 = sbr.rel (%p213) target = $region44
    $region43: #{wt_bottleneck_forward.2} parent=5 // pred_region
      %s217 = ssub.s32 %s12, 1
      %p218 = scmp.lt.s32.totalorder %s17, 1
      %s219 = scalar_select %p218, %s17, 1
      %s220 = smul.addr %s219, 8
      %s221 = smul.addr %s220, 8
      %s222 = scalar_lea.vmem %s0, %s221
      %p223 = pneg %p38
      %p224 = pneg %p35
      %p225 = pneg %p59
      %p226 = pneg %p56
      %p227 = pneg %p80
      %p228 = pneg %p77
      %p229 = pneg %p101
      %p230 = pneg %p98
      %p231 = pneg %p122
      %p232 = pneg %p119
      %p233 = pneg %p143
      %p234 = pneg %p140
      %p235 = pneg %p169
      %p236 = pneg %p166
      %p237 = scmp.lt.s32.totalorder %s17, 1
      %s238 = scalar_select %p237, %s17, 1
      %s239 = smul.addr %s238, 8
      %s240 = smul.addr %s239, 8
      %s241 = scalar_lea.vmem %s6, %s240
      %p242 = scmp.lt.s32.totalorder %s17, 1
      %s243 = scalar_select %p242, %s17, 1
      %s244 = smul.addr %s243, 8
      %s245 = smul.addr %s244, 8
      %s246 = scalar_lea.vmem %s0, %s245
      %p247 = scmp.lt.s32.totalorder %s17, 1
      %s248 = scalar_select %p247, %s17, 1
      %s249 = smul.addr %s248, 8
      %s250 = smul.addr %s249, 8
      %s251 = scalar_lea.vmem %s6, %s250
      %vm253 = vcmask 125952
      %254 = vst.msk [vmem:[#allocation2] sm:$0xf] %vm253, 0
      %vm255 = vcmask 122880
      %256 = vst.msk [vmem:[#allocation2 + $0x4] sm:$0x1] %vm255, 0
      %s257 = scalar_lea.vmem [#allocation2], 72
      %258 = vst.msk [vmem:[%s257] sm:$0xf] %vm253, 0
      %259 = vst.msk [vmem:[%s257 + $0x4] sm:$0x1] %vm255, 0
      %vm260 = vcmask 122880
      %vm261 = vsmask.f32 256
      %vm262 = vmand %vm260, %vm261
      %v263 = vld [vmem:[#allocation2] sm:$0x1]
      %v264 = vsel %vm262, 0, %v263
      %265 = vst [vmem:[#allocation2] sm:$0x1] %v264
      %v266 = vld [vmem:[#allocation2 + $0x8] sm:$0x1]
      %v267 = vsel %vm262, 0, %v266
      %268 = vst [vmem:[#allocation2 + $0x8] sm:$0x1] %v267
      %v269 = vld [vmem:[#allocation2 + $0x10] sm:$0x1]
      %v270 = vsel %vm262, 0, %v269
      %271 = vst [vmem:[#allocation2 + $0x10] sm:$0x1] %v270
      %v272 = vld [vmem:[#allocation2 + $0x18] sm:$0x1]
      %v273 = vsel %vm262, 0, %v272
      %274 = vst [vmem:[#allocation2 + $0x18] sm:$0x1] %v273
      %v275 = vld [vmem:[#allocation2 + $0x20] sm:$0x1]
      %v276 = vsel %vm262, 0, %v275
      %277 = vst [vmem:[#allocation2 + $0x20] sm:$0x1] %v276
      %v278 = vld [vmem:[#allocation2 + $0x28] sm:$0x1]
      %v279 = vsel %vm262, 0, %v278
      %280 = vst [vmem:[#allocation2 + $0x28] sm:$0x1] %v279
      %v281 = vld [vmem:[#allocation2 + $0x30] sm:$0x1]
      %v282 = vsel %vm262, 0, %v281
      %283 = vst [vmem:[#allocation2 + $0x30] sm:$0x1] %v282
      %v284 = vld [vmem:[#allocation2 + $0x38] sm:$0x1]
      %v285 = vsel %vm262, 0, %v284
      %286 = vst [vmem:[#allocation2 + $0x38] sm:$0x1] %v285
      %v287 = vld [vmem:[#allocation2 + $0x40] sm:$0x1]
      %v288 = vsel %vm262, 0, %v287
      %289 = vst [vmem:[#allocation2 + $0x40] sm:$0x1] %v288
      %v290 = vld [vmem:[#allocation2 + $0x48] sm:$0x1]
      %v291 = vsel %vm262, 0, %v290
      %292 = vst [vmem:[#allocation2 + $0x48] sm:$0x1] %v291
      %vm293 = vsmask.f32 7938
      %vm294 = vmand %vm260, %vm293
      %v295 = vld [vmem:[#allocation2 + $0x4] sm:$0x1]
      %v296 = vsel %vm294, 0, %v295
      %297 = vst [vmem:[#allocation2 + $0x4] sm:$0x1] %v296
      %v298 = vld [vmem:[#allocation2 + $0xc] sm:$0x1]
      %v299 = vsel %vm294, 0, %v298
      %300 = vst [vmem:[#allocation2 + $0xc] sm:$0x1] %v299
      %v301 = vld [vmem:[#allocation2 + $0x14] sm:$0x1]
      %v302 = vsel %vm294, 0, %v301
      %303 = vst [vmem:[#allocation2 + $0x14] sm:$0x1] %v302
      %v304 = vld [vmem:[#allocation2 + $0x1c] sm:$0x1]
      %v305 = vsel %vm294, 0, %v304
      %306 = vst [vmem:[#allocation2 + $0x1c] sm:$0x1] %v305
      %v307 = vld [vmem:[#allocation2 + $0x24] sm:$0x1]
      %v308 = vsel %vm294, 0, %v307
      %309 = vst [vmem:[#allocation2 + $0x24] sm:$0x1] %v308
      %v310 = vld [vmem:[#allocation2 + $0x2c] sm:$0x1]
      %v311 = vsel %vm294, 0, %v310
      %312 = vst [vmem:[#allocation2 + $0x2c] sm:$0x1] %v311
      %v313 = vld [vmem:[#allocation2 + $0x34] sm:$0x1]
      %v314 = vsel %vm294, 0, %v313
      %315 = vst [vmem:[#allocation2 + $0x34] sm:$0x1] %v314
      %v316 = vld [vmem:[#allocation2 + $0x3c] sm:$0x1]
      %v317 = vsel %vm294, 0, %v316
      %318 = vst [vmem:[#allocation2 + $0x3c] sm:$0x1] %v317
      %v319 = vld [vmem:[#allocation2 + $0x44] sm:$0x1]
      %v320 = vsel %vm294, 0, %v319
      %321 = vst [vmem:[#allocation2 + $0x44] sm:$0x1] %v320
      %v322 = vld [vmem:[#allocation2 + $0x4c] sm:$0x1]
      %v323 = vsel %vm294, 0, %v322
      %324 = vst [vmem:[#allocation2 + $0x4c] sm:$0x1] %v323
      %v325 = vld [vmem:[%s246] sm:$0xff]
      %v326 = vld [vmem:[%s246 + $0x8] sm:$0xff]
      %v327 = vld [vmem:[%s246 + $0x10] sm:$0xff]
      %v328 = vld [vmem:[%s246 + $0x18] sm:$0xff]
      %v329 = vld [vmem:[%s246 + $0x20] sm:$0xff]
      %v330 = vld [vmem:[%s246 + $0x28] sm:$0xff]
      %v331 = vld [vmem:[%s246 + $0x30] sm:$0xff]
      %v332 = vld [vmem:[%s246 + $0x38] sm:$0xff]
      %v333 = vld [vmem:[%s1] sm:$0xff]
      %v334 = vld [vmem:[%s1 + $0x8] sm:$0xff]
      %v335 = vld [vmem:[%s3] sm:$0x1]
      %v336 = vlaneseq
      %v337 = vshrl.u32 %v336, 7
      %v338 = vsub.s32 0, %v337
      %v339 = vrot.slane %v335, %v338
      %vm340 = vcmask 130048
      %v342 = vsel %vm340, %v325, 0
      %v345 = vsel %vm340, %v326, 0
      %v348 = vsel %vm340, %v327, 0
      %v351 = vsel %vm340, %v328, 0
      %v354 = vsel %vm340, %v329, 0
      %v357 = vsel %vm340, %v330, 0
      %v360 = vsel %vm340, %v331, 0
      %v363 = vsel %vm340, %v332, 0
      %365 = vmatprep.subr.mxu0 0.0
      %366 = vmatpush1.msra.mxu0 %v333
      %367 = vmatprep.subr.mxu0 0.0
      %368 = vmatpush1.msra.mxu0 %v334
      %369 = vmatprep.subr.mxu0 0.0
      %370 = vmatpush1.msra.mxu0 0.0
      %371 = vmatprep.subr.mxu0 0.0
      %372 = vmatpush1.msra.mxu0 0.0
      %373 = vmatprep.subr.mxu0 0.0
      %374 = vmatpush1.msra.mxu0 0.0
      %375 = vmatprep.subr.mxu0 0.0
      %376 = vmatpush1.msra.mxu0 0.0
      %377 = vmatprep.subr.mxu0 0.0
      %378 = vmatpush1.msra.mxu0 0.0
      %379 = vmatprep.subr.mxu0 0.0
      %380 = vmatpush1.msra.mxu0 0.0
      %381 = vmatprep.subr.mxu0 0.0
      %382 = vmatpush1.msra.mxu0 0.0
      %383 = vmatprep.subr.mxu0 0.0
      %384 = vmatpush1.msra.mxu0 0.0
      %385 = vmatprep.subr.mxu0 0.0
      %386 = vmatpush1.msra.mxu0 0.0
      %387 = vmatprep.subr.mxu0 0.0
      %388 = vmatpush1.msra.mxu0 0.0
      %389 = vmatprep.subr.mxu0 0.0
      %390 = vmatpush1.msra.mxu0 0.0
      %391 = vmatprep.subr.mxu0 0.0
      %392 = vmatpush1.msra.mxu0 0.0
      %393 = vmatprep.subr.mxu0 0.0
      %394 = vmatpush1.msra.mxu0 0.0
      %395 = vmatprep.subr.mxu0 0.0
      %396 = vmatpush1.msra.mxu0 0.0
      %397 = vmatprep.subr.mxu0 0.0
      %398 = vmatpush1.msra.mxu0 0.0
      %399 = vmatprep.subr.mxu0 0.0
      %400 = vmatpush1.msra.mxu0 0.0
      %401 = vmatprep.subr.mxu0 0.0
      %402 = vmatpush1.msra.mxu0 0.0
      %403 = vmatprep.subr.mxu0 0.0
      %404 = vmatpush1.msra.mxu0 0.0
      %405 = vmatprep.subr.mxu0 0.0
      %406 = vmatpush1.msra.mxu0 0.0
      %407 = vmatprep.subr.mxu0 0.0
      %408 = vmatpush1.msra.mxu0 0.0
      %409 = vmatprep.subr.mxu0 0.0
      %410 = vmatpush1.msra.mxu0 0.0
      %411 = vmatprep.subr.mxu0 0.0
      %412 = vmatpush1.msra.mxu0 0.0
      %413 = vmatprep.subr.mxu0 0.0
      %414 = vmatpush1.msra.mxu0 0.0
      %415 = vmatprep.subr.mxu0 0.0
      %416 = vmatpush1.msra.mxu0 0.0
      %417 = vmatprep.subr.mxu0 0.0
      %418 = vmatpush1.msra.mxu0 0.0
      %419 = vmatprep.subr.mxu0 0.0
      %420 = vmatpush1.msra.mxu0 0.0
      %421 = vmatprep.subr.mxu0 0.0
      %422 = vmatpush1.msra.mxu0 0.0
      %423 = vmatprep.subr.mxu0 0.0
      %424 = vmatpush1.msra.mxu0 0.0
      %425 = vmatprep.subr.mxu0 0.0
      %426 = vmatpush1.msra.mxu0 0.0
      %427 = vmatprep.subr.mxu0 0.0
      %428 = vmatpush1.msra.mxu0 0.0
      %429 = vmatprep.mubr.f32.mxu0 0.0
      %430 = vmatmul.mubr.f32.gmra.mrb[0].mxu0 %v342
      %v431 = vpop.f32.mrb[0].mxu0
      %v432 = vadd.f32 %v339, %v431
      %v433 = vpop.f32.mrb[0].mxu0
      %434 = vmatprep.mubr.f32.mxu0 0.0
      %435 = vmatmul.mubr.f32.gmra.mrb[0].mxu0 %v345
      %v436 = vpop.f32.mrb[0].mxu0
      %v437 = vadd.f32 %v339, %v436
      %v438 = vpop.f32.mrb[0].mxu0
      %439 = vmatprep.mubr.f32.mxu0 0.0
      %440 = vmatmul.mubr.f32.gmra.mrb[0].mxu0 %v348
      %v441 = vpop.f32.mrb[0].mxu0
      %v442 = vadd.f32 %v339, %v441
      %v443 = vpop.f32.mrb[0].mxu0
      %444 = vmatprep.mubr.f32.mxu0 0.0
      %445 = vmatmul.mubr.f32.gmra.mrb[0].mxu0 %v351
      %v446 = vpop.f32.mrb[0].mxu0
      %v447 = vadd.f32 %v339, %v446
      %v448 = vpop.f32.mrb[0].mxu0
      %449 = vmatprep.mubr.f32.mxu0 0.0
      %450 = vmatmul.mubr.f32.gmra.mrb[0].mxu0 %v354
      %v451 = vpop.f32.mrb[0].mxu0
      %v452 = vadd.f32 %v339, %v451
      %v453 = vpop.f32.mrb[0].mxu0
      %454 = vmatprep.mubr.f32.mxu0 0.0
      %455 = vmatmul.mubr.f32.gmra.mrb[0].mxu0 %v357
      %v456 = vpop.f32.mrb[0].mxu0
      %v457 = vadd.f32 %v339, %v456
      %v458 = vpop.f32.mrb[0].mxu0
      %459 = vmatprep.mubr.f32.mxu0 0.0
      %460 = vmatmul.mubr.f32.gmra.mrb[0].mxu0 %v360
      %v461 = vpop.f32.mrb[0].mxu0
      %v462 = vadd.f32 %v339, %v461
      %v463 = vpop.f32.mrb[0].mxu0
      %464 = vmatprep.mubr.f32.mxu0 0.0
      %465 = vmatmul.mubr.f32.gmra.mrb[0].mxu0 %v363
      %v466 = vpop.f32.mrb[0].mxu0
      %v467 = vadd.f32 %v339, %v466
      %v468 = vpop.f32.mrb[0].mxu0
      %469 = vdwg.mxu0
      %v470 = vxor.u32 %v432, 2147483648
      %v471 = vxor.u32 %v437, 2147483648
      %v472 = vxor.u32 %v442, 2147483648
      %v473 = vxor.u32 %v447, 2147483648
      %v474 = vxor.u32 %v452, 2147483648
      %v475 = vxor.u32 %v457, 2147483648
      %v476 = vxor.u32 %v462, 2147483648
      %v477 = vxor.u32 %v467, 2147483648
      %v478 = vmul.f32 %v470, 1.442695
      %v479 = vpow.pop %v478
      %v480 = vmul.f32 %v471, 1.442695
      %v481 = vpow.pop %v480
      %v482 = vmul.f32 %v472, 1.442695
      %v483 = vpow.pop %v482
      %v484 = vmul.f32 %v473, 1.442695
      %v485 = vpow.pop %v484
      %v486 = vmul.f32 %v474, 1.442695
      %v487 = vpow.pop %v486
      %v488 = vmul.f32 %v475, 1.442695
      %v489 = vpow.pop %v488
      %v490 = vmul.f32 %v476, 1.442695
      %v491 = vpow.pop %v490
      %v492 = vmul.f32 %v477, 1.442695
      %v493 = vpow.pop %v492
      %v494 = vadd.f32 %v479, 1.0
      %v495 = vadd.f32 %v481, 1.0
      %v496 = vadd.f32 %v483, 1.0
      %v497 = vadd.f32 %v485, 1.0
      %v498 = vadd.f32 %v487, 1.0
      %v499 = vadd.f32 %v489, 1.0
      %v500 = vadd.f32 %v491, 1.0
      %v501 = vadd.f32 %v493, 1.0
      %v502 = vrcp.pop %v494
      %v503 = vmul.f32 1.0, %v502
      %v504 = vrcp.pop %v495
      %v505 = vmul.f32 1.0, %v504
      %v506 = vrcp.pop %v496
      %v507 = vmul.f32 1.0, %v506
      %v508 = vrcp.pop %v497
      %v509 = vmul.f32 1.0, %v508
      %v510 = vrcp.pop %v498
      %v511 = vmul.f32 1.0, %v510
      %v512 = vrcp.pop %v499
      %v513 = vmul.f32 1.0, %v512
      %v514 = vrcp.pop %v500
      %v515 = vmul.f32 1.0, %v514
      %v516 = vrcp.pop %v501
      %v517 = vmul.f32 1.0, %v516
      %v518 = vmul.f32 %v432, %v503
      %v519 = vmul.f32 %v437, %v505
      %v520 = vmul.f32 %v442, %v507
      %v521 = vmul.f32 %v447, %v509
      %v522 = vmul.f32 %v452, %v511
      %v523 = vmul.f32 %v457, %v513
      %v524 = vmul.f32 %v462, %v515
      %v525 = vmul.f32 %v467, %v517
      %v526 = vpack.c.bf16 %v519, %v518
      %v527 = vpack.c.bf16 %v521, %v520
      %v528 = vpack.c.bf16 %v523, %v522
      %v529 = vpack.c.bf16 %v525, %v524
      %v534 = vunpack.c.l.b16 %v526
      %v535 = vunpack.c.h.b16 %v526
      %v536 = vunpack.c.l.b16 %v527
      %v537 = vunpack.c.h.b16 %v527
      %v538 = vunpack.c.l.b16 %v528
      %v539 = vunpack.c.h.b16 %v528
      %v540 = vunpack.c.l.b16 %v529
      %v541 = vunpack.c.h.b16 %v529
      %v542 = vpack.c.b16 %v534, %v534
      %v543 = vpack.c.b16 %v535, %v535
      %v544 = vpack.c.b16 %v536, %v536
      %v545 = vpack.c.b16 %v537, %v537
      %v546 = vpack.c.b16 %v538, %v538
      %v547 = vpack.c.b16 %v539, %v539
      %v548 = vpack.c.b16 %v540, %v540
      %v549 = vpack.c.b16 %v541, %v541
      %v551 = vshrl.u32 %v542, 16
      %v553 = vrot.slane %v551, 7
      %v554 = vshll.u32 %v542, 16
      %v556 = vor.u32 %v553, %v554
      %v557 = vrot.slane %v553, 4
      %v559 = vshrl.u32 %v543, 16
      %v561 = vrot.slane %v559, 7
      %v562 = vshll.u32 %v543, 16
      %v564 = vor.u32 %v561, %v562
      %v565 = vrot.slane %v561, 4
      %v567 = vshrl.u32 %v544, 16
      %v569 = vrot.slane %v567, 7
      %v570 = vshll.u32 %v544, 16
      %v572 = vor.u32 %v569, %v570
      %v573 = vrot.slane %v569, 4
      %v575 = vshrl.u32 %v545, 16
      %v577 = vrot.slane %v575, 7
      %v578 = vshll.u32 %v545, 16
      %v580 = vor.u32 %v577, %v578
      %v581 = vrot.slane %v577, 4
      %v583 = vshrl.u32 %v546, 16
      %v585 = vrot.slane %v583, 7
      %v586 = vshll.u32 %v546, 16
      %v588 = vor.u32 %v585, %v586
      %v589 = vrot.slane %v585, 4
      %v591 = vshrl.u32 %v547, 16
      %v593 = vrot.slane %v591, 7
      %v594 = vshll.u32 %v547, 16
      %v596 = vor.u32 %v593, %v594
      %v597 = vrot.slane %v593, 4
      %v599 = vshrl.u32 %v548, 16
      %v601 = vrot.slane %v599, 7
      %v602 = vshll.u32 %v548, 16
      %v604 = vor.u32 %v601, %v602
      %v605 = vrot.slane %v601, 4
      %v607 = vshrl.u32 %v549, 16
      %v609 = vrot.slane %v607, 7
      %v610 = vshll.u32 %v549, 16
      %v612 = vor.u32 %v609, %v610
      %v613 = vrot.slane %v609, 4
      %s630 = scalar_lea.vmem [#allocation2], 8
      %vm631 = vcmask 125952
      %vm632 = vmand %vm631, %vm293
      %v633 = vld [vmem:[%s630] sm:$0xf]
      %v634 = vsel %vm632, %v556, %v633
      %635 = vst [vmem:[%s630] sm:$0xf] %v634
      %v636 = vld [vmem:[%s630 + $0x4] sm:$0x1]
      %v637 = vsel %vm262, %v557, %v636
      %638 = vst [vmem:[%s630 + $0x4] sm:$0x1] %v637
      %v639 = vld [vmem:[%s630 + $0x8] sm:$0xf]
      %v640 = vsel %vm632, %v564, %v639
      %641 = vst [vmem:[%s630 + $0x8] sm:$0xf] %v640
      %v642 = vld [vmem:[%s630 + $0xc] sm:$0x1]
      %v643 = vsel %vm262, %v565, %v642
      %644 = vst [vmem:[%s630 + $0xc] sm:$0x1] %v643
      %v645 = vld [vmem:[%s630 + $0x10] sm:$0xf]
      %v646 = vsel %vm632, %v572, %v645
      %647 = vst [vmem:[%s630 + $0x10] sm:$0xf] %v646
      %v648 = vld [vmem:[%s630 + $0x14] sm:$0x1]
      %v649 = vsel %vm262, %v573, %v648
      %650 = vst [vmem:[%s630 + $0x14] sm:$0x1] %v649
      %v651 = vld [vmem:[%s630 + $0x18] sm:$0xf]
      %v652 = vsel %vm632, %v580, %v651
      %653 = vst [vmem:[%s630 + $0x18] sm:$0xf] %v652
      %v654 = vld [vmem:[%s630 + $0x1c] sm:$0x1]
      %v655 = vsel %vm262, %v581, %v654
      %656 = vst [vmem:[%s630 + $0x1c] sm:$0x1] %v655
      %v657 = vld [vmem:[%s630 + $0x20] sm:$0xf]
      %v658 = vsel %vm632, %v588, %v657
      %659 = vst [vmem:[%s630 + $0x20] sm:$0xf] %v658
      %v660 = vld [vmem:[%s630 + $0x24] sm:$0x1]
      %v661 = vsel %vm262, %v589, %v660
      %662 = vst [vmem:[%s630 + $0x24] sm:$0x1] %v661
      %v663 = vld [vmem:[%s630 + $0x28] sm:$0xf]
      %v664 = vsel %vm632, %v596, %v663
      %665 = vst [vmem:[%s630 + $0x28] sm:$0xf] %v664
      %v666 = vld [vmem:[%s630 + $0x2c] sm:$0x1]
      %v667 = vsel %vm262, %v597, %v666
      %668 = vst [vmem:[%s630 + $0x2c] sm:$0x1] %v667
      %v669 = vld [vmem:[%s630 + $0x30] sm:$0xf]
      %v670 = vsel %vm632, %v604, %v669
      %671 = vst [vmem:[%s630 + $0x30] sm:$0xf] %v670
      %v672 = vld [vmem:[%s630 + $0x34] sm:$0x1]
      %v673 = vsel %vm262, %v605, %v672
      %674 = vst [vmem:[%s630 + $0x34] sm:$0x1] %v673
      %v675 = vld [vmem:[%s630 + $0x38] sm:$0xf]
      %v676 = vsel %vm632, %v612, %v675
      %677 = vst [vmem:[%s630 + $0x38] sm:$0xf] %v676
      %v678 = vld [vmem:[%s630 + $0x3c] sm:$0x1]
      %v679 = vsel %vm262, %v613, %v678
      %680 = vst [vmem:[%s630 + $0x3c] sm:$0x1] %v679
      %v681 = vld [vmem:[#allocation2] sm:$0xf]
      %v682 = vld [vmem:[#allocation2 + $0x8] sm:$0xf]
      %v683 = vld [vmem:[#allocation2 + $0x10] sm:$0xf]
      %v684 = vld [vmem:[#allocation2 + $0x18] sm:$0xf]
      %v685 = vld [vmem:[#allocation2 + $0x20] sm:$0xf]
      %v686 = vld [vmem:[#allocation2 + $0x28] sm:$0xf]
      %v687 = vld [vmem:[#allocation2 + $0x30] sm:$0xf]
      %v688 = vld [vmem:[#allocation2 + $0x38] sm:$0xf]
      %v689 = vld [vmem:[%s4] sm:$0xf]
      %v690 = vld [vmem:[%s4 + $0x4] sm:$0xf]
      %v691 = vld [vmem:[#allocation2 + $0x4] sm:$0x1]
      %v692 = vld [vmem:[#allocation2 + $0xc] sm:$0x1]
      %v693 = vld [vmem:[#allocation2 + $0x14] sm:$0x1]
      %v694 = vld [vmem:[#allocation2 + $0x1c] sm:$0x1]
      %v695 = vld [vmem:[#allocation2 + $0x24] sm:$0x1]
      %v696 = vld [vmem:[#allocation2 + $0x2c] sm:$0x1]
      %v697 = vld [vmem:[#allocation2 + $0x34] sm:$0x1]
      %v698 = vld [vmem:[#allocation2 + $0x3c] sm:$0x1]
      %vm699 = vsmask.f32 3328
      %vm700 = vsmask.f32 7440
      %vm701 = vmor %vm699, %vm700
      %v703 = vshrl.u32 %v681, 16
      %v705 = vrot.slane %v703, 4
      %v706 = vshll.u32 %v681, 16
      %v708 = vrot.slane %v706, 5
      %v709 = vor.u32 %v705, %v708
      %v710 = vrot.slane %v709, 4
      %v712 = vshll.u32 %v691, 16
      %v714 = vrot.slane %v712, 5
      %v715 = vsel %vm701, %v710, %v714
      %v717 = vshrl.u32 %v682, 16
      %v719 = vrot.slane %v717, 4
      %v720 = vshll.u32 %v682, 16
      %v722 = vrot.slane %v720, 5
      %v723 = vor.u32 %v719, %v722
      %v724 = vrot.slane %v723, 4
      %v726 = vshll.u32 %v692, 16
      %v728 = vrot.slane %v726, 5
      %v729 = vsel %vm701, %v724, %v728
      %v731 = vshrl.u32 %v683, 16
      %v733 = vrot.slane %v731, 4
      %v734 = vshll.u32 %v683, 16
      %v736 = vrot.slane %v734, 5
      %v737 = vor.u32 %v733, %v736
      %v738 = vrot.slane %v737, 4
      %v740 = vshll.u32 %v693, 16
      %v742 = vrot.slane %v740, 5
      %v743 = vsel %vm701, %v738, %v742
      %v745 = vshrl.u32 %v684, 16
      %v747 = vrot.slane %v745, 4
      %v748 = vshll.u32 %v684, 16
      %v750 = vrot.slane %v748, 5
      %v751 = vor.u32 %v747, %v750
      %v752 = vrot.slane %v751, 4
      %v754 = vshll.u32 %v694, 16
      %v756 = vrot.slane %v754, 5
      %v757 = vsel %vm701, %v752, %v756
      %v759 = vshrl.u32 %v685, 16
      %v761 = vrot.slane %v759, 4
      %v762 = vshll.u32 %v685, 16
      %v764 = vrot.slane %v762, 5
      %v765 = vor.u32 %v761, %v764
      %v766 = vrot.slane %v765, 4
      %v768 = vshll.u32 %v695, 16
      %v770 = vrot.slane %v768, 5
      %v771 = vsel %vm701, %v766, %v770
      %v773 = vshrl.u32 %v686, 16
      %v775 = vrot.slane %v773, 4
      %v776 = vshll.u32 %v686, 16
      %v778 = vrot.slane %v776, 5
      %v779 = vor.u32 %v775, %v778
      %v780 = vrot.slane %v779, 4
      %v782 = vshll.u32 %v696, 16
      %v784 = vrot.slane %v782, 5
      %v785 = vsel %vm701, %v780, %v784
      %v787 = vshrl.u32 %v687, 16
      %v789 = vrot.slane %v787, 4
      %v790 = vshll.u32 %v687, 16
      %v792 = vrot.slane %v790, 5
      %v793 = vor.u32 %v789, %v792
      %v794 = vrot.slane %v793, 4
      %v796 = vshll.u32 %v697, 16
      %v798 = vrot.slane %v796, 5
      %v799 = vsel %vm701, %v794, %v798
      %v801 = vshrl.u32 %v688, 16
      %v803 = vrot.slane %v801, 4
      %v804 = vshll.u32 %v688, 16
      %v806 = vrot.slane %v804, 5
      %v807 = vor.u32 %v803, %v806
      %v808 = vrot.slane %v807, 4
      %v810 = vshll.u32 %v698, 16
      %v812 = vrot.slane %v810, 5
      %v813 = vsel %vm701, %v808, %v812
      %s814 = scalar_lea.vmem %s4, 8
      %v815 = vld [vmem:[%s814] sm:$0xf]
      %v816 = vld [vmem:[%s814 + $0x4] sm:$0xf]
      %v817 = vunpack.c.l.b16 %v715
      %v818 = vunpack.c.l.b16 %v729
      %v819 = vunpack.c.l.b16 %v743
      %v820 = vunpack.c.l.b16 %v757
      %v821 = vunpack.c.l.b16 %v771
      %v822 = vunpack.c.l.b16 %v785
      %v823 = vunpack.c.l.b16 %v799
      %v824 = vunpack.c.l.b16 %v813
      %v825 = vpack.c.b16 %v818, %v817
      %v826 = vpack.c.b16 %v820, %v819
      %v827 = vpack.c.b16 %v822, %v821
      %v828 = vpack.c.b16 %v824, %v823
      %v831 = vunpack.c.l.b16 %v815
      %v832 = vunpack.c.l.b16 %v816
      %v833 = vpack.c.b16 %v832, %v831
      %v836 = vsel %vm340, %v825, 0
      %v839 = vsel %vm340, %v826, 0
      %v842 = vsel %vm340, %v827, 0
      %v845 = vsel %vm340, %v828, 0
      %847 = vmatprep.subr.bf16.mxu0 0
      %848 = vmatpush1.bf16.msra.mxu0 %v833
      %849 = vmatprep.subr.bf16.mxu0 0
      %850 = vmatpush1.bf16.msra.mxu0 0
      %851 = vmatprep.subr.bf16.mxu0 0
      %852 = vmatpush1.bf16.msra.mxu0 0
      %853 = vmatprep.subr.bf16.mxu0 0
      %854 = vmatpush1.bf16.msra.mxu0 0
      %855 = vmatprep.subr.bf16.mxu0 0
      %856 = vmatpush1.bf16.msra.mxu0 0
      %857 = vmatprep.subr.bf16.mxu0 0
      %858 = vmatpush1.bf16.msra.mxu0 0
      %859 = vmatprep.subr.bf16.mxu0 0
      %860 = vmatpush1.bf16.msra.mxu0 0
      %861 = vmatprep.subr.bf16.mxu0 0
      %862 = vmatpush1.bf16.msra.mxu0 0
      %863 = vmatprep.subr.bf16.mxu0 0
      %864 = vmatpush1.bf16.msra.mxu0 0
      %865 = vmatprep.subr.bf16.mxu0 0
      %866 = vmatpush1.bf16.msra.mxu0 0
      %867 = vmatprep.subr.bf16.mxu0 0
      %868 = vmatpush1.bf16.msra.mxu0 0
      %869 = vmatprep.subr.bf16.mxu0 0
      %870 = vmatpush1.bf16.msra.mxu0 0
      %871 = vmatprep.subr.bf16.mxu0 0
      %872 = vmatpush1.bf16.msra.mxu0 0
      %873 = vmatprep.subr.bf16.mxu0 0
      %874 = vmatpush1.bf16.msra.mxu0 0
      %875 = vmatprep.subr.bf16.mxu0 0
      %876 = vmatpush1.bf16.msra.mxu0 0
      %877 = vmatprep.subr.bf16.mxu0 0
      %878 = vmatpush1.bf16.msra.mxu0 0
      %879 = vmatprep.mubr.bf16.mxu0 0
      %880 = vmatmul.mubr.bf16.gmra.mrb[0].mxu0 %v836
      %v881 = vpop.f32.mrb[0].mxu0
      %v882 = vadd.f32 0.0, %v881
      %v883 = vpop.f32.mrb[0].mxu0
      %v884 = vpop.f32.mrb[0].mxu0
      %v885 = vadd.f32 0.0, %v884
      %v886 = vpop.f32.mrb[0].mxu0
      %887 = vmatprep.mubr.bf16.mxu0 0
      %888 = vmatmul.mubr.bf16.gmra.mrb[0].mxu0 %v839
      %v889 = vpop.f32.mrb[0].mxu0
      %v890 = vadd.f32 0.0, %v889
      %v891 = vpop.f32.mrb[0].mxu0
      %v892 = vpop.f32.mrb[0].mxu0
      %v893 = vadd.f32 0.0, %v892
      %v894 = vpop.f32.mrb[0].mxu0
      %895 = vmatprep.mubr.bf16.mxu0 0
      %896 = vmatmul.mubr.bf16.gmra.mrb[0].mxu0 %v842
      %v897 = vpop.f32.mrb[0].mxu0
      %v898 = vadd.f32 0.0, %v897
      %v899 = vpop.f32.mrb[0].mxu0
      %v900 = vpop.f32.mrb[0].mxu0
      %v901 = vadd.f32 0.0, %v900
      %v902 = vpop.f32.mrb[0].mxu0
      %903 = vmatprep.mubr.bf16.mxu0 0
      %904 = vmatmul.mubr.bf16.gmra.mrb[0].mxu0 %v845
      %v905 = vpop.f32.mrb[0].mxu0
      %v906 = vadd.f32 0.0, %v905
      %v907 = vpop.f32.mrb[0].mxu0
      %v908 = vpop.f32.mrb[0].mxu0
      %v909 = vadd.f32 0.0, %v908
      %v910 = vpop.f32.mrb[0].mxu0
      %911 = vdwg.mxu0
      %v920 = vunpack.c.l.b16 %v681
      %v921 = vunpack.c.l.b16 %v682
      %v922 = vunpack.c.l.b16 %v683
      %v923 = vunpack.c.l.b16 %v684
      %v924 = vunpack.c.l.b16 %v685
      %v925 = vunpack.c.l.b16 %v686
      %v926 = vunpack.c.l.b16 %v687
      %v927 = vunpack.c.l.b16 %v688
      %v928 = vpack.c.b16 %v921, %v920
      %v929 = vpack.c.b16 %v923, %v922
      %v930 = vpack.c.b16 %v925, %v924
      %v931 = vpack.c.b16 %v927, %v926
      %v934 = vunpack.c.l.b16 %v689
      %v935 = vunpack.c.l.b16 %v690
      %v936 = vpack.c.b16 %v935, %v934
      %v939 = vsel %vm340, %v928, 0
      %v942 = vsel %vm340, %v929, 0
      %v945 = vsel %vm340, %v930, 0
      %v948 = vsel %vm340, %v931, 0
      %950 = vmatprep.subr.bf16.mxu0 0
      %951 = vmatpush1.bf16.msra.mxu0 %v936
      %952 = vmatprep.subr.bf16.mxu0 0
      %953 = vmatpush1.bf16.msra.mxu0 0
      %954 = vmatprep.subr.bf16.mxu0 0
      %955 = vmatpush1.bf16.msra.mxu0 0
      %956 = vmatprep.subr.bf16.mxu0 0
      %957 = vmatpush1.bf16.msra.mxu0 0
      %958 = vmatprep.subr.bf16.mxu0 0
      %959 = vmatpush1.bf16.msra.mxu0 0
      %960 = vmatprep.subr.bf16.mxu0 0
      %961 = vmatpush1.bf16.msra.mxu0 0
      %962 = vmatprep.subr.bf16.mxu0 0
      %963 = vmatpush1.bf16.msra.mxu0 0
      %964 = vmatprep.subr.bf16.mxu0 0
      %965 = vmatpush1.bf16.msra.mxu0 0
      %966 = vmatprep.subr.bf16.mxu0 0
      %967 = vmatpush1.bf16.msra.mxu0 0
      %968 = vmatprep.subr.bf16.mxu0 0
      %969 = vmatpush1.bf16.msra.mxu0 0
      %970 = vmatprep.subr.bf16.mxu0 0
      %971 = vmatpush1.bf16.msra.mxu0 0
      %972 = vmatprep.subr.bf16.mxu0 0
      %973 = vmatpush1.bf16.msra.mxu0 0
      %974 = vmatprep.subr.bf16.mxu0 0
      %975 = vmatpush1.bf16.msra.mxu0 0
      %976 = vmatprep.subr.bf16.mxu0 0
      %977 = vmatpush1.bf16.msra.mxu0 0
      %978 = vmatprep.subr.bf16.mxu0 0
      %979 = vmatpush1.bf16.msra.mxu0 0
      %980 = vmatprep.subr.bf16.mxu0 0
      %981 = vmatpush1.bf16.msra.mxu0 0
      %982 = vmatprep.mubr.bf16.mxu0 0
      %983 = vmatmul.mubr.bf16.gmra.mrb[0].mxu0 %v939
      %v984 = vpop.f32.mrb[0].mxu0
      %v985 = vadd.f32 %v882, %v984
      %v986 = vpop.f32.mrb[0].mxu0
      %v987 = vpop.f32.mrb[0].mxu0
      %v988 = vadd.f32 %v885, %v987
      %v989 = vpop.f32.mrb[0].mxu0
      %990 = vmatprep.mubr.bf16.mxu0 0
      %991 = vmatmul.mubr.bf16.gmra.mrb[0].mxu0 %v942
      %v992 = vpop.f32.mrb[0].mxu0
      %v993 = vadd.f32 %v890, %v992
      %v994 = vpop.f32.mrb[0].mxu0
      %v995 = vpop.f32.mrb[0].mxu0
      %v996 = vadd.f32 %v893, %v995
      %v997 = vpop.f32.mrb[0].mxu0
      %998 = vmatprep.mubr.bf16.mxu0 0
      %999 = vmatmul.mubr.bf16.gmra.mrb[0].mxu0 %v945
      %v1000 = vpop.f32.mrb[0].mxu0
      %v1001 = vadd.f32 %v898, %v1000
      %v1002 = vpop.f32.mrb[0].mxu0
      %v1003 = vpop.f32.mrb[0].mxu0
      %v1004 = vadd.f32 %v901, %v1003
      %v1005 = vpop.f32.mrb[0].mxu0
      %1006 = vmatprep.mubr.bf16.mxu0 0
      %1007 = vmatmul.mubr.bf16.gmra.mrb[0].mxu0 %v948
      %v1008 = vpop.f32.mrb[0].mxu0
      %v1009 = vadd.f32 %v906, %v1008
      %v1010 = vpop.f32.mrb[0].mxu0
      %v1011 = vpop.f32.mrb[0].mxu0
      %v1012 = vadd.f32 %v909, %v1011
      %v1013 = vpop.f32.mrb[0].mxu0
      %1014 = vdwg.mxu0
      %v1015 = vld [vmem:[#allocation2] sm:$0xe]
      %v1016 = vld [vmem:[#allocation2 + $0x8] sm:$0xe]
      %v1017 = vld [vmem:[#allocation2 + $0x10] sm:$0xe]
      %v1018 = vld [vmem:[#allocation2 + $0x18] sm:$0xe]
      %v1019 = vld [vmem:[#allocation2 + $0x20] sm:$0xe]
      %v1020 = vld [vmem:[#allocation2 + $0x28] sm:$0xe]
      %v1021 = vld [vmem:[#allocation2 + $0x30] sm:$0xe]
      %v1022 = vld [vmem:[#allocation2 + $0x38] sm:$0xe]
      %vm1039 = vcmask 1042432
      %vm1040 = vcmask 1046532
      %vm1041 = vmor %vm1039, %vm1040
      %v1042 = vrot.slane %v1015, 5
      %v1043 = vrot.slane %v1042, 4
      %v1044 = vrot.slane %v691, 5
      %v1045 = vsel %vm1041, %v1043, %v1044
      %v1046 = vrot.slane %v1016, 5
      %v1047 = vrot.slane %v1046, 4
      %v1048 = vrot.slane %v692, 5
      %v1049 = vsel %vm1041, %v1047, %v1048
      %v1050 = vrot.slane %v1017, 5
      %v1051 = vrot.slane %v1050, 4
      %v1052 = vrot.slane %v693, 5
      %v1053 = vsel %vm1041, %v1051, %v1052
      %v1054 = vrot.slane %v1018, 5
      %v1055 = vrot.slane %v1054, 4
      %v1056 = vrot.slane %v694, 5
      %v1057 = vsel %vm1041, %v1055, %v1056
      %v1058 = vrot.slane %v1019, 5
      %v1059 = vrot.slane %v1058, 4
      %v1060 = vrot.slane %v695, 5
      %v1061 = vsel %vm1041, %v1059, %v1060
      %v1062 = vrot.slane %v1020, 5
      %v1063 = vrot.slane %v1062, 4
      %v1064 = vrot.slane %v696, 5
      %v1065 = vsel %vm1041, %v1063, %v1064
      %v1066 = vrot.slane %v1021, 5
      %v1067 = vrot.slane %v1066, 4
      %v1068 = vrot.slane %v697, 5
      %v1069 = vsel %vm1041, %v1067, %v1068
      %v1070 = vrot.slane %v1022, 5
      %v1071 = vrot.slane %v1070, 4
      %v1072 = vrot.slane %v698, 5
      %v1073 = vsel %vm1041, %v1071, %v1072
      %s1074 = scalar_lea.vmem %s4, 16
      %v1075 = vld [vmem:[%s1074] sm:$0xf]
      %v1076 = vld [vmem:[%s1074 + $0x4] sm:$0xf]
      %v1077 = vunpack.c.l.b16 %v1045
      %v1078 = vunpack.c.l.b16 %v1049
      %v1079 = vunpack.c.l.b16 %v1053
      %v1080 = vunpack.c.l.b16 %v1057
      %v1081 = vunpack.c.l.b16 %v1061
      %v1082 = vunpack.c.l.b16 %v1065
      %v1083 = vunpack.c.l.b16 %v1069
      %v1084 = vunpack.c.l.b16 %v1073
      %v1085 = vpack.c.b16 %v1078, %v1077
      %v1086 = vpack.c.b16 %v1080, %v1079
      %v1087 = vpack.c.b16 %v1082, %v1081
      %v1088 = vpack.c.b16 %v1084, %v1083
      %v1091 = vunpack.c.l.b16 %v1075
      %v1092 = vunpack.c.l.b16 %v1076
      %v1093 = vpack.c.b16 %v1092, %v1091
      %v1096 = vsel %vm340, %v1085, 0
      %v1099 = vsel %vm340, %v1086, 0
      %v1102 = vsel %vm340, %v1087, 0
      %v1105 = vsel %vm340, %v1088, 0
      %1107 = vmatprep.subr.bf16.mxu0 0
      %1108 = vmatpush1.bf16.msra.mxu0 %v1093
      %1109 = vmatprep.subr.bf16.mxu0 0
      %1110 = vmatpush1.bf16.msra.mxu0 0
      %1111 = vmatprep.subr.bf16.mxu0 0
      %1112 = vmatpush1.bf16.msra.mxu0 0
      %1113 = vmatprep.subr.bf16.mxu0 0
      %1114 = vmatpush1.bf16.msra.mxu0 0
      %1115 = vmatprep.subr.bf16.mxu0 0
      %1116 = vmatpush1.bf16.msra.mxu0 0
      %1117 = vmatprep.subr.bf16.mxu0 0
      %1118 = vmatpush1.bf16.msra.mxu0 0
      %1119 = vmatprep.subr.bf16.mxu0 0
      %1120 = vmatpush1.bf16.msra.mxu0 0
      %1121 = vmatprep.subr.bf16.mxu0 0
      %1122 = vmatpush1.bf16.msra.mxu0 0
      %1123 = vmatprep.subr.bf16.mxu0 0
      %1124 = vmatpush1.bf16.msra.mxu0 0
      %1125 = vmatprep.subr.bf16.mxu0 0
      %1126 = vmatpush1.bf16.msra.mxu0 0
      %1127 = vmatprep.subr.bf16.mxu0 0
      %1128 = vmatpush1.bf16.msra.mxu0 0
      %1129 = vmatprep.subr.bf16.mxu0 0
      %1130 = vmatpush1.bf16.msra.mxu0 0
      %1131 = vmatprep.subr.bf16.mxu0 0
      %1132 = vmatpush1.bf16.msra.mxu0 0
      %1133 = vmatprep.subr.bf16.mxu0 0
      %1134 = vmatpush1.bf16.msra.mxu0 0
      %1135 = vmatprep.subr.bf16.mxu0 0
      %1136 = vmatpush1.bf16.msra.mxu0 0
      %1137 = vmatprep.subr.bf16.mxu0 0
      %1138 = vmatpush1.bf16.msra.mxu0 0
      %1139 = vmatprep.mubr.bf16.mxu0 0
      %1140 = vmatmul.mubr.bf16.gmra.mrb[0].mxu0 %v1096
      %v1141 = vpop.f32.mrb[0].mxu0
      %v1142 = vadd.f32 0.0, %v1141
      %v1143 = vpop.f32.mrb[0].mxu0
      %v1144 = vpop.f32.mrb[0].mxu0
      %v1145 = vadd.f32 0.0, %v1144
      %v1146 = vpop.f32.mrb[0].mxu0
      %1147 = vmatprep.mubr.bf16.mxu0 0
      %1148 = vmatmul.mubr.bf16.gmra.mrb[0].mxu0 %v1099
      %v1149 = vpop.f32.mrb[0].mxu0
      %v1150 = vadd.f32 0.0, %v1149
      %v1151 = vpop.f32.mrb[0].mxu0
      %v1152 = vpop.f32.mrb[0].mxu0
      %v1153 = vadd.f32 0.0, %v1152
      %v1154 = vpop.f32.mrb[0].mxu0
      %1155 = vmatprep.mubr.bf16.mxu0 0
      %1156 = vmatmul.mubr.bf16.gmra.mrb[0].mxu0 %v1102
      %v1157 = vpop.f32.mrb[0].mxu0
      %v1158 = vadd.f32 0.0, %v1157
      %v1159 = vpop.f32.mrb[0].mxu0
      %v1160 = vpop.f32.mrb[0].mxu0
      %v1161 = vadd.f32 0.0, %v1160
      %v1162 = vpop.f32.mrb[0].mxu0
      %1163 = vmatprep.mubr.bf16.mxu0 0
      %1164 = vmatmul.mubr.bf16.gmra.mrb[0].mxu0 %v1105
      %v1165 = vpop.f32.mrb[0].mxu0
      %v1166 = vadd.f32 0.0, %v1165
      %v1167 = vpop.f32.mrb[0].mxu0
      %v1168 = vpop.f32.mrb[0].mxu0
      %v1169 = vadd.f32 0.0, %v1168
      %v1170 = vpop.f32.mrb[0].mxu0
      %1171 = vdwg.mxu0
      %v1172 = vadd.f32 %v985, %v1142
      %v1173 = vadd.f32 %v988, %v1145
      %v1174 = vadd.f32 %v993, %v1150
      %v1175 = vadd.f32 %v996, %v1153
      %v1176 = vadd.f32 %v1001, %v1158
      %v1177 = vadd.f32 %v1004, %v1161
      %v1178 = vadd.f32 %v1009, %v1166
      %v1179 = vadd.f32 %v1012, %v1169
      %v1180 = vld [vmem:[%s630] sm:$0xf]
      %v1181 = vld [vmem:[%s630 + $0x8] sm:$0xf]
      %v1182 = vld [vmem:[%s630 + $0x10] sm:$0xf]
      %v1183 = vld [vmem:[%s630 + $0x18] sm:$0xf]
      %v1184 = vld [vmem:[%s630 + $0x20] sm:$0xf]
      %v1185 = vld [vmem:[%s630 + $0x28] sm:$0xf]
      %v1186 = vld [vmem:[%s630 + $0x30] sm:$0xf]
      %v1187 = vld [vmem:[%s630 + $0x38] sm:$0xf]
      %s1188 = scalar_lea.vmem %s4, 24
      %v1189 = vld [vmem:[%s1188] sm:$0xf]
      %v1190 = vld [vmem:[%s1188 + $0x4] sm:$0xf]
      %v1199 = vunpack.c.l.b16 %v1180
      %v1200 = vunpack.c.l.b16 %v1181
      %v1201 = vunpack.c.l.b16 %v1182
      %v1202 = vunpack.c.l.b16 %v1183
      %v1203 = vunpack.c.l.b16 %v1184
      %v1204 = vunpack.c.l.b16 %v1185
      %v1205 = vunpack.c.l.b16 %v1186
      %v1206 = vunpack.c.l.b16 %v1187
      %v1207 = vpack.c.b16 %v1200, %v1199
      %v1208 = vpack.c.b16 %v1202, %v1201
      %v1209 = vpack.c.b16 %v1204, %v1203
      %v1210 = vpack.c.b16 %v1206, %v1205
      %v1213 = vunpack.c.l.b16 %v1189
      %v1214 = vunpack.c.l.b16 %v1190
      %v1215 = vpack.c.b16 %v1214, %v1213
      %v1218 = vsel %vm340, %v1207, 0
      %v1221 = vsel %vm340, %v1208, 0
      %v1224 = vsel %vm340, %v1209, 0
      %v1227 = vsel %vm340, %v1210, 0
      %1229 = vmatprep.subr.bf16.mxu0 0
      %1230 = vmatpush1.bf16.msra.mxu0 %v1215
      %1231 = vmatprep.subr.bf16.mxu0 0
      %1232 = vmatpush1.bf16.msra.mxu0 0
      %1233 = vmatprep.subr.bf16.mxu0 0
      %1234 = vmatpush1.bf16.msra.mxu0 0
      %1235 = vmatprep.subr.bf16.mxu0 0
      %1236 = vmatpush1.bf16.msra.mxu0 0
      %1237 = vmatprep.subr.bf16.mxu0 0
      %1238 = vmatpush1.bf16.msra.mxu0 0
      %1239 = vmatprep.subr.bf16.mxu0 0
      %1240 = vmatpush1.bf16.msra.mxu0 0
      %1241 = vmatprep.subr.bf16.mxu0 0
      %1242 = vmatpush1.bf16.msra.mxu0 0
      %1243 = vmatprep.subr.bf16.mxu0 0
      %1244 = vmatpush1.bf16.msra.mxu0 0
      %1245 = vmatprep.subr.bf16.mxu0 0
      %1246 = vmatpush1.bf16.msra.mxu0 0
      %1247 = vmatprep.subr.bf16.mxu0 0
      %1248 = vmatpush1.bf16.msra.mxu0 0
      %1249 = vmatprep.subr.bf16.mxu0 0
      %1250 = vmatpush1.bf16.msra.mxu0 0
      %1251 = vmatprep.subr.bf16.mxu0 0
      %1252 = vmatpush1.bf16.msra.mxu0 0
      %1253 = vmatprep.subr.bf16.mxu0 0
      %1254 = vmatpush1.bf16.msra.mxu0 0
      %1255 = vmatprep.subr.bf16.mxu0 0
      %1256 = vmatpush1.bf16.msra.mxu0 0
      %1257 = vmatprep.subr.bf16.mxu0 0
      %1258 = vmatpush1.bf16.msra.mxu0 0
      %1259 = vmatprep.subr.bf16.mxu0 0
      %1260 = vmatpush1.bf16.msra.mxu0 0
      %1261 = vmatprep.mubr.bf16.mxu0 0
      %1262 = vmatmul.mubr.bf16.gmra.mrb[0].mxu0 %v1218
      %v1263 = vpop.f32.mrb[0].mxu0
      %v1264 = vadd.f32 0.0, %v1263
      %v1265 = vpop.f32.mrb[0].mxu0
      %v1266 = vpop.f32.mrb[0].mxu0
      %v1267 = vadd.f32 0.0, %v1266
      %v1268 = vpop.f32.mrb[0].mxu0
      %1269 = vmatprep.mubr.bf16.mxu0 0
      %1270 = vmatmul.mubr.bf16.gmra.mrb[0].mxu0 %v1221
      %v1271 = vpop.f32.mrb[0].mxu0
      %v1272 = vadd.f32 0.0, %v1271
      %v1273 = vpop.f32.mrb[0].mxu0
      %v1274 = vpop.f32.mrb[0].mxu0
      %v1275 = vadd.f32 0.0, %v1274
      %v1276 = vpop.f32.mrb[0].mxu0
      %1277 = vmatprep.mubr.bf16.mxu0 0
      %1278 = vmatmul.mubr.bf16.gmra.mrb[0].mxu0 %v1224
      %v1279 = vpop.f32.mrb[0].mxu0
      %v1280 = vadd.f32 0.0, %v1279
      %v1281 = vpop.f32.mrb[0].mxu0
      %v1282 = vpop.f32.mrb[0].mxu0
      %v1283 = vadd.f32 0.0, %v1282
      %v1284 = vpop.f32.mrb[0].mxu0
      %1285 = vmatprep.mubr.bf16.mxu0 0
      %1286 = vmatmul.mubr.bf16.gmra.mrb[0].mxu0 %v1227
      %v1287 = vpop.f32.mrb[0].mxu0
      %v1288 = vadd.f32 0.0, %v1287
      %v1289 = vpop.f32.mrb[0].mxu0
      %v1290 = vpop.f32.mrb[0].mxu0
      %v1291 = vadd.f32 0.0, %v1290
      %v1292 = vpop.f32.mrb[0].mxu0
      %1293 = vdwg.mxu0
      %v1294 = vadd.f32 %v1172, %v1264
      %v1295 = vadd.f32 %v1173, %v1267
      %v1296 = vadd.f32 %v1174, %v1272
      %v1297 = vadd.f32 %v1175, %v1275
      %v1298 = vadd.f32 %v1176, %v1280
      %v1299 = vadd.f32 %v1177, %v1283
      %v1300 = vadd.f32 %v1178, %v1288
      %v1301 = vadd.f32 %v1179, %v1291
      %v1302 = vld [vmem:[%s630] sm:$0xf]
      %v1303 = vld [vmem:[%s630 + $0x4] sm:$0x1]
      %v1304 = vld [vmem:[%s630 + $0x8] sm:$0xf]
      %v1305 = vld [vmem:[%s630 + $0xc] sm:$0x1]
      %v1306 = vld [vmem:[%s630 + $0x10] sm:$0xf]
      %v1307 = vld [vmem:[%s630 + $0x14] sm:$0x1]
      %v1308 = vld [vmem:[%s630 + $0x18] sm:$0xf]
      %v1309 = vld [vmem:[%s630 + $0x1c] sm:$0x1]
      %v1310 = vld [vmem:[%s630 + $0x20] sm:$0xf]
      %v1311 = vld [vmem:[%s630 + $0x24] sm:$0x1]
      %v1312 = vld [vmem:[%s630 + $0x28] sm:$0xf]
      %v1313 = vld [vmem:[%s630 + $0x2c] sm:$0x1]
      %v1314 = vld [vmem:[%s630 + $0x30] sm:$0xf]
      %v1315 = vld [vmem:[%s630 + $0x34] sm:$0x1]
      %v1316 = vld [vmem:[%s630 + $0x38] sm:$0xf]
      %v1317 = vld [vmem:[%s630 + $0x3c] sm:$0x1]
      %v1319 = vshrl.u32 %v1302, 16
      %v1321 = vrot.slane %v1319, 4
      %v1322 = vshll.u32 %v1302, 16
      %v1324 = vrot.slane %v1322, 5
      %v1325 = vor.u32 %v1321, %v1324
      %v1326 = vrot.slane %v1325, 4
      %v1328 = vshll.u32 %v1303, 16
      %v1330 = vrot.slane %v1328, 5
      %v1331 = vsel %vm701, %v1326, %v1330
      %v1333 = vshrl.u32 %v1304, 16
      %v1335 = vrot.slane %v1333, 4
      %v1336 = vshll.u32 %v1304, 16
      %v1338 = vrot.slane %v1336, 5
      %v1339 = vor.u32 %v1335, %v1338
      %v1340 = vrot.slane %v1339, 4
      %v1342 = vshll.u32 %v1305, 16
      %v1344 = vrot.slane %v1342, 5
      %v1345 = vsel %vm701, %v1340, %v1344
      %v1347 = vshrl.u32 %v1306, 16
      %v1349 = vrot.slane %v1347, 4
      %v1350 = vshll.u32 %v1306, 16
      %v1352 = vrot.slane %v1350, 5
      %v1353 = vor.u32 %v1349, %v1352
      %v1354 = vrot.slane %v1353, 4
      %v1356 = vshll.u32 %v1307, 16
      %v1358 = vrot.slane %v1356, 5
      %v1359 = vsel %vm701, %v1354, %v1358
      %v1361 = vshrl.u32 %v1308, 16
      %v1363 = vrot.slane %v1361, 4
      %v1364 = vshll.u32 %v1308, 16
      %v1366 = vrot.slane %v1364, 5
      %v1367 = vor.u32 %v1363, %v1366
      %v1368 = vrot.slane %v1367, 4
      %v1370 = vshll.u32 %v1309, 16
      %v1372 = vrot.slane %v1370, 5
      %v1373 = vsel %vm701, %v1368, %v1372
      %v1375 = vshrl.u32 %v1310, 16
      %v1377 = vrot.slane %v1375, 4
      %v1378 = vshll.u32 %v1310, 16
      %v1380 = vrot.slane %v1378, 5
      %v1381 = vor.u32 %v1377, %v1380
      %v1382 = vrot.slane %v1381, 4
      %v1384 = vshll.u32 %v1311, 16
      %v1386 = vrot.slane %v1384, 5
      %v1387 = vsel %vm701, %v1382, %v1386
      %v1389 = vshrl.u32 %v1312, 16
      %v1391 = vrot.slane %v1389, 4
      %v1392 = vshll.u32 %v1312, 16
      %v1394 = vrot.slane %v1392, 5
      %v1395 = vor.u32 %v1391, %v1394
      %v1396 = vrot.slane %v1395, 4
      %v1398 = vshll.u32 %v1313, 16
      %v1400 = vrot.slane %v1398, 5
      %v1401 = vsel %vm701, %v1396, %v1400
      %v1403 = vshrl.u32 %v1314, 16
      %v1405 = vrot.slane %v1403, 4
      %v1406 = vshll.u32 %v1314, 16
      %v1408 = vrot.slane %v1406, 5
      %v1409 = vor.u32 %v1405, %v1408
      %v1410 = vrot.slane %v1409, 4
      %v1412 = vshll.u32 %v1315, 16
      %v1414 = vrot.slane %v1412, 5
      %v1415 = vsel %vm701, %v1410, %v1414
      %v1417 = vshrl.u32 %v1316, 16
      %v1419 = vrot.slane %v1417, 4
      %v1420 = vshll.u32 %v1316, 16
      %v1422 = vrot.slane %v1420, 5
      %v1423 = vor.u32 %v1419, %v1422
      %v1424 = vrot.slane %v1423, 4
      %v1426 = vshll.u32 %v1317, 16
      %v1428 = vrot.slane %v1426, 5
      %v1429 = vsel %vm701, %v1424, %v1428
      %s1430 = scalar_lea.vmem %s4, 32
      %v1431 = vld [vmem:[%s1430] sm:$0xf]
      %v1432 = vld [vmem:[%s1430 + $0x4] sm:$0xf]
      %v1433 = vunpack.c.l.b16 %v1331
      %v1434 = vunpack.c.l.b16 %v1345
      %v1435 = vunpack.c.l.b16 %v1359
      %v1436 = vunpack.c.l.b16 %v1373
      %v1437 = vunpack.c.l.b16 %v1387
      %v1438 = vunpack.c.l.b16 %v1401
      %v1439 = vunpack.c.l.b16 %v1415
      %v1440 = vunpack.c.l.b16 %v1429
      %v1441 = vpack.c.b16 %v1434, %v1433
      %v1442 = vpack.c.b16 %v1436, %v1435
      %v1443 = vpack.c.b16 %v1438, %v1437
      %v1444 = vpack.c.b16 %v1440, %v1439
      %v1447 = vunpack.c.l.b16 %v1431
      %v1448 = vunpack.c.l.b16 %v1432
      %v1449 = vpack.c.b16 %v1448, %v1447
      %v1452 = vsel %vm340, %v1441, 0
      %v1455 = vsel %vm340, %v1442, 0
      %v1458 = vsel %vm340, %v1443, 0
      %v1461 = vsel %vm340, %v1444, 0
      %1463 = vmatprep.subr.bf16.mxu0 0
      %1464 = vmatpush1.bf16.msra.mxu0 %v1449
      %1465 = vmatprep.subr.bf16.mxu0 0
      %1466 = vmatpush1.bf16.msra.mxu0 0
      %1467 = vmatprep.subr.bf16.mxu0 0
      %1468 = vmatpush1.bf16.msra.mxu0 0
      %1469 = vmatprep.subr.bf16.mxu0 0
      %1470 = vmatpush1.bf16.msra.mxu0 0
      %1471 = vmatprep.subr.bf16.mxu0 0
      %1472 = vmatpush1.bf16.msra.mxu0 0
      %1473 = vmatprep.subr.bf16.mxu0 0
      %1474 = vmatpush1.bf16.msra.mxu0 0
      %1475 = vmatprep.subr.bf16.mxu0 0
      %1476 = vmatpush1.bf16.msra.mxu0 0
      %1477 = vmatprep.subr.bf16.mxu0 0
      %1478 = vmatpush1.bf16.msra.mxu0 0
      %1479 = vmatprep.subr.bf16.mxu0 0
      %1480 = vmatpush1.bf16.msra.mxu0 0
      %1481 = vmatprep.subr.bf16.mxu0 0
      %1482 = vmatpush1.bf16.msra.mxu0 0
      %1483 = vmatprep.subr.bf16.mxu0 0
      %1484 = vmatpush1.bf16.msra.mxu0 0
      %1485 = vmatprep.subr.bf16.mxu0 0
      %1486 = vmatpush1.bf16.msra.mxu0 0
      %1487 = vmatprep.subr.bf16.mxu0 0
      %1488 = vmatpush1.bf16.msra.mxu0 0
      %1489 = vmatprep.subr.bf16.mxu0 0
      %1490 = vmatpush1.bf16.msra.mxu0 0
      %1491 = vmatprep.subr.bf16.mxu0 0
      %1492 = vmatpush1.bf16.msra.mxu0 0
      %1493 = vmatprep.subr.bf16.mxu0 0
      %1494 = vmatpush1.bf16.msra.mxu0 0
      %1495 = vmatprep.mubr.bf16.mxu0 0
      %1496 = vmatmul.mubr.bf16.gmra.mrb[0].mxu0 %v1452
      %v1497 = vpop.f32.mrb[0].mxu0
      %v1498 = vadd.f32 0.0, %v1497
      %v1499 = vpop.f32.mrb[0].mxu0
      %v1500 = vpop.f32.mrb[0].mxu0
      %v1501 = vadd.f32 0.0, %v1500
      %v1502 = vpop.f32.mrb[0].mxu0
      %1503 = vmatprep.mubr.bf16.mxu0 0
      %1504 = vmatmul.mubr.bf16.gmra.mrb[0].mxu0 %v1455
      %v1505 = vpop.f32.mrb[0].mxu0
      %v1506 = vadd.f32 0.0, %v1505
      %v1507 = vpop.f32.mrb[0].mxu0
      %v1508 = vpop.f32.mrb[0].mxu0
      %v1509 = vadd.f32 0.0, %v1508
      %v1510 = vpop.f32.mrb[0].mxu0
      %1511 = vmatprep.mubr.bf16.mxu0 0
      %1512 = vmatmul.mubr.bf16.gmra.mrb[0].mxu0 %v1458
      %v1513 = vpop.f32.mrb[0].mxu0
      %v1514 = vadd.f32 0.0, %v1513
      %v1515 = vpop.f32.mrb[0].mxu0
      %v1516 = vpop.f32.mrb[0].mxu0
      %v1517 = vadd.f32 0.0, %v1516
      %v1518 = vpop.f32.mrb[0].mxu0
      %1519 = vmatprep.mubr.bf16.mxu0 0
      %1520 = vmatmul.mubr.bf16.gmra.mrb[0].mxu0 %v1461
      %v1521 = vpop.f32.mrb[0].mxu0
      %v1522 = vadd.f32 0.0, %v1521
      %v1523 = vpop.f32.mrb[0].mxu0
      %v1524 = vpop.f32.mrb[0].mxu0
      %v1525 = vadd.f32 0.0, %v1524
      %v1526 = vpop.f32.mrb[0].mxu0
      %1527 = vdwg.mxu0
      %v1528 = vadd.f32 %v1294, %v1498
      %v1529 = vadd.f32 %v1295, %v1501
      %v1530 = vadd.f32 %v1296, %v1506
      %v1531 = vadd.f32 %v1297, %v1509
      %v1532 = vadd.f32 %v1298, %v1514
      %v1533 = vadd.f32 %v1299, %v1517
      %v1534 = vadd.f32 %v1300, %v1522
      %v1535 = vadd.f32 %v1301, %v1525
      %v1536 = vld [vmem:[%s630] sm:$0xe]
      %v1537 = vld [vmem:[%s630 + $0x8] sm:$0xe]
      %v1538 = vld [vmem:[%s630 + $0x10] sm:$0xe]
      %v1539 = vld [vmem:[%s630 + $0x18] sm:$0xe]
      %v1540 = vld [vmem:[%s630 + $0x20] sm:$0xe]
      %v1541 = vld [vmem:[%s630 + $0x28] sm:$0xe]
      %v1542 = vld [vmem:[%s630 + $0x30] sm:$0xe]
      %v1543 = vld [vmem:[%s630 + $0x38] sm:$0xe]
      %v1560 = vrot.slane %v1536, 5
      %v1561 = vrot.slane %v1560, 4
      %v1562 = vrot.slane %v1303, 5
      %v1563 = vsel %vm1041, %v1561, %v1562
      %v1564 = vrot.slane %v1537, 5
      %v1565 = vrot.slane %v1564, 4
      %v1566 = vrot.slane %v1305, 5
      %v1567 = vsel %vm1041, %v1565, %v1566
      %v1568 = vrot.slane %v1538, 5
      %v1569 = vrot.slane %v1568, 4
      %v1570 = vrot.slane %v1307, 5
      %v1571 = vsel %vm1041, %v1569, %v1570
      %v1572 = vrot.slane %v1539, 5
      %v1573 = vrot.slane %v1572, 4
      %v1574 = vrot.slane %v1309, 5
      %v1575 = vsel %vm1041, %v1573, %v1574
      %v1576 = vrot.slane %v1540, 5
      %v1577 = vrot.slane %v1576, 4
      %v1578 = vrot.slane %v1311, 5
      %v1579 = vsel %vm1041, %v1577, %v1578
      %v1580 = vrot.slane %v1541, 5
      %v1581 = vrot.slane %v1580, 4
      %v1582 = vrot.slane %v1313, 5
      %v1583 = vsel %vm1041, %v1581, %v1582
      %v1584 = vrot.slane %v1542, 5
      %v1585 = vrot.slane %v1584, 4
      %v1586 = vrot.slane %v1315, 5
      %v1587 = vsel %vm1041, %v1585, %v1586
      %v1588 = vrot.slane %v1543, 5
      %v1589 = vrot.slane %v1588, 4
      %v1590 = vrot.slane %v1317, 5
      %v1591 = vsel %vm1041, %v1589, %v1590
      %s1592 = scalar_lea.vmem %s4, 40
      %v1593 = vld [vmem:[%s1592] sm:$0xf]
      %v1594 = vld [vmem:[%s1592 + $0x4] sm:$0xf]
      %v1595 = vunpack.c.l.b16 %v1563
      %v1596 = vunpack.c.l.b16 %v1567
      %v1597 = vunpack.c.l.b16 %v1571
      %v1598 = vunpack.c.l.b16 %v1575
      %v1599 = vunpack.c.l.b16 %v1579
      %v1600 = vunpack.c.l.b16 %v1583
      %v1601 = vunpack.c.l.b16 %v1587
      %v1602 = vunpack.c.l.b16 %v1591
      %v1603 = vpack.c.b16 %v1596, %v1595
      %v1604 = vpack.c.b16 %v1598, %v1597
      %v1605 = vpack.c.b16 %v1600, %v1599
      %v1606 = vpack.c.b16 %v1602, %v1601
      %v1609 = vunpack.c.l.b16 %v1593
      %v1610 = vunpack.c.l.b16 %v1594
      %v1611 = vpack.c.b16 %v1610, %v1609
      %v1614 = vsel %vm340, %v1603, 0
      %v1617 = vsel %vm340, %v1604, 0
      %v1620 = vsel %vm340, %v1605, 0
      %v1623 = vsel %vm340, %v1606, 0
      %1625 = vmatprep.subr.bf16.mxu0 0
      %1626 = vmatpush1.bf16.msra.mxu0 %v1611
      %1627 = vmatprep.subr.bf16.mxu0 0
      %1628 = vmatpush1.bf16.msra.mxu0 0
      %1629 = vmatprep.subr.bf16.mxu0 0
      %1630 = vmatpush1.bf16.msra.mxu0 0
      %1631 = vmatprep.subr.bf16.mxu0 0
      %1632 = vmatpush1.bf16.msra.mxu0 0
      %1633 = vmatprep.subr.bf16.mxu0 0
      %1634 = vmatpush1.bf16.msra.mxu0 0
      %1635 = vmatprep.subr.bf16.mxu0 0
      %1636 = vmatpush1.bf16.msra.mxu0 0
      %1637 = vmatprep.subr.bf16.mxu0 0
      %1638 = vmatpush1.bf16.msra.mxu0 0
      %1639 = vmatprep.subr.bf16.mxu0 0
      %1640 = vmatpush1.bf16.msra.mxu0 0
      %1641 = vmatprep.subr.bf16.mxu0 0
      %1642 = vmatpush1.bf16.msra.mxu0 0
      %1643 = vmatprep.subr.bf16.mxu0 0
      %1644 = vmatpush1.bf16.msra.mxu0 0
      %1645 = vmatprep.subr.bf16.mxu0 0
      %1646 = vmatpush1.bf16.msra.mxu0 0
      %1647 = vmatprep.subr.bf16.mxu0 0
      %1648 = vmatpush1.bf16.msra.mxu0 0
      %1649 = vmatprep.subr.bf16.mxu0 0
      %1650 = vmatpush1.bf16.msra.mxu0 0
      %1651 = vmatprep.subr.bf16.mxu0 0
      %1652 = vmatpush1.bf16.msra.mxu0 0
      %1653 = vmatprep.subr.bf16.mxu0 0
      %1654 = vmatpush1.bf16.msra.mxu0 0
      %1655 = vmatprep.subr.bf16.mxu0 0
      %1656 = vmatpush1.bf16.msra.mxu0 0
      %1657 = vmatprep.mubr.bf16.mxu0 0
      %1658 = vmatmul.mubr.bf16.gmra.mrb[0].mxu0 %v1614
      %v1659 = vpop.f32.mrb[0].mxu0
      %v1660 = vadd.f32 0.0, %v1659
      %v1661 = vpop.f32.mrb[0].mxu0
      %v1662 = vpop.f32.mrb[0].mxu0
      %v1663 = vadd.f32 0.0, %v1662
      %v1664 = vpop.f32.mrb[0].mxu0
      %1665 = vmatprep.mubr.bf16.mxu0 0
      %1666 = vmatmul.mubr.bf16.gmra.mrb[0].mxu0 %v1617
      %v1667 = vpop.f32.mrb[0].mxu0
      %v1668 = vadd.f32 0.0, %v1667
      %v1669 = vpop.f32.mrb[0].mxu0
      %v1670 = vpop.f32.mrb[0].mxu0
      %v1671 = vadd.f32 0.0, %v1670
      %v1672 = vpop.f32.mrb[0].mxu0
      %1673 = vmatprep.mubr.bf16.mxu0 0
      %1674 = vmatmul.mubr.bf16.gmra.mrb[0].mxu0 %v1620
      %v1675 = vpop.f32.mrb[0].mxu0
      %v1676 = vadd.f32 0.0, %v1675
      %v1677 = vpop.f32.mrb[0].mxu0
      %v1678 = vpop.f32.mrb[0].mxu0
      %v1679 = vadd.f32 0.0, %v1678
      %v1680 = vpop.f32.mrb[0].mxu0
      %1681 = vmatprep.mubr.bf16.mxu0 0
      %1682 = vmatmul.mubr.bf16.gmra.mrb[0].mxu0 %v1623
      %v1683 = vpop.f32.mrb[0].mxu0
      %v1684 = vadd.f32 0.0, %v1683
      %v1685 = vpop.f32.mrb[0].mxu0
      %v1686 = vpop.f32.mrb[0].mxu0
      %v1687 = vadd.f32 0.0, %v1686
      %v1688 = vpop.f32.mrb[0].mxu0
      %1689 = vdwg.mxu0
      %v1690 = vadd.f32 %v1528, %v1660
      %v1691 = vadd.f32 %v1529, %v1663
      %v1692 = vadd.f32 %v1530, %v1668
      %v1693 = vadd.f32 %v1531, %v1671
      %v1694 = vadd.f32 %v1532, %v1676
      %v1695 = vadd.f32 %v1533, %v1679
      %v1696 = vadd.f32 %v1534, %v1684
      %v1697 = vadd.f32 %v1535, %v1687
      %s1698 = scalar_lea.vmem [#allocation2], 16
      %v1699 = vld [vmem:[%s1698] sm:$0xf]
      %v1700 = vld [vmem:[%s1698 + $0x8] sm:$0xf]
      %v1701 = vld [vmem:[%s1698 + $0x10] sm:$0xf]
      %v1702 = vld [vmem:[%s1698 + $0x18] sm:$0xf]
      %v1703 = vld [vmem:[%s1698 + $0x20] sm:$0xf]
      %v1704 = vld [vmem:[%s1698 + $0x28] sm:$0xf]
      %v1705 = vld [vmem:[%s1698 + $0x30] sm:$0xf]
      %v1706 = vld [vmem:[%s1698 + $0x38] sm:$0xf]
      %s1707 = scalar_lea.vmem %s4, 48
      %v1708 = vld [vmem:[%s1707] sm:$0xf]
      %v1709 = vld [vmem:[%s1707 + $0x4] sm:$0xf]
      %v1718 = vunpack.c.l.b16 %v1699
      %v1719 = vunpack.c.l.b16 %v1700
      %v1720 = vunpack.c.l.b16 %v1701
      %v1721 = vunpack.c.l.b16 %v1702
      %v1722 = vunpack.c.l.b16 %v1703
      %v1723 = vunpack.c.l.b16 %v1704
      %v1724 = vunpack.c.l.b16 %v1705
      %v1725 = vunpack.c.l.b16 %v1706
      %v1726 = vpack.c.b16 %v1719, %v1718
      %v1727 = vpack.c.b16 %v1721, %v1720
      %v1728 = vpack.c.b16 %v1723, %v1722
      %v1729 = vpack.c.b16 %v1725, %v1724
      %v1732 = vunpack.c.l.b16 %v1708
      %v1733 = vunpack.c.l.b16 %v1709
      %v1734 = vpack.c.b16 %v1733, %v1732
      %v1737 = vsel %vm340, %v1726, 0
      %v1740 = vsel %vm340, %v1727, 0
      %v1743 = vsel %vm340, %v1728, 0
      %v1746 = vsel %vm340, %v1729, 0
      %1748 = vmatprep.subr.bf16.mxu0 0
      %1749 = vmatpush1.bf16.msra.mxu0 %v1734
      %1750 = vmatprep.subr.bf16.mxu0 0
      %1751 = vmatpush1.bf16.msra.mxu0 0
      %1752 = vmatprep.subr.bf16.mxu0 0
      %1753 = vmatpush1.bf16.msra.mxu0 0
      %1754 = vmatprep.subr.bf16.mxu0 0
      %1755 = vmatpush1.bf16.msra.mxu0 0
      %1756 = vmatprep.subr.bf16.mxu0 0
      %1757 = vmatpush1.bf16.msra.mxu0 0
      %1758 = vmatprep.subr.bf16.mxu0 0
      %1759 = vmatpush1.bf16.msra.mxu0 0
      %1760 = vmatprep.subr.bf16.mxu0 0
      %1761 = vmatpush1.bf16.msra.mxu0 0
      %1762 = vmatprep.subr.bf16.mxu0 0
      %1763 = vmatpush1.bf16.msra.mxu0 0
      %1764 = vmatprep.subr.bf16.mxu0 0
      %1765 = vmatpush1.bf16.msra.mxu0 0
      %1766 = vmatprep.subr.bf16.mxu0 0
      %1767 = vmatpush1.bf16.msra.mxu0 0
      %1768 = vmatprep.subr.bf16.mxu0 0
      %1769 = vmatpush1.bf16.msra.mxu0 0
      %1770 = vmatprep.subr.bf16.mxu0 0
      %1771 = vmatpush1.bf16.msra.mxu0 0
      %1772 = vmatprep.subr.bf16.mxu0 0
      %1773 = vmatpush1.bf16.msra.mxu0 0
      %1774 = vmatprep.subr.bf16.mxu0 0
      %1775 = vmatpush1.bf16.msra.mxu0 0
      %1776 = vmatprep.subr.bf16.mxu0 0
      %1777 = vmatpush1.bf16.msra.mxu0 0
      %1778 = vmatprep.subr.bf16.mxu0 0
      %1779 = vmatpush1.bf16.msra.mxu0 0
      %1780 = vmatprep.mubr.bf16.mxu0 0
      %1781 = vmatmul.mubr.bf16.gmra.mrb[0].mxu0 %v1737
      %v1782 = vpop.f32.mrb[0].mxu0
      %v1783 = vadd.f32 0.0, %v1782
      %v1784 = vpop.f32.mrb[0].mxu0
      %v1785 = vpop.f32.mrb[0].mxu0
      %v1786 = vadd.f32 0.0, %v1785
      %v1787 = vpop.f32.mrb[0].mxu0
      %1788 = vmatprep.mubr.bf16.mxu0 0
      %1789 = vmatmul.mubr.bf16.gmra.mrb[0].mxu0 %v1740
      %v1790 = vpop.f32.mrb[0].mxu0
      %v1791 = vadd.f32 0.0, %v1790
      %v1792 = vpop.f32.mrb[0].mxu0
      %v1793 = vpop.f32.mrb[0].mxu0
      %v1794 = vadd.f32 0.0, %v1793
      %v1795 = vpop.f32.mrb[0].mxu0
      %1796 = vmatprep.mubr.bf16.mxu0 0
      %1797 = vmatmul.mubr.bf16.gmra.mrb[0].mxu0 %v1743
      %v1798 = vpop.f32.mrb[0].mxu0
      %v1799 = vadd.f32 0.0, %v1798
      %v1800 = vpop.f32.mrb[0].mxu0
      %v1801 = vpop.f32.mrb[0].mxu0
      %v1802 = vadd.f32 0.0, %v1801
      %v1803 = vpop.f32.mrb[0].mxu0
      %1804 = vmatprep.mubr.bf16.mxu0 0
      %1805 = vmatmul.mubr.bf16.gmra.mrb[0].mxu0 %v1746
      %v1806 = vpop.f32.mrb[0].mxu0
      %v1807 = vadd.f32 0.0, %v1806
      %v1808 = vpop.f32.mrb[0].mxu0
      %v1809 = vpop.f32.mrb[0].mxu0
      %v1810 = vadd.f32 0.0, %v1809
      %v1811 = vpop.f32.mrb[0].mxu0
      %1812 = vdwg.mxu0
      %v1813 = vadd.f32 %v1690, %v1783
      %v1814 = vadd.f32 %v1691, %v1786
      %v1815 = vadd.f32 %v1692, %v1791
      %v1816 = vadd.f32 %v1693, %v1794
      %v1817 = vadd.f32 %v1694, %v1799
      %v1818 = vadd.f32 %v1695, %v1802
      %v1819 = vadd.f32 %v1696, %v1807
      %v1820 = vadd.f32 %v1697, %v1810
      %v1821 = vld [vmem:[%s1698] sm:$0xf]
      %v1822 = vld [vmem:[%s1698 + $0x4] sm:$0x1]
      %v1823 = vld [vmem:[%s1698 + $0x8] sm:$0xf]
      %v1824 = vld [vmem:[%s1698 + $0xc] sm:$0x1]
      %v1825 = vld [vmem:[%s1698 + $0x10] sm:$0xf]
      %v1826 = vld [vmem:[%s1698 + $0x14] sm:$0x1]
      %v1827 = vld [vmem:[%s1698 + $0x18] sm:$0xf]
      %v1828 = vld [vmem:[%s1698 + $0x1c] sm:$0x1]
      %v1829 = vld [vmem:[%s1698 + $0x20] sm:$0xf]
      %v1830 = vld [vmem:[%s1698 + $0x24] sm:$0x1]
      %v1831 = vld [vmem:[%s1698 + $0x28] sm:$0xf]
      %v1832 = vld [vmem:[%s1698 + $0x2c] sm:$0x1]
      %v1833 = vld [vmem:[%s1698 + $0x30] sm:$0xf]
      %v1834 = vld [vmem:[%s1698 + $0x34] sm:$0x1]
      %v1835 = vld [vmem:[%s1698 + $0x38] sm:$0xf]
      %v1836 = vld [vmem:[%s1698 + $0x3c] sm:$0x1]
      %v1838 = vshrl.u32 %v1821, 16
      %v1840 = vrot.slane %v1838, 4
      %v1841 = vshll.u32 %v1821, 16
      %v1843 = vrot.slane %v1841, 5
      %v1844 = vor.u32 %v1840, %v1843
      %v1845 = vrot.slane %v1844, 4
      %v1847 = vshll.u32 %v1822, 16
      %v1849 = vrot.slane %v1847, 5
      %v1850 = vsel %vm701, %v1845, %v1849
      %v1852 = vshrl.u32 %v1823, 16
      %v1854 = vrot.slane %v1852, 4
      %v1855 = vshll.u32 %v1823, 16
      %v1857 = vrot.slane %v1855, 5
      %v1858 = vor.u32 %v1854, %v1857
      %v1859 = vrot.slane %v1858, 4
      %v1861 = vshll.u32 %v1824, 16
      %v1863 = vrot.slane %v1861, 5
      %v1864 = vsel %vm701, %v1859, %v1863
      %v1866 = vshrl.u32 %v1825, 16
      %v1868 = vrot.slane %v1866, 4
      %v1869 = vshll.u32 %v1825, 16
      %v1871 = vrot.slane %v1869, 5
      %v1872 = vor.u32 %v1868, %v1871
      %v1873 = vrot.slane %v1872, 4
      %v1875 = vshll.u32 %v1826, 16
      %v1877 = vrot.slane %v1875, 5
      %v1878 = vsel %vm701, %v1873, %v1877
      %v1880 = vshrl.u32 %v1827, 16
      %v1882 = vrot.slane %v1880, 4
      %v1883 = vshll.u32 %v1827, 16
      %v1885 = vrot.slane %v1883, 5
      %v1886 = vor.u32 %v1882, %v1885
      %v1887 = vrot.slane %v1886, 4
      %v1889 = vshll.u32 %v1828, 16
      %v1891 = vrot.slane %v1889, 5
      %v1892 = vsel %vm701, %v1887, %v1891
      %v1894 = vshrl.u32 %v1829, 16
      %v1896 = vrot.slane %v1894, 4
      %v1897 = vshll.u32 %v1829, 16
      %v1899 = vrot.slane %v1897, 5
      %v1900 = vor.u32 %v1896, %v1899
      %v1901 = vrot.slane %v1900, 4
      %v1903 = vshll.u32 %v1830, 16
      %v1905 = vrot.slane %v1903, 5
      %v1906 = vsel %vm701, %v1901, %v1905
      %v1908 = vshrl.u32 %v1831, 16
      %v1910 = vrot.slane %v1908, 4
      %v1911 = vshll.u32 %v1831, 16
      %v1913 = vrot.slane %v1911, 5
      %v1914 = vor.u32 %v1910, %v1913
      %v1915 = vrot.slane %v1914, 4
      %v1917 = vshll.u32 %v1832, 16
      %v1919 = vrot.slane %v1917, 5
      %v1920 = vsel %vm701, %v1915, %v1919
      %v1922 = vshrl.u32 %v1833, 16
      %v1924 = vrot.slane %v1922, 4
      %v1925 = vshll.u32 %v1833, 16
      %v1927 = vrot.slane %v1925, 5
      %v1928 = vor.u32 %v1924, %v1927
      %v1929 = vrot.slane %v1928, 4
      %v1931 = vshll.u32 %v1834, 16
      %v1933 = vrot.slane %v1931, 5
      %v1934 = vsel %vm701, %v1929, %v1933
      %v1936 = vshrl.u32 %v1835, 16
      %v1938 = vrot.slane %v1936, 4
      %v1939 = vshll.u32 %v1835, 16
      %v1941 = vrot.slane %v1939, 5
      %v1942 = vor.u32 %v1938, %v1941
      %v1943 = vrot.slane %v1942, 4
      %v1945 = vshll.u32 %v1836, 16
      %v1947 = vrot.slane %v1945, 5
      %v1948 = vsel %vm701, %v1943, %v1947
      %s1949 = scalar_lea.vmem %s4, 56
      %v1950 = vld [vmem:[%s1949] sm:$0xf]
      %v1951 = vld [vmem:[%s1949 + $0x4] sm:$0xf]
      %v1952 = vunpack.c.l.b16 %v1850
      %v1953 = vunpack.c.l.b16 %v1864
      %v1954 = vunpack.c.l.b16 %v1878
      %v1955 = vunpack.c.l.b16 %v1892
      %v1956 = vunpack.c.l.b16 %v1906
      %v1957 = vunpack.c.l.b16 %v1920
      %v1958 = vunpack.c.l.b16 %v1934
      %v1959 = vunpack.c.l.b16 %v1948
      %v1960 = vpack.c.b16 %v1953, %v1952
      %v1961 = vpack.c.b16 %v1955, %v1954
      %v1962 = vpack.c.b16 %v1957, %v1956
      %v1963 = vpack.c.b16 %v1959, %v1958
      %v1966 = vunpack.c.l.b16 %v1950
      %v1967 = vunpack.c.l.b16 %v1951
      %v1968 = vpack.c.b16 %v1967, %v1966
      %v1971 = vsel %vm340, %v1960, 0
      %v1974 = vsel %vm340, %v1961, 0
      %v1977 = vsel %vm340, %v1962, 0
      %v1980 = vsel %vm340, %v1963, 0
      %1982 = vmatprep.subr.bf16.mxu0 0
      %1983 = vmatpush1.bf16.msra.mxu0 %v1968
      %1984 = vmatprep.subr.bf16.mxu0 0
      %1985 = vmatpush1.bf16.msra.mxu0 0
      %1986 = vmatprep.subr.bf16.mxu0 0
      %1987 = vmatpush1.bf16.msra.mxu0 0
      %1988 = vmatprep.subr.bf16.mxu0 0
      %1989 = vmatpush1.bf16.msra.mxu0 0
      %1990 = vmatprep.subr.bf16.mxu0 0
      %1991 = vmatpush1.bf16.msra.mxu0 0
      %1992 = vmatprep.subr.bf16.mxu0 0
      %1993 = vmatpush1.bf16.msra.mxu0 0
      %1994 = vmatprep.subr.bf16.mxu0 0
      %1995 = vmatpush1.bf16.msra.mxu0 0
      %1996 = vmatprep.subr.bf16.mxu0 0
      %1997 = vmatpush1.bf16.msra.mxu0 0
      %1998 = vmatprep.subr.bf16.mxu0 0
      %1999 = vmatpush1.bf16.msra.mxu0 0
      %2000 = vmatprep.subr.bf16.mxu0 0
      %2001 = vmatpush1.bf16.msra.mxu0 0
      %2002 = vmatprep.subr.bf16.mxu0 0
      %2003 = vmatpush1.bf16.msra.mxu0 0
      %2004 = vmatprep.subr.bf16.mxu0 0
      %2005 = vmatpush1.bf16.msra.mxu0 0
      %2006 = vmatprep.subr.bf16.mxu0 0
      %2007 = vmatpush1.bf16.msra.mxu0 0
      %2008 = vmatprep.subr.bf16.mxu0 0
      %2009 = vmatpush1.bf16.msra.mxu0 0
      %2010 = vmatprep.subr.bf16.mxu0 0
      %2011 = vmatpush1.bf16.msra.mxu0 0
      %2012 = vmatprep.subr.bf16.mxu0 0
      %2013 = vmatpush1.bf16.msra.mxu0 0
      %2014 = vmatprep.mubr.bf16.mxu0 0
      %2015 = vmatmul.mubr.bf16.gmra.mrb[0].mxu0 %v1971
      %v2016 = vpop.f32.mrb[0].mxu0
      %v2017 = vadd.f32 0.0, %v2016
      %v2018 = vpop.f32.mrb[0].mxu0
      %v2019 = vpop.f32.mrb[0].mxu0
      %v2020 = vadd.f32 0.0, %v2019
      %v2021 = vpop.f32.mrb[0].mxu0
      %2022 = vmatprep.mubr.bf16.mxu0 0
      %2023 = vmatmul.mubr.bf16.gmra.mrb[0].mxu0 %v1974
      %v2024 = vpop.f32.mrb[0].mxu0
      %v2025 = vadd.f32 0.0, %v2024
      %v2026 = vpop.f32.mrb[0].mxu0
      %v2027 = vpop.f32.mrb[0].mxu0
      %v2028 = vadd.f32 0.0, %v2027
      %v2029 = vpop.f32.mrb[0].mxu0
      %2030 = vmatprep.mubr.bf16.mxu0 0
      %2031 = vmatmul.mubr.bf16.gmra.mrb[0].mxu0 %v1977
      %v2032 = vpop.f32.mrb[0].mxu0
      %v2033 = vadd.f32 0.0, %v2032
      %v2034 = vpop.f32.mrb[0].mxu0
      %v2035 = vpop.f32.mrb[0].mxu0
      %v2036 = vadd.f32 0.0, %v2035
      %v2037 = vpop.f32.mrb[0].mxu0
      %2038 = vmatprep.mubr.bf16.mxu0 0
      %2039 = vmatmul.mubr.bf16.gmra.mrb[0].mxu0 %v1980
      %v2040 = vpop.f32.mrb[0].mxu0
      %v2041 = vadd.f32 0.0, %v2040
      %v2042 = vpop.f32.mrb[0].mxu0
      %v2043 = vpop.f32.mrb[0].mxu0
      %v2044 = vadd.f32 0.0, %v2043
      %v2045 = vpop.f32.mrb[0].mxu0
      %2046 = vdwg.mxu0
      %v2047 = vadd.f32 %v1813, %v2017
      %v2048 = vadd.f32 %v1814, %v2020
      %v2049 = vadd.f32 %v1815, %v2025
      %v2050 = vadd.f32 %v1816, %v2028
      %v2051 = vadd.f32 %v1817, %v2033
      %v2052 = vadd.f32 %v1818, %v2036
      %v2053 = vadd.f32 %v1819, %v2041
      %v2054 = vadd.f32 %v1820, %v2044
      %v2055 = vld [vmem:[%s1698] sm:$0xe]
      %v2056 = vld [vmem:[%s1698 + $0x8] sm:$0xe]
      %v2057 = vld [vmem:[%s1698 + $0x10] sm:$0xe]
      %v2058 = vld [vmem:[%s1698 + $0x18] sm:$0xe]
      %v2059 = vld [vmem:[%s1698 + $0x20] sm:$0xe]
      %v2060 = vld [vmem:[%s1698 + $0x28] sm:$0xe]
      %v2061 = vld [vmem:[%s1698 + $0x30] sm:$0xe]
      %v2062 = vld [vmem:[%s1698 + $0x38] sm:$0xe]
      %v2079 = vrot.slane %v2055, 5
      %v2080 = vrot.slane %v2079, 4
      %v2081 = vrot.slane %v1822, 5
      %v2082 = vsel %vm1041, %v2080, %v2081
      %v2083 = vrot.slane %v2056, 5
      %v2084 = vrot.slane %v2083, 4
      %v2085 = vrot.slane %v1824, 5
      %v2086 = vsel %vm1041, %v2084, %v2085
      %v2087 = vrot.slane %v2057, 5
      %v2088 = vrot.slane %v2087, 4
      %v2089 = vrot.slane %v1826, 5
      %v2090 = vsel %vm1041, %v2088, %v2089
      %v2091 = vrot.slane %v2058, 5
      %v2092 = vrot.slane %v2091, 4
      %v2093 = vrot.slane %v1828, 5
      %v2094 = vsel %vm1041, %v2092, %v2093
      %v2095 = vrot.slane %v2059, 5
      %v2096 = vrot.slane %v2095, 4
      %v2097 = vrot.slane %v1830, 5
      %v2098 = vsel %vm1041, %v2096, %v2097
      %v2099 = vrot.slane %v2060, 5
      %v2100 = vrot.slane %v2099, 4
      %v2101 = vrot.slane %v1832, 5
      %v2102 = vsel %vm1041, %v2100, %v2101
      %v2103 = vrot.slane %v2061, 5
      %v2104 = vrot.slane %v2103, 4
      %v2105 = vrot.slane %v1834, 5
      %v2106 = vsel %vm1041, %v2104, %v2105
      %v2107 = vrot.slane %v2062, 5
      %v2108 = vrot.slane %v2107, 4
      %v2109 = vrot.slane %v1836, 5
      %v2110 = vsel %vm1041, %v2108, %v2109
      %s2111 = scalar_lea.vmem %s4, 64
      %v2112 = vld [vmem:[%s2111] sm:$0xf]
      %v2113 = vld [vmem:[%s2111 + $0x4] sm:$0xf]
      %v2114 = vunpack.c.l.b16 %v2082
      %v2115 = vunpack.c.l.b16 %v2086
      %v2116 = vunpack.c.l.b16 %v2090
      %v2117 = vunpack.c.l.b16 %v2094
      %v2118 = vunpack.c.l.b16 %v2098
      %v2119 = vunpack.c.l.b16 %v2102
      %v2120 = vunpack.c.l.b16 %v2106
      %v2121 = vunpack.c.l.b16 %v2110
      %v2122 = vpack.c.b16 %v2115, %v2114
      %v2123 = vpack.c.b16 %v2117, %v2116
      %v2124 = vpack.c.b16 %v2119, %v2118
      %v2125 = vpack.c.b16 %v2121, %v2120
      %v2128 = vunpack.c.l.b16 %v2112
      %v2129 = vunpack.c.l.b16 %v2113
      %v2130 = vpack.c.b16 %v2129, %v2128
      %v2133 = vsel %vm340, %v2122, 0
      %v2136 = vsel %vm340, %v2123, 0
      %v2139 = vsel %vm340, %v2124, 0
      %v2142 = vsel %vm340, %v2125, 0
      %2144 = vmatprep.subr.bf16.mxu0 0
      %2145 = vmatpush1.bf16.msra.mxu0 %v2130
      %2146 = vmatprep.subr.bf16.mxu0 0
      %2147 = vmatpush1.bf16.msra.mxu0 0
      %2148 = vmatprep.subr.bf16.mxu0 0
      %2149 = vmatpush1.bf16.msra.mxu0 0
      %2150 = vmatprep.subr.bf16.mxu0 0
      %2151 = vmatpush1.bf16.msra.mxu0 0
      %2152 = vmatprep.subr.bf16.mxu0 0
      %2153 = vmatpush1.bf16.msra.mxu0 0
      %2154 = vmatprep.subr.bf16.mxu0 0
      %2155 = vmatpush1.bf16.msra.mxu0 0
      %2156 = vmatprep.subr.bf16.mxu0 0
      %2157 = vmatpush1.bf16.msra.mxu0 0
      %2158 = vmatprep.subr.bf16.mxu0 0
      %2159 = vmatpush1.bf16.msra.mxu0 0
      %2160 = vmatprep.subr.bf16.mxu0 0
      %2161 = vmatpush1.bf16.msra.mxu0 0
      %2162 = vmatprep.subr.bf16.mxu0 0
      %2163 = vmatpush1.bf16.msra.mxu0 0
      %2164 = vmatprep.subr.bf16.mxu0 0
      %2165 = vmatpush1.bf16.msra.mxu0 0
      %2166 = vmatprep.subr.bf16.mxu0 0
      %2167 = vmatpush1.bf16.msra.mxu0 0
      %2168 = vmatprep.subr.bf16.mxu0 0
      %2169 = vmatpush1.bf16.msra.mxu0 0
      %2170 = vmatprep.subr.bf16.mxu0 0
      %2171 = vmatpush1.bf16.msra.mxu0 0
      %2172 = vmatprep.subr.bf16.mxu0 0
      %2173 = vmatpush1.bf16.msra.mxu0 0
      %2174 = vmatprep.subr.bf16.mxu0 0
      %2175 = vmatpush1.bf16.msra.mxu0 0
      %2176 = vmatprep.mubr.bf16.mxu0 0
      %2177 = vmatmul.mubr.bf16.gmra.mrb[0].mxu0 %v2133
      %v2178 = vpop.f32.mrb[0].mxu0
      %v2179 = vadd.f32 0.0, %v2178
      %v2180 = vpop.f32.mrb[0].mxu0
      %v2181 = vpop.f32.mrb[0].mxu0
      %v2182 = vadd.f32 0.0, %v2181
      %v2183 = vpop.f32.mrb[0].mxu0
      %2184 = vmatprep.mubr.bf16.mxu0 0
      %2185 = vmatmul.mubr.bf16.gmra.mrb[0].mxu0 %v2136
      %v2186 = vpop.f32.mrb[0].mxu0
      %v2187 = vadd.f32 0.0, %v2186
      %v2188 = vpop.f32.mrb[0].mxu0
      %v2189 = vpop.f32.mrb[0].mxu0
      %v2190 = vadd.f32 0.0, %v2189
      %v2191 = vpop.f32.mrb[0].mxu0
      %2192 = vmatprep.mubr.bf16.mxu0 0
      %2193 = vmatmul.mubr.bf16.gmra.mrb[0].mxu0 %v2139
      %v2194 = vpop.f32.mrb[0].mxu0
      %v2195 = vadd.f32 0.0, %v2194
      %v2196 = vpop.f32.mrb[0].mxu0
      %v2197 = vpop.f32.mrb[0].mxu0
      %v2198 = vadd.f32 0.0, %v2197
      %v2199 = vpop.f32.mrb[0].mxu0
      %2200 = vmatprep.mubr.bf16.mxu0 0
      %2201 = vmatmul.mubr.bf16.gmra.mrb[0].mxu0 %v2142
      %v2202 = vpop.f32.mrb[0].mxu0
      %v2203 = vadd.f32 0.0, %v2202
      %v2204 = vpop.f32.mrb[0].mxu0
      %v2205 = vpop.f32.mrb[0].mxu0
      %v2206 = vadd.f32 0.0, %v2205
      %v2207 = vpop.f32.mrb[0].mxu0
      %2208 = vdwg.mxu0
      %v2209 = vadd.f32 %v2047, %v2179
      %v2210 = vadd.f32 %v2048, %v2182
      %v2211 = vadd.f32 %v2049, %v2187
      %v2212 = vadd.f32 %v2050, %v2190
      %v2213 = vadd.f32 %v2051, %v2195
      %v2214 = vadd.f32 %v2052, %v2198
      %v2215 = vadd.f32 %v2053, %v2203
      %v2216 = vadd.f32 %v2054, %v2206
      %v2217 = vld [vmem:[%s5] sm:$0x1]
      %v2218 = vlaneseq
      %v2219 = vshrl.u32 %v2218, 7
      %v2220 = vsub.s32 0, %v2219
      %v2221 = vrot.slane %v2217, %v2220
      %v2222 = vadd.f32 %v2209, %v2221
      %v2223 = vadd.f32 %v2210, %v2221
      %v2224 = vadd.f32 %v2211, %v2221
      %v2225 = vadd.f32 %v2212, %v2221
      %v2226 = vadd.f32 %v2213, %v2221
      %v2227 = vadd.f32 %v2214, %v2221
      %v2228 = vadd.f32 %v2215, %v2221
      %v2229 = vadd.f32 %v2216, %v2221
      %v2230 = vld [vmem:[%s2 + $0x1] sm:$0x1]
      %v2231 = vlaneseq
      %v2232 = vshrl.u32 %v2231, 7
      %v2233 = vsub.s32 0, %v2232
      %v2234 = vrot.slane %v2230, %v2233
      %v2235 = vmul.f32 %v2222, %v2234
      %v2236 = vmul.f32 %v2223, %v2234
      %v2237 = vmul.f32 %v2224, %v2234
      %v2238 = vmul.f32 %v2225, %v2234
      %v2239 = vmul.f32 %v2226, %v2234
      %v2240 = vmul.f32 %v2227, %v2234
      %v2241 = vmul.f32 %v2228, %v2234
      %v2242 = vmul.f32 %v2229, %v2234
      %v2243 = vld [vmem:[%s3 + $0x1] sm:$0x1]
      %v2244 = vlaneseq
      %v2245 = vshrl.u32 %v2244, 7
      %v2246 = vsub.s32 0, %v2245
      %v2247 = vrot.slane %v2243, %v2246
      %v2248 = vadd.f32 %v2235, %v2247
      %v2249 = vadd.f32 %v2236, %v2247
      %v2250 = vadd.f32 %v2237, %v2247
      %v2251 = vadd.f32 %v2238, %v2247
      %v2252 = vadd.f32 %v2239, %v2247
      %v2253 = vadd.f32 %v2240, %v2247
      %v2254 = vadd.f32 %v2241, %v2247
      %v2255 = vadd.f32 %v2242, %v2247
      %v2256 = vxor.u32 %v2248, 2147483648
      %v2257 = vxor.u32 %v2249, 2147483648
      %v2258 = vxor.u32 %v2250, 2147483648
      %v2259 = vxor.u32 %v2251, 2147483648
      %v2260 = vxor.u32 %v2252, 2147483648
      %v2261 = vxor.u32 %v2253, 2147483648
      %v2262 = vxor.u32 %v2254, 2147483648
      %v2263 = vxor.u32 %v2255, 2147483648
      %v2264 = vmul.f32 %v2256, 1.442695
      %v2265 = vpow.pop %v2264
      %v2266 = vmul.f32 %v2257, 1.442695
      %v2267 = vpow.pop %v2266
      %v2268 = vmul.f32 %v2258, 1.442695
      %v2269 = vpow.pop %v2268
      %v2270 = vmul.f32 %v2259, 1.442695
      %v2271 = vpow.pop %v2270
      %v2272 = vmul.f32 %v2260, 1.442695
      %v2273 = vpow.pop %v2272
      %v2274 = vmul.f32 %v2261, 1.442695
      %v2275 = vpow.pop %v2274
      %v2276 = vmul.f32 %v2262, 1.442695
      %v2277 = vpow.pop %v2276
      %v2278 = vmul.f32 %v2263, 1.442695
      %v2279 = vpow.pop %v2278
      %v2280 = vadd.f32 %v2265, 1.0
      %v2281 = vadd.f32 %v2267, 1.0
      %v2282 = vadd.f32 %v2269, 1.0
      %v2283 = vadd.f32 %v2271, 1.0
      %v2284 = vadd.f32 %v2273, 1.0
      %v2285 = vadd.f32 %v2275, 1.0
      %v2286 = vadd.f32 %v2277, 1.0
      %v2287 = vadd.f32 %v2279, 1.0
      %v2288 = vrcp.pop %v2280
      %v2289 = vmul.f32 1.0, %v2288
      %v2290 = vrcp.pop %v2281
      %v2291 = vmul.f32 1.0, %v2290
      %v2292 = vrcp.pop %v2282
      %v2293 = vmul.f32 1.0, %v2292
      %v2294 = vrcp.pop %v2283
      %v2295 = vmul.f32 1.0, %v2294
      %v2296 = vrcp.pop %v2284
      %v2297 = vmul.f32 1.0, %v2296
      %v2298 = vrcp.pop %v2285
      %v2299 = vmul.f32 1.0, %v2298
      %v2300 = vrcp.pop %v2286
      %v2301 = vmul.f32 1.0, %v2300
      %v2302 = vrcp.pop %v2287
      %v2303 = vmul.f32 1.0, %v2302
      %v2304 = vmul.f32 %v2248, %v2289
      %v2305 = vmul.f32 %v2249, %v2291
      %v2306 = vmul.f32 %v2250, %v2293
      %v2307 = vmul.f32 %v2251, %v2295
      %v2308 = vmul.f32 %v2252, %v2297
      %v2309 = vmul.f32 %v2253, %v2299
      %v2310 = vmul.f32 %v2254, %v2301
      %v2311 = vmul.f32 %v2255, %v2303
      %v2312 = vpack.c.bf16 %v2305, %v2304
      %v2313 = vpack.c.bf16 %v2307, %v2306
      %v2314 = vpack.c.bf16 %v2309, %v2308
      %v2315 = vpack.c.bf16 %v2311, %v2310
      %v2320 = vunpack.c.l.b16 %v2312
      %v2321 = vunpack.c.h.b16 %v2312
      %v2322 = vunpack.c.l.b16 %v2313
      %v2323 = vunpack.c.h.b16 %v2313
      %v2324 = vunpack.c.l.b16 %v2314
      %v2325 = vunpack.c.h.b16 %v2314
      %v2326 = vunpack.c.l.b16 %v2315
      %v2327 = vunpack.c.h.b16 %v2315
      %v2328 = vpack.c.b16 %v2320, %v2320
      %v2329 = vpack.c.b16 %v2321, %v2321
      %v2330 = vpack.c.b16 %v2322, %v2322
      %v2331 = vpack.c.b16 %v2323, %v2323
      %v2332 = vpack.c.b16 %v2324, %v2324
      %v2333 = vpack.c.b16 %v2325, %v2325
      %v2334 = vpack.c.b16 %v2326, %v2326
      %v2335 = vpack.c.b16 %v2327, %v2327
      %v2337 = vshrl.u32 %v2328, 16
      %v2339 = vrot.slane %v2337, 7
      %v2340 = vshll.u32 %v2328, 16
      %v2342 = vor.u32 %v2339, %v2340
      %v2343 = vrot.slane %v2339, 4
      %v2345 = vshrl.u32 %v2329, 16
      %v2347 = vrot.slane %v2345, 7
      %v2348 = vshll.u32 %v2329, 16
      %v2350 = vor.u32 %v2347, %v2348
      %v2351 = vrot.slane %v2347, 4
      %v2353 = vshrl.u32 %v2330, 16
      %v2355 = vrot.slane %v2353, 7
      %v2356 = vshll.u32 %v2330, 16
      %v2358 = vor.u32 %v2355, %v2356
      %v2359 = vrot.slane %v2355, 4
      %v2361 = vshrl.u32 %v2331, 16
      %v2363 = vrot.slane %v2361, 7
      %v2364 = vshll.u32 %v2331, 16
      %v2366 = vor.u32 %v2363, %v2364
      %v2367 = vrot.slane %v2363, 4
      %v2369 = vshrl.u32 %v2332, 16
      %v2371 = vrot.slane %v2369, 7
      %v2372 = vshll.u32 %v2332, 16
      %v2374 = vor.u32 %v2371, %v2372
      %v2375 = vrot.slane %v2371, 4
      %v2377 = vshrl.u32 %v2333, 16
      %v2379 = vrot.slane %v2377, 7
      %v2380 = vshll.u32 %v2333, 16
      %v2382 = vor.u32 %v2379, %v2380
      %v2383 = vrot.slane %v2379, 4
      %v2385 = vshrl.u32 %v2334, 16
      %v2387 = vrot.slane %v2385, 7
      %v2388 = vshll.u32 %v2334, 16
      %v2390 = vor.u32 %v2387, %v2388
      %v2391 = vrot.slane %v2387, 4
      %v2393 = vshrl.u32 %v2335, 16
      %v2395 = vrot.slane %v2393, 7
      %v2396 = vshll.u32 %v2335, 16
      %v2398 = vor.u32 %v2395, %v2396
      %v2399 = vrot.slane %v2395, 4
      %v2416 = vsel %vm632, %v2342, %v1302
      %2417 = vst [vmem:[%s630] sm:$0xf] %v2416
      %v2418 = vld [vmem:[%s630 + $0x4] sm:$0x1]
      %v2419 = vsel %vm262, %v2343, %v2418
      %2420 = vst [vmem:[%s630 + $0x4] sm:$0x1] %v2419
      %v2421 = vld [vmem:[%s630 + $0x8] sm:$0xf]
      %v2422 = vsel %vm632, %v2350, %v2421
      %2423 = vst [vmem:[%s630 + $0x8] sm:$0xf] %v2422
      %v2424 = vld [vmem:[%s630 + $0xc] sm:$0x1]
      %v2425 = vsel %vm262, %v2351, %v2424
      %2426 = vst [vmem:[%s630 + $0xc] sm:$0x1] %v2425
      %v2427 = vld [vmem:[%s630 + $0x10] sm:$0xf]
      %v2428 = vsel %vm632, %v2358, %v2427
      %2429 = vst [vmem:[%s630 + $0x10] sm:$0xf] %v2428
      %v2430 = vld [vmem:[%s630 + $0x14] sm:$0x1]
      %v2431 = vsel %vm262, %v2359, %v2430
      %2432 = vst [vmem:[%s630 + $0x14] sm:$0x1] %v2431
      %v2433 = vld [vmem:[%s630 + $0x18] sm:$0xf]
      %v2434 = vsel %vm632, %v2366, %v2433
      %2435 = vst [vmem:[%s630 + $0x18] sm:$0xf] %v2434
      %v2436 = vld [vmem:[%s630 + $0x1c] sm:$0x1]
      %v2437 = vsel %vm262, %v2367, %v2436
      %2438 = vst [vmem:[%s630 + $0x1c] sm:$0x1] %v2437
      %v2439 = vld [vmem:[%s630 + $0x20] sm:$0xf]
      %v2440 = vsel %vm632, %v2374, %v2439
      %2441 = vst [vmem:[%s630 + $0x20] sm:$0xf] %v2440
      %v2442 = vld [vmem:[%s630 + $0x24] sm:$0x1]
      %v2443 = vsel %vm262, %v2375, %v2442
      %2444 = vst [vmem:[%s630 + $0x24] sm:$0x1] %v2443
      %v2445 = vld [vmem:[%s630 + $0x28] sm:$0xf]
      %v2446 = vsel %vm632, %v2382, %v2445
      %2447 = vst [vmem:[%s630 + $0x28] sm:$0xf] %v2446
      %v2448 = vld [vmem:[%s630 + $0x2c] sm:$0x1]
      %v2449 = vsel %vm262, %v2383, %v2448
      %2450 = vst [vmem:[%s630 + $0x2c] sm:$0x1] %v2449
      %v2451 = vld [vmem:[%s630 + $0x30] sm:$0xf]
      %v2452 = vsel %vm632, %v2390, %v2451
      %2453 = vst [vmem:[%s630 + $0x30] sm:$0xf] %v2452
      %v2454 = vld [vmem:[%s630 + $0x34] sm:$0x1]
      %v2455 = vsel %vm262, %v2391, %v2454
      %2456 = vst [vmem:[%s630 + $0x34] sm:$0x1] %v2455
      %v2457 = vld [vmem:[%s630 + $0x38] sm:$0xf]
      %v2458 = vsel %vm632, %v2398, %v2457
      %2459 = vst [vmem:[%s630 + $0x38] sm:$0xf] %v2458
      %v2460 = vld [vmem:[%s630 + $0x3c] sm:$0x1]
      %v2461 = vsel %vm262, %v2399, %v2460
      %2462 = vst [vmem:[%s630 + $0x3c] sm:$0x1] %v2461
      %v2463 = vld [vmem:[#allocation2] sm:$0xf]
      %v2464 = vld [vmem:[#allocation2 + $0x8] sm:$0xf]
      %v2465 = vld [vmem:[#allocation2 + $0x10] sm:$0xf]
      %v2466 = vld [vmem:[#allocation2 + $0x18] sm:$0xf]
      %v2467 = vld [vmem:[#allocation2 + $0x20] sm:$0xf]
      %v2468 = vld [vmem:[#allocation2 + $0x28] sm:$0xf]
      %v2469 = vld [vmem:[#allocation2 + $0x30] sm:$0xf]
      %v2470 = vld [vmem:[#allocation2 + $0x38] sm:$0xf]
      %s2471 = scalar_lea.vmem %s4, 72
      %v2472 = vld [vmem:[%s2471] sm:$0xf]
      %v2473 = vld [vmem:[%s2471 + $0x4] sm:$0xf]
      %v2474 = vld [vmem:[#allocation2 + $0x4] sm:$0x1]
      %v2475 = vld [vmem:[#allocation2 + $0xc] sm:$0x1]
      %v2476 = vld [vmem:[#allocation2 + $0x14] sm:$0x1]
      %v2477 = vld [vmem:[#allocation2 + $0x1c] sm:$0x1]
      %v2478 = vld [vmem:[#allocation2 + $0x24] sm:$0x1]
      %v2479 = vld [vmem:[#allocation2 + $0x2c] sm:$0x1]
      %v2480 = vld [vmem:[#allocation2 + $0x34] sm:$0x1]
      %v2481 = vld [vmem:[#allocation2 + $0x3c] sm:$0x1]
      %v2483 = vshrl.u32 %v2463, 16
      %v2485 = vrot.slane %v2483, 4
      %v2486 = vshll.u32 %v2463, 16
      %v2488 = vrot.slane %v2486, 5
      %v2489 = vor.u32 %v2485, %v2488
      %v2490 = vrot.slane %v2489, 4
      %v2492 = vshll.u32 %v2474, 16
      %v2494 = vrot.slane %v2492, 5
      %v2495 = vsel %vm701, %v2490, %v2494
      %v2497 = vshrl.u32 %v2464, 16
      %v2499 = vrot.slane %v2497, 4
      %v2500 = vshll.u32 %v2464, 16
      %v2502 = vrot.slane %v2500, 5
      %v2503 = vor.u32 %v2499, %v2502
      %v2504 = vrot.slane %v2503, 4
      %v2506 = vshll.u32 %v2475, 16
      %v2508 = vrot.slane %v2506, 5
      %v2509 = vsel %vm701, %v2504, %v2508
      %v2511 = vshrl.u32 %v2465, 16
      %v2513 = vrot.slane %v2511, 4
      %v2514 = vshll.u32 %v2465, 16
      %v2516 = vrot.slane %v2514, 5
      %v2517 = vor.u32 %v2513, %v2516
      %v2518 = vrot.slane %v2517, 4
      %v2520 = vshll.u32 %v2476, 16
      %v2522 = vrot.slane %v2520, 5
      %v2523 = vsel %vm701, %v2518, %v2522
      %v2525 = vshrl.u32 %v2466, 16
      %v2527 = vrot.slane %v2525, 4
      %v2528 = vshll.u32 %v2466, 16
      %v2530 = vrot.slane %v2528, 5
      %v2531 = vor.u32 %v2527, %v2530
      %v2532 = vrot.slane %v2531, 4
      %v2534 = vshll.u32 %v2477, 16
      %v2536 = vrot.slane %v2534, 5
      %v2537 = vsel %vm701, %v2532, %v2536
      %v2539 = vshrl.u32 %v2467, 16
      %v2541 = vrot.slane %v2539, 4
      %v2542 = vshll.u32 %v2467, 16
      %v2544 = vrot.slane %v2542, 5
      %v2545 = vor.u32 %v2541, %v2544
      %v2546 = vrot.slane %v2545, 4
      %v2548 = vshll.u32 %v2478, 16
      %v2550 = vrot.slane %v2548, 5
      %v2551 = vsel %vm701, %v2546, %v2550
      %v2553 = vshrl.u32 %v2468, 16
      %v2555 = vrot.slane %v2553, 4
      %v2556 = vshll.u32 %v2468, 16
      %v2558 = vrot.slane %v2556, 5
      %v2559 = vor.u32 %v2555, %v2558
      %v2560 = vrot.slane %v2559, 4
      %v2562 = vshll.u32 %v2479, 16
      %v2564 = vrot.slane %v2562, 5
      %v2565 = vsel %vm701, %v2560, %v2564
      %v2567 = vshrl.u32 %v2469, 16
      %v2569 = vrot.slane %v2567, 4
      %v2570 = vshll.u32 %v2469, 16
      %v2572 = vrot.slane %v2570, 5
      %v2573 = vor.u32 %v2569, %v2572
      %v2574 = vrot.slane %v2573, 4
      %v2576 = vshll.u32 %v2480, 16
      %v2578 = vrot.slane %v2576, 5
      %v2579 = vsel %vm701, %v2574, %v2578
      %v2581 = vshrl.u32 %v2470, 16
      %v2583 = vrot.slane %v2581, 4
      %v2584 = vshll.u32 %v2470, 16
      %v2586 = vrot.slane %v2584, 5
      %v2587 = vor.u32 %v2583, %v2586
      %v2588 = vrot.slane %v2587, 4
      %v2590 = vshll.u32 %v2481, 16
      %v2592 = vrot.slane %v2590, 5
      %v2593 = vsel %vm701, %v2588, %v2592
      %s2594 = scalar_lea.vmem %s4, 80
      %v2595 = vld [vmem:[%s2594] sm:$0xf]
      %v2596 = vld [vmem:[%s2594 + $0x4] sm:$0xf]
      %v2597 = vunpack.c.l.b16 %v2495
      %v2598 = vunpack.c.l.b16 %v2509
      %v2599 = vunpack.c.l.b16 %v2523
      %v2600 = vunpack.c.l.b16 %v2537
      %v2601 = vunpack.c.l.b16 %v2551
      %v2602 = vunpack.c.l.b16 %v2565
      %v2603 = vunpack.c.l.b16 %v2579
      %v2604 = vunpack.c.l.b16 %v2593
      %v2605 = vpack.c.b16 %v2598, %v2597
      %v2606 = vpack.c.b16 %v2600, %v2599
      %v2607 = vpack.c.b16 %v2602, %v2601
      %v2608 = vpack.c.b16 %v2604, %v2603
      %v2611 = vunpack.c.l.b16 %v2595
      %v2612 = vunpack.c.l.b16 %v2596
      %v2613 = vpack.c.b16 %v2612, %v2611
      %v2616 = vsel %vm340, %v2605, 0
      %v2619 = vsel %vm340, %v2606, 0
      %v2622 = vsel %vm340, %v2607, 0
      %v2625 = vsel %vm340, %v2608, 0
      %2627 = vmatprep.subr.bf16.mxu0 0
      %2628 = vmatpush1.bf16.msra.mxu0 %v2613
      %2629 = vmatprep.subr.bf16.mxu0 0
      %2630 = vmatpush1.bf16.msra.mxu0 0
      %2631 = vmatprep.subr.bf16.mxu0 0
      %2632 = vmatpush1.bf16.msra.mxu0 0
      %2633 = vmatprep.subr.bf16.mxu0 0
      %2634 = vmatpush1.bf16.msra.mxu0 0
      %2635 = vmatprep.subr.bf16.mxu0 0
      %2636 = vmatpush1.bf16.msra.mxu0 0
      %2637 = vmatprep.subr.bf16.mxu0 0
      %2638 = vmatpush1.bf16.msra.mxu0 0
      %2639 = vmatprep.subr.bf16.mxu0 0
      %2640 = vmatpush1.bf16.msra.mxu0 0
      %2641 = vmatprep.subr.bf16.mxu0 0
      %2642 = vmatpush1.bf16.msra.mxu0 0
      %2643 = vmatprep.subr.bf16.mxu0 0
      %2644 = vmatpush1.bf16.msra.mxu0 0
      %2645 = vmatprep.subr.bf16.mxu0 0
      %2646 = vmatpush1.bf16.msra.mxu0 0
      %2647 = vmatprep.subr.bf16.mxu0 0
      %2648 = vmatpush1.bf16.msra.mxu0 0
      %2649 = vmatprep.subr.bf16.mxu0 0
      %2650 = vmatpush1.bf16.msra.mxu0 0
      %2651 = vmatprep.subr.bf16.mxu0 0
      %2652 = vmatpush1.bf16.msra.mxu0 0
      %2653 = vmatprep.subr.bf16.mxu0 0
      %2654 = vmatpush1.bf16.msra.mxu0 0
      %2655 = vmatprep.subr.bf16.mxu0 0
      %2656 = vmatpush1.bf16.msra.mxu0 0
      %2657 = vmatprep.subr.bf16.mxu0 0
      %2658 = vmatpush1.bf16.msra.mxu0 0
      %2659 = vmatprep.mubr.bf16.mxu0 0
      %2660 = vmatmul.mubr.bf16.gmra.mrb[0].mxu0 %v2616
      %v2661 = vpop.f32.mrb[0].mxu0
      %v2662 = vadd.f32 0.0, %v2661
      %v2663 = vpop.f32.mrb[0].mxu0
      %v2664 = vpop.f32.mrb[0].mxu0
      %v2665 = vadd.f32 0.0, %v2664
      %v2666 = vpop.f32.mrb[0].mxu0
      %2667 = vmatprep.mubr.bf16.mxu0 0
      %2668 = vmatmul.mubr.bf16.gmra.mrb[0].mxu0 %v2619
      %v2669 = vpop.f32.mrb[0].mxu0
      %v2670 = vadd.f32 0.0, %v2669
      %v2671 = vpop.f32.mrb[0].mxu0
      %v2672 = vpop.f32.mrb[0].mxu0
      %v2673 = vadd.f32 0.0, %v2672
      %v2674 = vpop.f32.mrb[0].mxu0
      %2675 = vmatprep.mubr.bf16.mxu0 0
      %2676 = vmatmul.mubr.bf16.gmra.mrb[0].mxu0 %v2622
      %v2677 = vpop.f32.mrb[0].mxu0
      %v2678 = vadd.f32 0.0, %v2677
      %v2679 = vpop.f32.mrb[0].mxu0
      %v2680 = vpop.f32.mrb[0].mxu0
      %v2681 = vadd.f32 0.0, %v2680
      %v2682 = vpop.f32.mrb[0].mxu0
      %2683 = vmatprep.mubr.bf16.mxu0 0
      %2684 = vmatmul.mubr.bf16.gmra.mrb[0].mxu0 %v2625
      %v2685 = vpop.f32.mrb[0].mxu0
      %v2686 = vadd.f32 0.0, %v2685
      %v2687 = vpop.f32.mrb[0].mxu0
      %v2688 = vpop.f32.mrb[0].mxu0
      %v2689 = vadd.f32 0.0, %v2688
      %v2690 = vpop.f32.mrb[0].mxu0
      %2691 = vdwg.mxu0
      %v2700 = vunpack.c.l.b16 %v2463
      %v2701 = vunpack.c.l.b16 %v2464
      %v2702 = vunpack.c.l.b16 %v2465
      %v2703 = vunpack.c.l.b16 %v2466
      %v2704 = vunpack.c.l.b16 %v2467
      %v2705 = vunpack.c.l.b16 %v2468
      %v2706 = vunpack.c.l.b16 %v2469
      %v2707 = vunpack.c.l.b16 %v2470
      %v2708 = vpack.c.b16 %v2701, %v2700
      %v2709 = vpack.c.b16 %v2703, %v2702
      %v2710 = vpack.c.b16 %v2705, %v2704
      %v2711 = vpack.c.b16 %v2707, %v2706
      %v2714 = vunpack.c.l.b16 %v2472
      %v2715 = vunpack.c.l.b16 %v2473
      %v2716 = vpack.c.b16 %v2715, %v2714
      %v2719 = vsel %vm340, %v2708, 0
      %v2722 = vsel %vm340, %v2709, 0
      %v2725 = vsel %vm340, %v2710, 0
      %v2728 = vsel %vm340, %v2711, 0
      %2730 = vmatprep.subr.bf16.mxu0 0
      %2731 = vmatpush1.bf16.msra.mxu0 %v2716
      %2732 = vmatprep.subr.bf16.mxu0 0
      %2733 = vmatpush1.bf16.msra.mxu0 0
      %2734 = vmatprep.subr.bf16.mxu0 0
      %2735 = vmatpush1.bf16.msra.mxu0 0
      %2736 = vmatprep.subr.bf16.mxu0 0
      %2737 = vmatpush1.bf16.msra.mxu0 0
      %2738 = vmatprep.subr.bf16.mxu0 0
      %2739 = vmatpush1.bf16.msra.mxu0 0
      %2740 = vmatprep.subr.bf16.mxu0 0
      %2741 = vmatpush1.bf16.msra.mxu0 0
      %2742 = vmatprep.subr.bf16.mxu0 0
      %2743 = vmatpush1.bf16.msra.mxu0 0
      %2744 = vmatprep.subr.bf16.mxu0 0
      %2745 = vmatpush1.bf16.msra.mxu0 0
      %2746 = vmatprep.subr.bf16.mxu0 0
      %2747 = vmatpush1.bf16.msra.mxu0 0
      %2748 = vmatprep.subr.bf16.mxu0 0
      %2749 = vmatpush1.bf16.msra.mxu0 0
      %2750 = vmatprep.subr.bf16.mxu0 0
      %2751 = vmatpush1.bf16.msra.mxu0 0
      %2752 = vmatprep.subr.bf16.mxu0 0
      %2753 = vmatpush1.bf16.msra.mxu0 0
      %2754 = vmatprep.subr.bf16.mxu0 0
      %2755 = vmatpush1.bf16.msra.mxu0 0
      %2756 = vmatprep.subr.bf16.mxu0 0
      %2757 = vmatpush1.bf16.msra.mxu0 0
      %2758 = vmatprep.subr.bf16.mxu0 0
      %2759 = vmatpush1.bf16.msra.mxu0 0
      %2760 = vmatprep.subr.bf16.mxu0 0
      %2761 = vmatpush1.bf16.msra.mxu0 0
      %2762 = vmatprep.mubr.bf16.mxu0 0
      %2763 = vmatmul.mubr.bf16.gmra.mrb[0].mxu0 %v2719
      %v2764 = vpop.f32.mrb[0].mxu0
      %v2765 = vadd.f32 %v2662, %v2764
      %v2766 = vpop.f32.mrb[0].mxu0
      %v2767 = vpop.f32.mrb[0].mxu0
      %v2768 = vadd.f32 %v2665, %v2767
      %v2769 = vpop.f32.mrb[0].mxu0
      %2770 = vmatprep.mubr.bf16.mxu0 0
      %2771 = vmatmul.mubr.bf16.gmra.mrb[0].mxu0 %v2722
      %v2772 = vpop.f32.mrb[0].mxu0
      %v2773 = vadd.f32 %v2670, %v2772
      %v2774 = vpop.f32.mrb[0].mxu0
      %v2775 = vpop.f32.mrb[0].mxu0
      %v2776 = vadd.f32 %v2673, %v2775
      %v2777 = vpop.f32.mrb[0].mxu0
      %2778 = vmatprep.mubr.bf16.mxu0 0
      %2779 = vmatmul.mubr.bf16.gmra.mrb[0].mxu0 %v2725
      %v2780 = vpop.f32.mrb[0].mxu0
      %v2781 = vadd.f32 %v2678, %v2780
      %v2782 = vpop.f32.mrb[0].mxu0
      %v2783 = vpop.f32.mrb[0].mxu0
      %v2784 = vadd.f32 %v2681, %v2783
      %v2785 = vpop.f32.mrb[0].mxu0
      %2786 = vmatprep.mubr.bf16.mxu0 0
      %2787 = vmatmul.mubr.bf16.gmra.mrb[0].mxu0 %v2728
      %v2788 = vpop.f32.mrb[0].mxu0
      %v2789 = vadd.f32 %v2686, %v2788
      %v2790 = vpop.f32.mrb[0].mxu0
      %v2791 = vpop.f32.mrb[0].mxu0
      %v2792 = vadd.f32 %v2689, %v2791
      %v2793 = vpop.f32.mrb[0].mxu0
      %2794 = vdwg.mxu0
      %v2795 = vld [vmem:[#allocation2] sm:$0xe]
      %v2796 = vld [vmem:[#allocation2 + $0x8] sm:$0xe]
      %v2797 = vld [vmem:[#allocation2 + $0x10] sm:$0xe]
      %v2798 = vld [vmem:[#allocation2 + $0x18] sm:$0xe]
      %v2799 = vld [vmem:[#allocation2 + $0x20] sm:$0xe]
      %v2800 = vld [vmem:[#allocation2 + $0x28] sm:$0xe]
      %v2801 = vld [vmem:[#allocation2 + $0x30] sm:$0xe]
      %v2802 = vld [vmem:[#allocation2 + $0x38] sm:$0xe]
      %v2819 = vrot.slane %v2795, 5
      %v2820 = vrot.slane %v2819, 4
      %v2821 = vrot.slane %v2474, 5
      %v2822 = vsel %vm1041, %v2820, %v2821
      %v2823 = vrot.slane %v2796, 5
      %v2824 = vrot.slane %v2823, 4
      %v2825 = vrot.slane %v2475, 5
      %v2826 = vsel %vm1041, %v2824, %v2825
      %v2827 = vrot.slane %v2797, 5
      %v2828 = vrot.slane %v2827, 4
      %v2829 = vrot.slane %v2476, 5
      %v2830 = vsel %vm1041, %v2828, %v2829
      %v2831 = vrot.slane %v2798, 5
      %v2832 = vrot.slane %v2831, 4
      %v2833 = vrot.slane %v2477, 5
      %v2834 = vsel %vm1041, %v2832, %v2833
      %v2835 = vrot.slane %v2799, 5
      %v2836 = vrot.slane %v2835, 4
      %v2837 = vrot.slane %v2478, 5
      %v2838 = vsel %vm1041, %v2836, %v2837
      %v2839 = vrot.slane %v2800, 5
      %v2840 = vrot.slane %v2839, 4
      %v2841 = vrot.slane %v2479, 5
      %v2842 = vsel %vm1041, %v2840, %v2841
      %v2843 = vrot.slane %v2801, 5
      %v2844 = vrot.slane %v2843, 4
      %v2845 = vrot.slane %v2480, 5
      %v2846 = vsel %vm1041, %v2844, %v2845
      %v2847 = vrot.slane %v2802, 5
      %v2848 = vrot.slane %v2847, 4
      %v2849 = vrot.slane %v2481, 5
      %v2850 = vsel %vm1041, %v2848, %v2849
      %s2851 = scalar_lea.vmem %s4, 88
      %v2852 = vld [vmem:[%s2851] sm:$0xf]
      %v2853 = vld [vmem:[%s2851 + $0x4] sm:$0xf]
      %v2854 = vunpack.c.l.b16 %v2822
      %v2855 = vunpack.c.l.b16 %v2826
      %v2856 = vunpack.c.l.b16 %v2830
      %v2857 = vunpack.c.l.b16 %v2834
      %v2858 = vunpack.c.l.b16 %v2838
      %v2859 = vunpack.c.l.b16 %v2842
      %v2860 = vunpack.c.l.b16 %v2846
      %v2861 = vunpack.c.l.b16 %v2850
      %v2862 = vpack.c.b16 %v2855, %v2854
      %v2863 = vpack.c.b16 %v2857, %v2856
      %v2864 = vpack.c.b16 %v2859, %v2858
      %v2865 = vpack.c.b16 %v2861, %v2860
      %v2868 = vunpack.c.l.b16 %v2852
      %v2869 = vunpack.c.l.b16 %v2853
      %v2870 = vpack.c.b16 %v2869, %v2868
      %v2873 = vsel %vm340, %v2862, 0
      %v2876 = vsel %vm340, %v2863, 0
      %v2879 = vsel %vm340, %v2864, 0
      %v2882 = vsel %vm340, %v2865, 0
      %2884 = vmatprep.subr.bf16.mxu0 0
      %2885 = vmatpush1.bf16.msra.mxu0 %v2870
      %2886 = vmatprep.subr.bf16.mxu0 0
      %2887 = vmatpush1.bf16.msra.mxu0 0
      %2888 = vmatprep.subr.bf16.mxu0 0
      %2889 = vmatpush1.bf16.msra.mxu0 0
      %2890 = vmatprep.subr.bf16.mxu0 0
      %2891 = vmatpush1.bf16.msra.mxu0 0
      %2892 = vmatprep.subr.bf16.mxu0 0
      %2893 = vmatpush1.bf16.msra.mxu0 0
      %2894 = vmatprep.subr.bf16.mxu0 0
      %2895 = vmatpush1.bf16.msra.mxu0 0
      %2896 = vmatprep.subr.bf16.mxu0 0
      %2897 = vmatpush1.bf16.msra.mxu0 0
      %2898 = vmatprep.subr.bf16.mxu0 0
      %2899 = vmatpush1.bf16.msra.mxu0 0
      %2900 = vmatprep.subr.bf16.mxu0 0
      %2901 = vmatpush1.bf16.msra.mxu0 0
      %2902 = vmatprep.subr.bf16.mxu0 0
      %2903 = vmatpush1.bf16.msra.mxu0 0
      %2904 = vmatprep.subr.bf16.mxu0 0
      %2905 = vmatpush1.bf16.msra.mxu0 0
      %2906 = vmatprep.subr.bf16.mxu0 0
      %2907 = vmatpush1.bf16.msra.mxu0 0
      %2908 = vmatprep.subr.bf16.mxu0 0
      %2909 = vmatpush1.bf16.msra.mxu0 0
      %2910 = vmatprep.subr.bf16.mxu0 0
      %2911 = vmatpush1.bf16.msra.mxu0 0
      %2912 = vmatprep.subr.bf16.mxu0 0
      %2913 = vmatpush1.bf16.msra.mxu0 0
      %2914 = vmatprep.subr.bf16.mxu0 0
      %2915 = vmatpush1.bf16.msra.mxu0 0
      %2916 = vmatprep.mubr.bf16.mxu0 0
      %2917 = vmatmul.mubr.bf16.gmra.mrb[0].mxu0 %v2873
      %v2918 = vpop.f32.mrb[0].mxu0
      %v2919 = vadd.f32 0.0, %v2918
      %v2920 = vpop.f32.mrb[0].mxu0
      %v2921 = vpop.f32.mrb[0].mxu0
      %v2922 = vadd.f32 0.0, %v2921
      %v2923 = vpop.f32.mrb[0].mxu0
      %2924 = vmatprep.mubr.bf16.mxu0 0
      %2925 = vmatmul.mubr.bf16.gmra.mrb[0].mxu0 %v2876
      %v2926 = vpop.f32.mrb[0].mxu0
      %v2927 = vadd.f32 0.0, %v2926
      %v2928 = vpop.f32.mrb[0].mxu0
      %v2929 = vpop.f32.mrb[0].mxu0
      %v2930 = vadd.f32 0.0, %v2929
      %v2931 = vpop.f32.mrb[0].mxu0
      %2932 = vmatprep.mubr.bf16.mxu0 0
      %2933 = vmatmul.mubr.bf16.gmra.mrb[0].mxu0 %v2879
      %v2934 = vpop.f32.mrb[0].mxu0
      %v2935 = vadd.f32 0.0, %v2934
      %v2936 = vpop.f32.mrb[0].mxu0
      %v2937 = vpop.f32.mrb[0].mxu0
      %v2938 = vadd.f32 0.0, %v2937
      %v2939 = vpop.f32.mrb[0].mxu0
      %2940 = vmatprep.mubr.bf16.mxu0 0
      %2941 = vmatmul.mubr.bf16.gmra.mrb[0].mxu0 %v2882
      %v2942 = vpop.f32.mrb[0].mxu0
      %v2943 = vadd.f32 0.0, %v2942
      %v2944 = vpop.f32.mrb[0].mxu0
      %v2945 = vpop.f32.mrb[0].mxu0
      %v2946 = vadd.f32 0.0, %v2945
      %v2947 = vpop.f32.mrb[0].mxu0
      %2948 = vdwg.mxu0
      %v2949 = vadd.f32 %v2765, %v2919
      %v2950 = vadd.f32 %v2768, %v2922
      %v2951 = vadd.f32 %v2773, %v2927
      %v2952 = vadd.f32 %v2776, %v2930
      %v2953 = vadd.f32 %v2781, %v2935
      %v2954 = vadd.f32 %v2784, %v2938
      %v2955 = vadd.f32 %v2789, %v2943
      %v2956 = vadd.f32 %v2792, %v2946
      %v2957 = vld [vmem:[%s630] sm:$0xf]
      %v2958 = vld [vmem:[%s630 + $0x8] sm:$0xf]
      %v2959 = vld [vmem:[%s630 + $0x10] sm:$0xf]
      %v2960 = vld [vmem:[%s630 + $0x18] sm:$0xf]
      %v2961 = vld [vmem:[%s630 + $0x20] sm:$0xf]
      %v2962 = vld [vmem:[%s630 + $0x28] sm:$0xf]
      %v2963 = vld [vmem:[%s630 + $0x30] sm:$0xf]
      %v2964 = vld [vmem:[%s630 + $0x38] sm:$0xf]
      %s2965 = scalar_lea.vmem %s4, 96
      %v2966 = vld [vmem:[%s2965] sm:$0xf]
      %v2967 = vld [vmem:[%s2965 + $0x4] sm:$0xf]
      %v2976 = vunpack.c.l.b16 %v2957
      %v2977 = vunpack.c.l.b16 %v2958
      %v2978 = vunpack.c.l.b16 %v2959
      %v2979 = vunpack.c.l.b16 %v2960
      %v2980 = vunpack.c.l.b16 %v2961
      %v2981 = vunpack.c.l.b16 %v2962
      %v2982 = vunpack.c.l.b16 %v2963
      %v2983 = vunpack.c.l.b16 %v2964
      %v2984 = vpack.c.b16 %v2977, %v2976
      %v2985 = vpack.c.b16 %v2979, %v2978
      %v2986 = vpack.c.b16 %v2981, %v2980
      %v2987 = vpack.c.b16 %v2983, %v2982
      %v2990 = vunpack.c.l.b16 %v2966
      %v2991 = vunpack.c.l.b16 %v2967
      %v2992 = vpack.c.b16 %v2991, %v2990
      %v2995 = vsel %vm340, %v2984, 0
      %v2998 = vsel %vm340, %v2985, 0
      %v3001 = vsel %vm340, %v2986, 0
      %v3004 = vsel %vm340, %v2987, 0
      %3006 = vmatprep.subr.bf16.mxu0 0
      %3007 = vmatpush1.bf16.msra.mxu0 %v2992
      %3008 = vmatprep.subr.bf16.mxu0 0
      %3009 = vmatpush1.bf16.msra.mxu0 0
      %3010 = vmatprep.subr.bf16.mxu0 0
      %3011 = vmatpush1.bf16.msra.mxu0 0
      %3012 = vmatprep.subr.bf16.mxu0 0
      %3013 = vmatpush1.bf16.msra.mxu0 0
      %3014 = vmatprep.subr.bf16.mxu0 0
      %3015 = vmatpush1.bf16.msra.mxu0 0
      %3016 = vmatprep.subr.bf16.mxu0 0
      %3017 = vmatpush1.bf16.msra.mxu0 0
      %3018 = vmatprep.subr.bf16.mxu0 0
      %3019 = vmatpush1.bf16.msra.mxu0 0
      %3020 = vmatprep.subr.bf16.mxu0 0
      %3021 = vmatpush1.bf16.msra.mxu0 0
      %3022 = vmatprep.subr.bf16.mxu0 0
      %3023 = vmatpush1.bf16.msra.mxu0 0
      %3024 = vmatprep.subr.bf16.mxu0 0
      %3025 = vmatpush1.bf16.msra.mxu0 0
      %3026 = vmatprep.subr.bf16.mxu0 0
      %3027 = vmatpush1.bf16.msra.mxu0 0
      %3028 = vmatprep.subr.bf16.mxu0 0
      %3029 = vmatpush1.bf16.msra.mxu0 0
      %3030 = vmatprep.subr.bf16.mxu0 0
      %3031 = vmatpush1.bf16.msra.mxu0 0
      %3032 = vmatprep.subr.bf16.mxu0 0
      %3033 = vmatpush1.bf16.msra.mxu0 0
      %3034 = vmatprep.subr.bf16.mxu0 0
      %3035 = vmatpush1.bf16.msra.mxu0 0
      %3036 = vmatprep.subr.bf16.mxu0 0
      %3037 = vmatpush1.bf16.msra.mxu0 0
      %3038 = vmatprep.mubr.bf16.mxu0 0
      %3039 = vmatmul.mubr.bf16.gmra.mrb[0].mxu0 %v2995
      %v3040 = vpop.f32.mrb[0].mxu0
      %v3041 = vadd.f32 0.0, %v3040
      %v3042 = vpop.f32.mrb[0].mxu0
      %v3043 = vpop.f32.mrb[0].mxu0
      %v3044 = vadd.f32 0.0, %v3043
      %v3045 = vpop.f32.mrb[0].mxu0
      %3046 = vmatprep.mubr.bf16.mxu0 0
      %3047 = vmatmul.mubr.bf16.gmra.mrb[0].mxu0 %v2998
      %v3048 = vpop.f32.mrb[0].mxu0
      %v3049 = vadd.f32 0.0, %v3048
      %v3050 = vpop.f32.mrb[0].mxu0
      %v3051 = vpop.f32.mrb[0].mxu0
      %v3052 = vadd.f32 0.0, %v3051
      %v3053 = vpop.f32.mrb[0].mxu0
      %3054 = vmatprep.mubr.bf16.mxu0 0
      %3055 = vmatmul.mubr.bf16.gmra.mrb[0].mxu0 %v3001
      %v3056 = vpop.f32.mrb[0].mxu0
      %v3057 = vadd.f32 0.0, %v3056
      %v3058 = vpop.f32.mrb[0].mxu0
      %v3059 = vpop.f32.mrb[0].mxu0
      %v3060 = vadd.f32 0.0, %v3059
      %v3061 = vpop.f32.mrb[0].mxu0
      %3062 = vmatprep.mubr.bf16.mxu0 0
      %3063 = vmatmul.mubr.bf16.gmra.mrb[0].mxu0 %v3004
      %v3064 = vpop.f32.mrb[0].mxu0
      %v3065 = vadd.f32 0.0, %v3064
      %v3066 = vpop.f32.mrb[0].mxu0
      %v3067 = vpop.f32.mrb[0].mxu0
      %v3068 = vadd.f32 0.0, %v3067
      %v3069 = vpop.f32.mrb[0].mxu0
      %3070 = vdwg.mxu0
      %v3071 = vadd.f32 %v2949, %v3041
      %v3072 = vadd.f32 %v2950, %v3044
      %v3073 = vadd.f32 %v2951, %v3049
      %v3074 = vadd.f32 %v2952, %v3052
      %v3075 = vadd.f32 %v2953, %v3057
      %v3076 = vadd.f32 %v2954, %v3060
      %v3077 = vadd.f32 %v2955, %v3065
      %v3078 = vadd.f32 %v2956, %v3068
      %v3079 = vld [vmem:[%s630] sm:$0xf]
      %v3080 = vld [vmem:[%s630 + $0x4] sm:$0x1]
      %v3081 = vld [vmem:[%s630 + $0x8] sm:$0xf]
      %v3082 = vld [vmem:[%s630 + $0xc] sm:$0x1]
      %v3083 = vld [vmem:[%s630 + $0x10] sm:$0xf]
      %v3084 = vld [vmem:[%s630 + $0x14] sm:$0x1]
      %v3085 = vld [vmem:[%s630 + $0x18] sm:$0xf]
      %v3086 = vld [vmem:[%s630 + $0x1c] sm:$0x1]
      %v3087 = vld [vmem:[%s630 + $0x20] sm:$0xf]
      %v3088 = vld [vmem:[%s630 + $0x24] sm:$0x1]
      %v3089 = vld [vmem:[%s630 + $0x28] sm:$0xf]
      %v3090 = vld [vmem:[%s630 + $0x2c] sm:$0x1]
      %v3091 = vld [vmem:[%s630 + $0x30] sm:$0xf]
      %v3092 = vld [vmem:[%s630 + $0x34] sm:$0x1]
      %v3093 = vld [vmem:[%s630 + $0x38] sm:$0xf]
      %v3094 = vld [vmem:[%s630 + $0x3c] sm:$0x1]
      %v3096 = vshrl.u32 %v3079, 16
      %v3098 = vrot.slane %v3096, 4
      %v3099 = vshll.u32 %v3079, 16
      %v3101 = vrot.slane %v3099, 5
      %v3102 = vor.u32 %v3098, %v3101
      %v3103 = vrot.slane %v3102, 4
      %v3105 = vshll.u32 %v3080, 16
      %v3107 = vrot.slane %v3105, 5
      %v3108 = vsel %vm701, %v3103, %v3107
      %v3110 = vshrl.u32 %v3081, 16
      %v3112 = vrot.slane %v3110, 4
      %v3113 = vshll.u32 %v3081, 16
      %v3115 = vrot.slane %v3113, 5
      %v3116 = vor.u32 %v3112, %v3115
      %v3117 = vrot.slane %v3116, 4
      %v3119 = vshll.u32 %v3082, 16
      %v3121 = vrot.slane %v3119, 5
      %v3122 = vsel %vm701, %v3117, %v3121
      %v3124 = vshrl.u32 %v3083, 16
      %v3126 = vrot.slane %v3124, 4
      %v3127 = vshll.u32 %v3083, 16
      %v3129 = vrot.slane %v3127, 5
      %v3130 = vor.u32 %v3126, %v3129
      %v3131 = vrot.slane %v3130, 4
      %v3133 = vshll.u32 %v3084, 16
      %v3135 = vrot.slane %v3133, 5
      %v3136 = vsel %vm701, %v3131, %v3135
      %v3138 = vshrl.u32 %v3085, 16
      %v3140 = vrot.slane %v3138, 4
      %v3141 = vshll.u32 %v3085, 16
      %v3143 = vrot.slane %v3141, 5
      %v3144 = vor.u32 %v3140, %v3143
      %v3145 = vrot.slane %v3144, 4
      %v3147 = vshll.u32 %v3086, 16
      %v3149 = vrot.slane %v3147, 5
      %v3150 = vsel %vm701, %v3145, %v3149
      %v3152 = vshrl.u32 %v3087, 16
      %v3154 = vrot.slane %v3152, 4
      %v3155 = vshll.u32 %v3087, 16
      %v3157 = vrot.slane %v3155, 5
      %v3158 = vor.u32 %v3154, %v3157
      %v3159 = vrot.slane %v3158, 4
      %v3161 = vshll.u32 %v3088, 16
      %v3163 = vrot.slane %v3161, 5
      %v3164 = vsel %vm701, %v3159, %v3163
      %v3166 = vshrl.u32 %v3089, 16
      %v3168 = vrot.slane %v3166, 4
      %v3169 = vshll.u32 %v3089, 16
      %v3171 = vrot.slane %v3169, 5
      %v3172 = vor.u32 %v3168, %v3171
      %v3173 = vrot.slane %v3172, 4
      %v3175 = vshll.u32 %v3090, 16
      %v3177 = vrot.slane %v3175, 5
      %v3178 = vsel %vm701, %v3173, %v3177
      %v3180 = vshrl.u32 %v3091, 16
      %v3182 = vrot.slane %v3180, 4
      %v3183 = vshll.u32 %v3091, 16
      %v3185 = vrot.slane %v3183, 5
      %v3186 = vor.u32 %v3182, %v3185
      %v3187 = vrot.slane %v3186, 4
      %v3189 = vshll.u32 %v3092, 16
      %v3191 = vrot.slane %v3189, 5
      %v3192 = vsel %vm701, %v3187, %v3191
      %v3194 = vshrl.u32 %v3093, 16
      %v3196 = vrot.slane %v3194, 4
      %v3197 = vshll.u32 %v3093, 16
      %v3199 = vrot.slane %v3197, 5
      %v3200 = vor.u32 %v3196, %v3199
      %v3201 = vrot.slane %v3200, 4
      %v3203 = vshll.u32 %v3094, 16
      %v3205 = vrot.slane %v3203, 5
      %v3206 = vsel %vm701, %v3201, %v3205
      %s3207 = scalar_lea.vmem %s4, 104
      %v3208 = vld [vmem:[%s3207] sm:$0xf]
      %v3209 = vld [vmem:[%s3207 + $0x4] sm:$0xf]
      %v3210 = vunpack.c.l.b16 %v3108
      %v3211 = vunpack.c.l.b16 %v3122
      %v3212 = vunpack.c.l.b16 %v3136
      %v3213 = vunpack.c.l.b16 %v3150
      %v3214 = vunpack.c.l.b16 %v3164
      %v3215 = vunpack.c.l.b16 %v3178
      %v3216 = vunpack.c.l.b16 %v3192
      %v3217 = vunpack.c.l.b16 %v3206
      %v3218 = vpack.c.b16 %v3211, %v3210
      %v3219 = vpack.c.b16 %v3213, %v3212
      %v3220 = vpack.c.b16 %v3215, %v3214
      %v3221 = vpack.c.b16 %v3217, %v3216
      %v3224 = vunpack.c.l.b16 %v3208
      %v3225 = vunpack.c.l.b16 %v3209
      %v3226 = vpack.c.b16 %v3225, %v3224
      %v3229 = vsel %vm340, %v3218, 0
      %v3232 = vsel %vm340, %v3219, 0
      %v3235 = vsel %vm340, %v3220, 0
      %v3238 = vsel %vm340, %v3221, 0
      %3240 = vmatprep.subr.bf16.mxu0 0
      %3241 = vmatpush1.bf16.msra.mxu0 %v3226
      %3242 = vmatprep.subr.bf16.mxu0 0
      %3243 = vmatpush1.bf16.msra.mxu0 0
      %3244 = vmatprep.subr.bf16.mxu0 0
      %3245 = vmatpush1.bf16.msra.mxu0 0
      %3246 = vmatprep.subr.bf16.mxu0 0
      %3247 = vmatpush1.bf16.msra.mxu0 0
      %3248 = vmatprep.subr.bf16.mxu0 0
      %3249 = vmatpush1.bf16.msra.mxu0 0
      %3250 = vmatprep.subr.bf16.mxu0 0
      %3251 = vmatpush1.bf16.msra.mxu0 0
      %3252 = vmatprep.subr.bf16.mxu0 0
      %3253 = vmatpush1.bf16.msra.mxu0 0
      %3254 = vmatprep.subr.bf16.mxu0 0
      %3255 = vmatpush1.bf16.msra.mxu0 0
      %3256 = vmatprep.subr.bf16.mxu0 0
      %3257 = vmatpush1.bf16.msra.mxu0 0
      %3258 = vmatprep.subr.bf16.mxu0 0
      %3259 = vmatpush1.bf16.msra.mxu0 0
      %3260 = vmatprep.subr.bf16.mxu0 0
      %3261 = vmatpush1.bf16.msra.mxu0 0
      %3262 = vmatprep.subr.bf16.mxu0 0
      %3263 = vmatpush1.bf16.msra.mxu0 0
      %3264 = vmatprep.subr.bf16.mxu0 0
      %3265 = vmatpush1.bf16.msra.mxu0 0
      %3266 = vmatprep.subr.bf16.mxu0 0
      %3267 = vmatpush1.bf16.msra.mxu0 0
      %3268 = vmatprep.subr.bf16.mxu0 0
      %3269 = vmatpush1.bf16.msra.mxu0 0
      %3270 = vmatprep.subr.bf16.mxu0 0
      %3271 = vmatpush1.bf16.msra.mxu0 0
      %3272 = vmatprep.mubr.bf16.mxu0 0
      %3273 = vmatmul.mubr.bf16.gmra.mrb[0].mxu0 %v3229
      %v3274 = vpop.f32.mrb[0].mxu0
      %v3275 = vadd.f32 0.0, %v3274
      %v3276 = vpop.f32.mrb[0].mxu0
      %v3277 = vpop.f32.mrb[0].mxu0
      %v3278 = vadd.f32 0.0, %v3277
      %v3279 = vpop.f32.mrb[0].mxu0
      %3280 = vmatprep.mubr.bf16.mxu0 0
      %3281 = vmatmul.mubr.bf16.gmra.mrb[0].mxu0 %v3232
      %v3282 = vpop.f32.mrb[0].mxu0
      %v3283 = vadd.f32 0.0, %v3282
      %v3284 = vpop.f32.mrb[0].mxu0
      %v3285 = vpop.f32.mrb[0].mxu0
      %v3286 = vadd.f32 0.0, %v3285
      %v3287 = vpop.f32.mrb[0].mxu0
      %3288 = vmatprep.mubr.bf16.mxu0 0
      %3289 = vmatmul.mubr.bf16.gmra.mrb[0].mxu0 %v3235
      %v3290 = vpop.f32.mrb[0].mxu0
      %v3291 = vadd.f32 0.0, %v3290
      %v3292 = vpop.f32.mrb[0].mxu0
      %v3293 = vpop.f32.mrb[0].mxu0
      %v3294 = vadd.f32 0.0, %v3293
      %v3295 = vpop.f32.mrb[0].mxu0
      %3296 = vmatprep.mubr.bf16.mxu0 0
      %3297 = vmatmul.mubr.bf16.gmra.mrb[0].mxu0 %v3238
      %v3298 = vpop.f32.mrb[0].mxu0
      %v3299 = vadd.f32 0.0, %v3298
      %v3300 = vpop.f32.mrb[0].mxu0
      %v3301 = vpop.f32.mrb[0].mxu0
      %v3302 = vadd.f32 0.0, %v3301
      %v3303 = vpop.f32.mrb[0].mxu0
      %3304 = vdwg.mxu0
      %v3305 = vadd.f32 %v3071, %v3275
      %v3306 = vadd.f32 %v3072, %v3278
      %v3307 = vadd.f32 %v3073, %v3283
      %v3308 = vadd.f32 %v3074, %v3286
      %v3309 = vadd.f32 %v3075, %v3291
      %v3310 = vadd.f32 %v3076, %v3294
      %v3311 = vadd.f32 %v3077, %v3299
      %v3312 = vadd.f32 %v3078, %v3302
      %v3313 = vld [vmem:[%s630] sm:$0xe]
      %v3314 = vld [vmem:[%s630 + $0x8] sm:$0xe]
      %v3315 = vld [vmem:[%s630 + $0x10] sm:$0xe]
      %v3316 = vld [vmem:[%s630 + $0x18] sm:$0xe]
      %v3317 = vld [vmem:[%s630 + $0x20] sm:$0xe]
      %v3318 = vld [vmem:[%s630 + $0x28] sm:$0xe]
      %v3319 = vld [vmem:[%s630 + $0x30] sm:$0xe]
      %v3320 = vld [vmem:[%s630 + $0x38] sm:$0xe]
      %v3337 = vrot.slane %v3313, 5
      %v3338 = vrot.slane %v3337, 4
      %v3339 = vrot.slane %v3080, 5
      %v3340 = vsel %vm1041, %v3338, %v3339
      %v3341 = vrot.slane %v3314, 5
      %v3342 = vrot.slane %v3341, 4
      %v3343 = vrot.slane %v3082, 5
      %v3344 = vsel %vm1041, %v3342, %v3343
      %v3345 = vrot.slane %v3315, 5
      %v3346 = vrot.slane %v3345, 4
      %v3347 = vrot.slane %v3084, 5
      %v3348 = vsel %vm1041, %v3346, %v3347
      %v3349 = vrot.slane %v3316, 5
      %v3350 = vrot.slane %v3349, 4
      %v3351 = vrot.slane %v3086, 5
      %v3352 = vsel %vm1041, %v3350, %v3351
      %v3353 = vrot.slane %v3317, 5
      %v3354 = vrot.slane %v3353, 4
      %v3355 = vrot.slane %v3088, 5
      %v3356 = vsel %vm1041, %v3354, %v3355
      %v3357 = vrot.slane %v3318, 5
      %v3358 = vrot.slane %v3357, 4
      %v3359 = vrot.slane %v3090, 5
      %v3360 = vsel %vm1041, %v3358, %v3359
      %v3361 = vrot.slane %v3319, 5
      %v3362 = vrot.slane %v3361, 4
      %v3363 = vrot.slane %v3092, 5
      %v3364 = vsel %vm1041, %v3362, %v3363
      %v3365 = vrot.slane %v3320, 5
      %v3366 = vrot.slane %v3365, 4
      %v3367 = vrot.slane %v3094, 5
      %v3368 = vsel %vm1041, %v3366, %v3367
      %s3369 = scalar_lea.vmem %s4, 112
      %v3370 = vld [vmem:[%s3369] sm:$0xf]
      %v3371 = vld [vmem:[%s3369 + $0x4] sm:$0xf]
      %v3372 = vunpack.c.l.b16 %v3340
      %v3373 = vunpack.c.l.b16 %v3344
      %v3374 = vunpack.c.l.b16 %v3348
      %v3375 = vunpack.c.l.b16 %v3352
      %v3376 = vunpack.c.l.b16 %v3356
      %v3377 = vunpack.c.l.b16 %v3360
      %v3378 = vunpack.c.l.b16 %v3364
      %v3379 = vunpack.c.l.b16 %v3368
      %v3380 = vpack.c.b16 %v3373, %v3372
      %v3381 = vpack.c.b16 %v3375, %v3374
      %v3382 = vpack.c.b16 %v3377, %v3376
      %v3383 = vpack.c.b16 %v3379, %v3378
      %v3386 = vunpack.c.l.b16 %v3370
      %v3387 = vunpack.c.l.b16 %v3371
      %v3388 = vpack.c.b16 %v3387, %v3386
      %v3391 = vsel %vm340, %v3380, 0
      %v3394 = vsel %vm340, %v3381, 0
      %v3397 = vsel %vm340, %v3382, 0
      %v3400 = vsel %vm340, %v3383, 0
      %3402 = vmatprep.subr.bf16.mxu0 0
      %3403 = vmatpush1.bf16.msra.mxu0 %v3388
      %3404 = vmatprep.subr.bf16.mxu0 0
      %3405 = vmatpush1.bf16.msra.mxu0 0
      %3406 = vmatprep.subr.bf16.mxu0 0
      %3407 = vmatpush1.bf16.msra.mxu0 0
      %3408 = vmatprep.subr.bf16.mxu0 0
      %3409 = vmatpush1.bf16.msra.mxu0 0
      %3410 = vmatprep.subr.bf16.mxu0 0
      %3411 = vmatpush1.bf16.msra.mxu0 0
      %3412 = vmatprep.subr.bf16.mxu0 0
      %3413 = vmatpush1.bf16.msra.mxu0 0
      %3414 = vmatprep.subr.bf16.mxu0 0
      %3415 = vmatpush1.bf16.msra.mxu0 0
      %3416 = vmatprep.subr.bf16.mxu0 0
      %3417 = vmatpush1.bf16.msra.mxu0 0
      %3418 = vmatprep.subr.bf16.mxu0 0
      %3419 = vmatpush1.bf16.msra.mxu0 0
      %3420 = vmatprep.subr.bf16.mxu0 0
      %3421 = vmatpush1.bf16.msra.mxu0 0
      %3422 = vmatprep.subr.bf16.mxu0 0
      %3423 = vmatpush1.bf16.msra.mxu0 0
      %3424 = vmatprep.subr.bf16.mxu0 0
      %3425 = vmatpush1.bf16.msra.mxu0 0
      %3426 = vmatprep.subr.bf16.mxu0 0
      %3427 = vmatpush1.bf16.msra.mxu0 0
      %3428 = vmatprep.subr.bf16.mxu0 0
      %3429 = vmatpush1.bf16.msra.mxu0 0
      %3430 = vmatprep.subr.bf16.mxu0 0
      %3431 = vmatpush1.bf16.msra.mxu0 0
      %3432 = vmatprep.subr.bf16.mxu0 0
      %3433 = vmatpush1.bf16.msra.mxu0 0
      %3434 = vmatprep.mubr.bf16.mxu0 0
      %3435 = vmatmul.mubr.bf16.gmra.mrb[0].mxu0 %v3391
      %v3436 = vpop.f32.mrb[0].mxu0
      %v3437 = vadd.f32 0.0, %v3436
      %v3438 = vpop.f32.mrb[0].mxu0
      %v3439 = vpop.f32.mrb[0].mxu0
      %v3440 = vadd.f32 0.0, %v3439
      %v3441 = vpop.f32.mrb[0].mxu0
      %3442 = vmatprep.mubr.bf16.mxu0 0
      %3443 = vmatmul.mubr.bf16.gmra.mrb[0].mxu0 %v3394
      %v3444 = vpop.f32.mrb[0].mxu0
      %v3445 = vadd.f32 0.0, %v3444
      %v3446 = vpop.f32.mrb[0].mxu0
      %v3447 = vpop.f32.mrb[0].mxu0
      %v3448 = vadd.f32 0.0, %v3447
      %v3449 = vpop.f32.mrb[0].mxu0
      %3450 = vmatprep.mubr.bf16.mxu0 0
      %3451 = vmatmul.mubr.bf16.gmra.mrb[0].mxu0 %v3397
      %v3452 = vpop.f32.mrb[0].mxu0
      %v3453 = vadd.f32 0.0, %v3452
      %v3454 = vpop.f32.mrb[0].mxu0
      %v3455 = vpop.f32.mrb[0].mxu0
      %v3456 = vadd.f32 0.0, %v3455
      %v3457 = vpop.f32.mrb[0].mxu0
      %3458 = vmatprep.mubr.bf16.mxu0 0
      %3459 = vmatmul.mubr.bf16.gmra.mrb[0].mxu0 %v3400
      %v3460 = vpop.f32.mrb[0].mxu0
      %v3461 = vadd.f32 0.0, %v3460
      %v3462 = vpop.f32.mrb[0].mxu0
      %v3463 = vpop.f32.mrb[0].mxu0
      %v3464 = vadd.f32 0.0, %v3463
      %v3465 = vpop.f32.mrb[0].mxu0
      %3466 = vdwg.mxu0
      %v3467 = vadd.f32 %v3305, %v3437
      %v3468 = vadd.f32 %v3306, %v3440
      %v3469 = vadd.f32 %v3307, %v3445
      %v3470 = vadd.f32 %v3308, %v3448
      %v3471 = vadd.f32 %v3309, %v3453
      %v3472 = vadd.f32 %v3310, %v3456
      %v3473 = vadd.f32 %v3311, %v3461
      %v3474 = vadd.f32 %v3312, %v3464
      %v3475 = vld [vmem:[%s1698] sm:$0xf]
      %v3476 = vld [vmem:[%s1698 + $0x8] sm:$0xf]
      %v3477 = vld [vmem:[%s1698 + $0x10] sm:$0xf]
      %v3478 = vld [vmem:[%s1698 + $0x18] sm:$0xf]
      %v3479 = vld [vmem:[%s1698 + $0x20] sm:$0xf]
      %v3480 = vld [vmem:[%s1698 + $0x28] sm:$0xf]
      %v3481 = vld [vmem:[%s1698 + $0x30] sm:$0xf]
      %v3482 = vld [vmem:[%s1698 + $0x38] sm:$0xf]
      %s3483 = scalar_lea.vmem %s4, 120
      %v3484 = vld [vmem:[%s3483] sm:$0xf]
      %v3485 = vld [vmem:[%s3483 + $0x4] sm:$0xf]
      %v3494 = vunpack.c.l.b16 %v3475
      %v3495 = vunpack.c.l.b16 %v3476
      %v3496 = vunpack.c.l.b16 %v3477
      %v3497 = vunpack.c.l.b16 %v3478
      %v3498 = vunpack.c.l.b16 %v3479
      %v3499 = vunpack.c.l.b16 %v3480
      %v3500 = vunpack.c.l.b16 %v3481
      %v3501 = vunpack.c.l.b16 %v3482
      %v3502 = vpack.c.b16 %v3495, %v3494
      %v3503 = vpack.c.b16 %v3497, %v3496
      %v3504 = vpack.c.b16 %v3499, %v3498
      %v3505 = vpack.c.b16 %v3501, %v3500
      %v3508 = vunpack.c.l.b16 %v3484
      %v3509 = vunpack.c.l.b16 %v3485
      %v3510 = vpack.c.b16 %v3509, %v3508
      %v3513 = vsel %vm340, %v3502, 0
      %v3516 = vsel %vm340, %v3503, 0
      %v3519 = vsel %vm340, %v3504, 0
      %v3522 = vsel %vm340, %v3505, 0
      %3524 = vmatprep.subr.bf16.mxu0 0
      %3525 = vmatpush1.bf16.msra.mxu0 %v3510
      %3526 = vmatprep.subr.bf16.mxu0 0
      %3527 = vmatpush1.bf16.msra.mxu0 0
      %3528 = vmatprep.subr.bf16.mxu0 0
      %3529 = vmatpush1.bf16.msra.mxu0 0
      %3530 = vmatprep.subr.bf16.mxu0 0
      %3531 = vmatpush1.bf16.msra.mxu0 0
      %3532 = vmatprep.subr.bf16.mxu0 0
      %3533 = vmatpush1.bf16.msra.mxu0 0
      %3534 = vmatprep.subr.bf16.mxu0 0
      %3535 = vmatpush1.bf16.msra.mxu0 0
      %3536 = vmatprep.subr.bf16.mxu0 0
      %3537 = vmatpush1.bf16.msra.mxu0 0
      %3538 = vmatprep.subr.bf16.mxu0 0
      %3539 = vmatpush1.bf16.msra.mxu0 0
      %3540 = vmatprep.subr.bf16.mxu0 0
      %3541 = vmatpush1.bf16.msra.mxu0 0
      %3542 = vmatprep.subr.bf16.mxu0 0
      %3543 = vmatpush1.bf16.msra.mxu0 0
      %3544 = vmatprep.subr.bf16.mxu0 0
      %3545 = vmatpush1.bf16.msra.mxu0 0
      %3546 = vmatprep.subr.bf16.mxu0 0
      %3547 = vmatpush1.bf16.msra.mxu0 0
      %3548 = vmatprep.subr.bf16.mxu0 0
      %3549 = vmatpush1.bf16.msra.mxu0 0
      %3550 = vmatprep.subr.bf16.mxu0 0
      %3551 = vmatpush1.bf16.msra.mxu0 0
      %3552 = vmatprep.subr.bf16.mxu0 0
      %3553 = vmatpush1.bf16.msra.mxu0 0
      %3554 = vmatprep.subr.bf16.mxu0 0
      %3555 = vmatpush1.bf16.msra.mxu0 0
      %3556 = vmatprep.mubr.bf16.mxu0 0
      %3557 = vmatmul.mubr.bf16.gmra.mrb[0].mxu0 %v3513
      %v3558 = vpop.f32.mrb[0].mxu0
      %v3559 = vadd.f32 0.0, %v3558
      %v3560 = vpop.f32.mrb[0].mxu0
      %v3561 = vpop.f32.mrb[0].mxu0
      %v3562 = vadd.f32 0.0, %v3561
      %v3563 = vpop.f32.mrb[0].mxu0
      %3564 = vmatprep.mubr.bf16.mxu0 0
      %3565 = vmatmul.mubr.bf16.gmra.mrb[0].mxu0 %v3516
      %v3566 = vpop.f32.mrb[0].mxu0
      %v3567 = vadd.f32 0.0, %v3566
      %v3568 = vpop.f32.mrb[0].mxu0
      %v3569 = vpop.f32.mrb[0].mxu0
      %v3570 = vadd.f32 0.0, %v3569
      %v3571 = vpop.f32.mrb[0].mxu0
      %3572 = vmatprep.mubr.bf16.mxu0 0
      %3573 = vmatmul.mubr.bf16.gmra.mrb[0].mxu0 %v3519
      %v3574 = vpop.f32.mrb[0].mxu0
      %v3575 = vadd.f32 0.0, %v3574
      %v3576 = vpop.f32.mrb[0].mxu0
      %v3577 = vpop.f32.mrb[0].mxu0
      %v3578 = vadd.f32 0.0, %v3577
      %v3579 = vpop.f32.mrb[0].mxu0
      %3580 = vmatprep.mubr.bf16.mxu0 0
      %3581 = vmatmul.mubr.bf16.gmra.mrb[0].mxu0 %v3522
      %v3582 = vpop.f32.mrb[0].mxu0
      %v3583 = vadd.f32 0.0, %v3582
      %v3584 = vpop.f32.mrb[0].mxu0
      %v3585 = vpop.f32.mrb[0].mxu0
      %v3586 = vadd.f32 0.0, %v3585
      %v3587 = vpop.f32.mrb[0].mxu0
      %3588 = vdwg.mxu0
      %v3589 = vadd.f32 %v3467, %v3559
      %v3590 = vadd.f32 %v3468, %v3562
      %v3591 = vadd.f32 %v3469, %v3567
      %v3592 = vadd.f32 %v3470, %v3570
      %v3593 = vadd.f32 %v3471, %v3575
      %v3594 = vadd.f32 %v3472, %v3578
      %v3595 = vadd.f32 %v3473, %v3583
      %v3596 = vadd.f32 %v3474, %v3586
      %v3597 = vld [vmem:[%s1698] sm:$0xf]
      %v3598 = vld [vmem:[%s1698 + $0x4] sm:$0x1]
      %v3599 = vld [vmem:[%s1698 + $0x8] sm:$0xf]
      %v3600 = vld [vmem:[%s1698 + $0xc] sm:$0x1]
      %v3601 = vld [vmem:[%s1698 + $0x10] sm:$0xf]
      %v3602 = vld [vmem:[%s1698 + $0x14] sm:$0x1]
      %v3603 = vld [vmem:[%s1698 + $0x18] sm:$0xf]
      %v3604 = vld [vmem:[%s1698 + $0x1c] sm:$0x1]
      %v3605 = vld [vmem:[%s1698 + $0x20] sm:$0xf]
      %v3606 = vld [vmem:[%s1698 + $0x24] sm:$0x1]
      %v3607 = vld [vmem:[%s1698 + $0x28] sm:$0xf]
      %v3608 = vld [vmem:[%s1698 + $0x2c] sm:$0x1]
      %v3609 = vld [vmem:[%s1698 + $0x30] sm:$0xf]
      %v3610 = vld [vmem:[%s1698 + $0x34] sm:$0x1]
      %v3611 = vld [vmem:[%s1698 + $0x38] sm:$0xf]
      %v3612 = vld [vmem:[%s1698 + $0x3c] sm:$0x1]
      %v3614 = vshrl.u32 %v3597, 16
      %v3616 = vrot.slane %v3614, 4
      %v3617 = vshll.u32 %v3597, 16
      %v3619 = vrot.slane %v3617, 5
      %v3620 = vor.u32 %v3616, %v3619
      %v3621 = vrot.slane %v3620, 4
      %v3623 = vshll.u32 %v3598, 16
      %v3625 = vrot.slane %v3623, 5
      %v3626 = vsel %vm701, %v3621, %v3625
      %v3628 = vshrl.u32 %v3599, 16
      %v3630 = vrot.slane %v3628, 4
      %v3631 = vshll.u32 %v3599, 16
      %v3633 = vrot.slane %v3631, 5
      %v3634 = vor.u32 %v3630, %v3633
      %v3635 = vrot.slane %v3634, 4
      %v3637 = vshll.u32 %v3600, 16
      %v3639 = vrot.slane %v3637, 5
      %v3640 = vsel %vm701, %v3635, %v3639
      %v3642 = vshrl.u32 %v3601, 16
      %v3644 = vrot.slane %v3642, 4
      %v3645 = vshll.u32 %v3601, 16
      %v3647 = vrot.slane %v3645, 5
      %v3648 = vor.u32 %v3644, %v3647
      %v3649 = vrot.slane %v3648, 4
      %v3651 = vshll.u32 %v3602, 16
      %v3653 = vrot.slane %v3651, 5
      %v3654 = vsel %vm701, %v3649, %v3653
      %v3656 = vshrl.u32 %v3603, 16
      %v3658 = vrot.slane %v3656, 4
      %v3659 = vshll.u32 %v3603, 16
      %v3661 = vrot.slane %v3659, 5
      %v3662 = vor.u32 %v3658, %v3661
      %v3663 = vrot.slane %v3662, 4
      %v3665 = vshll.u32 %v3604, 16
      %v3667 = vrot.slane %v3665, 5
      %v3668 = vsel %vm701, %v3663, %v3667
      %v3670 = vshrl.u32 %v3605, 16
      %v3672 = vrot.slane %v3670, 4
      %v3673 = vshll.u32 %v3605, 16
      %v3675 = vrot.slane %v3673, 5
      %v3676 = vor.u32 %v3672, %v3675
      %v3677 = vrot.slane %v3676, 4
      %v3679 = vshll.u32 %v3606, 16
      %v3681 = vrot.slane %v3679, 5
      %v3682 = vsel %vm701, %v3677, %v3681
      %v3684 = vshrl.u32 %v3607, 16
      %v3686 = vrot.slane %v3684, 4
      %v3687 = vshll.u32 %v3607, 16
      %v3689 = vrot.slane %v3687, 5
      %v3690 = vor.u32 %v3686, %v3689
      %v3691 = vrot.slane %v3690, 4
      %v3693 = vshll.u32 %v3608, 16
      %v3695 = vrot.slane %v3693, 5
      %v3696 = vsel %vm701, %v3691, %v3695
      %v3698 = vshrl.u32 %v3609, 16
      %v3700 = vrot.slane %v3698, 4
      %v3701 = vshll.u32 %v3609, 16
      %v3703 = vrot.slane %v3701, 5
      %v3704 = vor.u32 %v3700, %v3703
      %v3705 = vrot.slane %v3704, 4
      %v3707 = vshll.u32 %v3610, 16
      %v3709 = vrot.slane %v3707, 5
      %v3710 = vsel %vm701, %v3705, %v3709
      %v3712 = vshrl.u32 %v3611, 16
      %v3714 = vrot.slane %v3712, 4
      %v3715 = vshll.u32 %v3611, 16
      %v3717 = vrot.slane %v3715, 5
      %v3718 = vor.u32 %v3714, %v3717
      %v3719 = vrot.slane %v3718, 4
      %v3721 = vshll.u32 %v3612, 16
      %v3723 = vrot.slane %v3721, 5
      %v3724 = vsel %vm701, %v3719, %v3723
      %s3725 = scalar_lea.vmem %s4, 128
      %v3726 = vld [vmem:[%s3725] sm:$0xf]
      %v3727 = vld [vmem:[%s3725 + $0x4] sm:$0xf]
      %v3728 = vunpack.c.l.b16 %v3626
      %v3729 = vunpack.c.l.b16 %v3640
      %v3730 = vunpack.c.l.b16 %v3654
      %v3731 = vunpack.c.l.b16 %v3668
      %v3732 = vunpack.c.l.b16 %v3682
      %v3733 = vunpack.c.l.b16 %v3696
      %v3734 = vunpack.c.l.b16 %v3710
      %v3735 = vunpack.c.l.b16 %v3724
      %v3736 = vpack.c.b16 %v3729, %v3728
      %v3737 = vpack.c.b16 %v3731, %v3730
      %v3738 = vpack.c.b16 %v3733, %v3732
      %v3739 = vpack.c.b16 %v3735, %v3734
      %v3742 = vunpack.c.l.b16 %v3726
      %v3743 = vunpack.c.l.b16 %v3727
      %v3744 = vpack.c.b16 %v3743, %v3742
      %v3747 = vsel %vm340, %v3736, 0
      %v3750 = vsel %vm340, %v3737, 0
      %v3753 = vsel %vm340, %v3738, 0
      %v3756 = vsel %vm340, %v3739, 0
      %3758 = vmatprep.subr.bf16.mxu0 0
      %3759 = vmatpush1.bf16.msra.mxu0 %v3744
      %3760 = vmatprep.subr.bf16.mxu0 0
      %3761 = vmatpush1.bf16.msra.mxu0 0
      %3762 = vmatprep.subr.bf16.mxu0 0
      %3763 = vmatpush1.bf16.msra.mxu0 0
      %3764 = vmatprep.subr.bf16.mxu0 0
      %3765 = vmatpush1.bf16.msra.mxu0 0
      %3766 = vmatprep.subr.bf16.mxu0 0
      %3767 = vmatpush1.bf16.msra.mxu0 0
      %3768 = vmatprep.subr.bf16.mxu0 0
      %3769 = vmatpush1.bf16.msra.mxu0 0
      %3770 = vmatprep.subr.bf16.mxu0 0
      %3771 = vmatpush1.bf16.msra.mxu0 0
      %3772 = vmatprep.subr.bf16.mxu0 0
      %3773 = vmatpush1.bf16.msra.mxu0 0
      %3774 = vmatprep.subr.bf16.mxu0 0
      %3775 = vmatpush1.bf16.msra.mxu0 0
      %3776 = vmatprep.subr.bf16.mxu0 0
      %3777 = vmatpush1.bf16.msra.mxu0 0
      %3778 = vmatprep.subr.bf16.mxu0 0
      %3779 = vmatpush1.bf16.msra.mxu0 0
      %3780 = vmatprep.subr.bf16.mxu0 0
      %3781 = vmatpush1.bf16.msra.mxu0 0
      %3782 = vmatprep.subr.bf16.mxu0 0
      %3783 = vmatpush1.bf16.msra.mxu0 0
      %3784 = vmatprep.subr.bf16.mxu0 0
      %3785 = vmatpush1.bf16.msra.mxu0 0
      %3786 = vmatprep.subr.bf16.mxu0 0
      %3787 = vmatpush1.bf16.msra.mxu0 0
      %3788 = vmatprep.subr.bf16.mxu0 0
      %3789 = vmatpush1.bf16.msra.mxu0 0
      %3790 = vmatprep.mubr.bf16.mxu0 0
      %3791 = vmatmul.mubr.bf16.gmra.mrb[0].mxu0 %v3747
      %v3792 = vpop.f32.mrb[0].mxu0
      %v3793 = vadd.f32 0.0, %v3792
      %v3794 = vpop.f32.mrb[0].mxu0
      %v3795 = vpop.f32.mrb[0].mxu0
      %v3796 = vadd.f32 0.0, %v3795
      %v3797 = vpop.f32.mrb[0].mxu0
      %3798 = vmatprep.mubr.bf16.mxu0 0
      %3799 = vmatmul.mubr.bf16.gmra.mrb[0].mxu0 %v3750
      %v3800 = vpop.f32.mrb[0].mxu0
      %v3801 = vadd.f32 0.0, %v3800
      %v3802 = vpop.f32.mrb[0].mxu0
      %v3803 = vpop.f32.mrb[0].mxu0
      %v3804 = vadd.f32 0.0, %v3803
      %v3805 = vpop.f32.mrb[0].mxu0
      %3806 = vmatprep.mubr.bf16.mxu0 0
      %3807 = vmatmul.mubr.bf16.gmra.mrb[0].mxu0 %v3753
      %v3808 = vpop.f32.mrb[0].mxu0
      %v3809 = vadd.f32 0.0, %v3808
      %v3810 = vpop.f32.mrb[0].mxu0
      %v3811 = vpop.f32.mrb[0].mxu0
      %v3812 = vadd.f32 0.0, %v3811
      %v3813 = vpop.f32.mrb[0].mxu0
      %3814 = vmatprep.mubr.bf16.mxu0 0
      %3815 = vmatmul.mubr.bf16.gmra.mrb[0].mxu0 %v3756
      %v3816 = vpop.f32.mrb[0].mxu0
      %v3817 = vadd.f32 0.0, %v3816
      %v3818 = vpop.f32.mrb[0].mxu0
      %v3819 = vpop.f32.mrb[0].mxu0
      %v3820 = vadd.f32 0.0, %v3819
      %v3821 = vpop.f32.mrb[0].mxu0
      %3822 = vdwg.mxu0
      %v3823 = vadd.f32 %v3589, %v3793
      %v3824 = vadd.f32 %v3590, %v3796
      %v3825 = vadd.f32 %v3591, %v3801
      %v3826 = vadd.f32 %v3592, %v3804
      %v3827 = vadd.f32 %v3593, %v3809
      %v3828 = vadd.f32 %v3594, %v3812
      %v3829 = vadd.f32 %v3595, %v3817
      %v3830 = vadd.f32 %v3596, %v3820
      %v3831 = vld [vmem:[%s1698] sm:$0xe]
      %v3832 = vld [vmem:[%s1698 + $0x8] sm:$0xe]
      %v3833 = vld [vmem:[%s1698 + $0x10] sm:$0xe]
      %v3834 = vld [vmem:[%s1698 + $0x18] sm:$0xe]
      %v3835 = vld [vmem:[%s1698 + $0x20] sm:$0xe]
      %v3836 = vld [vmem:[%s1698 + $0x28] sm:$0xe]
      %v3837 = vld [vmem:[%s1698 + $0x30] sm:$0xe]
      %v3838 = vld [vmem:[%s1698 + $0x38] sm:$0xe]
      %v3855 = vrot.slane %v3831, 5
      %v3856 = vrot.slane %v3855, 4
      %v3857 = vrot.slane %v3598, 5
      %v3858 = vsel %vm1041, %v3856, %v3857
      %v3859 = vrot.slane %v3832, 5
      %v3860 = vrot.slane %v3859, 4
      %v3861 = vrot.slane %v3600, 5
      %v3862 = vsel %vm1041, %v3860, %v3861
      %v3863 = vrot.slane %v3833, 5
      %v3864 = vrot.slane %v3863, 4
      %v3865 = vrot.slane %v3602, 5
      %v3866 = vsel %vm1041, %v3864, %v3865
      %v3867 = vrot.slane %v3834, 5
      %v3868 = vrot.slane %v3867, 4
      %v3869 = vrot.slane %v3604, 5
      %v3870 = vsel %vm1041, %v3868, %v3869
      %v3871 = vrot.slane %v3835, 5
      %v3872 = vrot.slane %v3871, 4
      %v3873 = vrot.slane %v3606, 5
      %v3874 = vsel %vm1041, %v3872, %v3873
      %v3875 = vrot.slane %v3836, 5
      %v3876 = vrot.slane %v3875, 4
      %v3877 = vrot.slane %v3608, 5
      %v3878 = vsel %vm1041, %v3876, %v3877
      %v3879 = vrot.slane %v3837, 5
      %v3880 = vrot.slane %v3879, 4
      %v3881 = vrot.slane %v3610, 5
      %v3882 = vsel %vm1041, %v3880, %v3881
      %v3883 = vrot.slane %v3838, 5
      %v3884 = vrot.slane %v3883, 4
      %v3885 = vrot.slane %v3612, 5
      %v3886 = vsel %vm1041, %v3884, %v3885
      %s3887 = scalar_lea.vmem %s4, 136
      %v3888 = vld [vmem:[%s3887] sm:$0xf]
      %v3889 = vld [vmem:[%s3887 + $0x4] sm:$0xf]
      %v3890 = vunpack.c.l.b16 %v3858
      %v3891 = vunpack.c.l.b16 %v3862
      %v3892 = vunpack.c.l.b16 %v3866
      %v3893 = vunpack.c.l.b16 %v3870
      %v3894 = vunpack.c.l.b16 %v3874
      %v3895 = vunpack.c.l.b16 %v3878
      %v3896 = vunpack.c.l.b16 %v3882
      %v3897 = vunpack.c.l.b16 %v3886
      %v3898 = vpack.c.b16 %v3891, %v3890
      %v3899 = vpack.c.b16 %v3893, %v3892
      %v3900 = vpack.c.b16 %v3895, %v3894
      %v3901 = vpack.c.b16 %v3897, %v3896
      %v3904 = vunpack.c.l.b16 %v3888
      %v3905 = vunpack.c.l.b16 %v3889
      %v3906 = vpack.c.b16 %v3905, %v3904
      %v3909 = vsel %vm340, %v3898, 0
      %v3912 = vsel %vm340, %v3899, 0
      %v3915 = vsel %vm340, %v3900, 0
      %v3918 = vsel %vm340, %v3901, 0
      %3920 = vmatprep.subr.bf16.mxu0 0
      %3921 = vmatpush1.bf16.msra.mxu0 %v3906
      %3922 = vmatprep.subr.bf16.mxu0 0
      %3923 = vmatpush1.bf16.msra.mxu0 0
      %3924 = vmatprep.subr.bf16.mxu0 0
      %3925 = vmatpush1.bf16.msra.mxu0 0
      %3926 = vmatprep.subr.bf16.mxu0 0
      %3927 = vmatpush1.bf16.msra.mxu0 0
      %3928 = vmatprep.subr.bf16.mxu0 0
      %3929 = vmatpush1.bf16.msra.mxu0 0
      %3930 = vmatprep.subr.bf16.mxu0 0
      %3931 = vmatpush1.bf16.msra.mxu0 0
      %3932 = vmatprep.subr.bf16.mxu0 0
      %3933 = vmatpush1.bf16.msra.mxu0 0
      %3934 = vmatprep.subr.bf16.mxu0 0
      %3935 = vmatpush1.bf16.msra.mxu0 0
      %3936 = vmatprep.subr.bf16.mxu0 0
      %3937 = vmatpush1.bf16.msra.mxu0 0
      %3938 = vmatprep.subr.bf16.mxu0 0
      %3939 = vmatpush1.bf16.msra.mxu0 0
      %3940 = vmatprep.subr.bf16.mxu0 0
      %3941 = vmatpush1.bf16.msra.mxu0 0
      %3942 = vmatprep.subr.bf16.mxu0 0
      %3943 = vmatpush1.bf16.msra.mxu0 0
      %3944 = vmatprep.subr.bf16.mxu0 0
      %3945 = vmatpush1.bf16.msra.mxu0 0
      %3946 = vmatprep.subr.bf16.mxu0 0
      %3947 = vmatpush1.bf16.msra.mxu0 0
      %3948 = vmatprep.subr.bf16.mxu0 0
      %3949 = vmatpush1.bf16.msra.mxu0 0
      %3950 = vmatprep.subr.bf16.mxu0 0
      %3951 = vmatpush1.bf16.msra.mxu0 0
      %3952 = vmatprep.mubr.bf16.mxu0 0
      %3953 = vmatmul.mubr.bf16.gmra.mrb[0].mxu0 %v3909
      %v3954 = vpop.f32.mrb[0].mxu0
      %v3955 = vadd.f32 0.0, %v3954
      %v3956 = vpop.f32.mrb[0].mxu0
      %v3957 = vpop.f32.mrb[0].mxu0
      %v3958 = vadd.f32 0.0, %v3957
      %v3959 = vpop.f32.mrb[0].mxu0
      %3960 = vmatprep.mubr.bf16.mxu0 0
      %3961 = vmatmul.mubr.bf16.gmra.mrb[0].mxu0 %v3912
      %v3962 = vpop.f32.mrb[0].mxu0
      %v3963 = vadd.f32 0.0, %v3962
      %v3964 = vpop.f32.mrb[0].mxu0
      %v3965 = vpop.f32.mrb[0].mxu0
      %v3966 = vadd.f32 0.0, %v3965
      %v3967 = vpop.f32.mrb[0].mxu0
      %3968 = vmatprep.mubr.bf16.mxu0 0
      %3969 = vmatmul.mubr.bf16.gmra.mrb[0].mxu0 %v3915
      %v3970 = vpop.f32.mrb[0].mxu0
      %v3971 = vadd.f32 0.0, %v3970
      %v3972 = vpop.f32.mrb[0].mxu0
      %v3973 = vpop.f32.mrb[0].mxu0
      %v3974 = vadd.f32 0.0, %v3973
      %v3975 = vpop.f32.mrb[0].mxu0
      %3976 = vmatprep.mubr.bf16.mxu0 0
      %3977 = vmatmul.mubr.bf16.gmra.mrb[0].mxu0 %v3918
      %v3978 = vpop.f32.mrb[0].mxu0
      %v3979 = vadd.f32 0.0, %v3978
      %v3980 = vpop.f32.mrb[0].mxu0
      %v3981 = vpop.f32.mrb[0].mxu0
      %v3982 = vadd.f32 0.0, %v3981
      %v3983 = vpop.f32.mrb[0].mxu0
      %3984 = vdwg.mxu0
      %v3985 = vadd.f32 %v3823, %v3955
      %v3986 = vadd.f32 %v3824, %v3958
      %v3987 = vadd.f32 %v3825, %v3963
      %v3988 = vadd.f32 %v3826, %v3966
      %v3989 = vadd.f32 %v3827, %v3971
      %v3990 = vadd.f32 %v3828, %v3974
      %v3991 = vadd.f32 %v3829, %v3979
      %v3992 = vadd.f32 %v3830, %v3982
      %v3993 = vld [vmem:[%s5 + $0x1] sm:$0x1]
      %v3994 = vlaneseq
      %v3995 = vshrl.u32 %v3994, 7
      %v3996 = vsub.s32 0, %v3995
      %v3997 = vrot.slane %v3993, %v3996
      %v3998 = vadd.f32 %v3985, %v3997
      %v3999 = vadd.f32 %v3986, %v3997
      %v4000 = vadd.f32 %v3987, %v3997
      %v4001 = vadd.f32 %v3988, %v3997
      %v4002 = vadd.f32 %v3989, %v3997
      %v4003 = vadd.f32 %v3990, %v3997
      %v4004 = vadd.f32 %v3991, %v3997
      %v4005 = vadd.f32 %v3992, %v3997
      %v4006 = vadd.f32 %v325, %v3998
      %v4007 = vadd.f32 %v326, %v3999
      %v4008 = vadd.f32 %v327, %v4000
      %v4009 = vadd.f32 %v328, %v4001
      %v4010 = vadd.f32 %v329, %v4002
      %v4011 = vadd.f32 %v330, %v4003
      %v4012 = vadd.f32 %v331, %v4004
      %v4013 = vadd.f32 %v332, %v4005
      %4014 = vst.msk [vmem:[%s251] sm:$0xff] %vm340, %v4006
      %4015 = vst.msk [vmem:[%s251 + $0x8] sm:$0xff] %vm340, %v4007
      %4016 = vst.msk [vmem:[%s251 + $0x10] sm:$0xff] %vm340, %v4008
      %4017 = vst.msk [vmem:[%s251 + $0x18] sm:$0xff] %vm340, %v4009
      %4018 = vst.msk [vmem:[%s251 + $0x20] sm:$0xff] %vm340, %v4010
      %4019 = vst.msk [vmem:[%s251 + $0x28] sm:$0xff] %vm340, %v4011
      %4020 = vst.msk [vmem:[%s251 + $0x30] sm:$0xff] %vm340, %v4012
      %4021 = vst.msk [vmem:[%s251 + $0x38] sm:$0xff] %vm340, %v4013
      %p4022 = scmp.lt.s32.totalorder %s17, 1
      %s4023 = scalar_select %p4022, %s17, 1
      %s4024 = smul.addr %s4023, 8
      %s4025 = smul.addr %s4024, 8
      %s4026 = scalar_lea.vmem %s6, %s4025
      // Predicated region
      $region45: #{wt_bottleneck_forward.2} parent=43 // pred_check
        %p4027 = pneg %p166
      $region46: #{wt_bottleneck_forward.2} parent=43 // pred_check_branch
        %4029 = sbr.rel (%p4027) target = $region48
      $region47: #{wt_bottleneck_forward.2} parent=43 // pred_region
        _
      $region48: #{wt_bottleneck_forward.2} parent=43 // pred_fallthru
        _
    $region44: #{wt_bottleneck_forward.2} parent=5 // pred_fallthru
      _
    %p4030 = scmp.le.s32.totalorder 2, %s12
    // Predicated region
    $region49: #{wt_bottleneck_forward.2} parent=5 // pred_check
      %p4031 = pneg %p4030
    $region50: #{wt_bottleneck_forward.2} parent=5 // pred_check_branch
      %4033 = sbr.rel (%p4031) target = $region52
    $region51: #{wt_bottleneck_forward.2} parent=5 // pred_region
      %s4034 = ssub.s32 %s12, 2
      // Predicated region
      $region53: #{wt_bottleneck_forward.2} parent=51 // pred_check
        %p4035 = pneg %p172
      $region54: #{wt_bottleneck_forward.2} parent=51 // pred_check_branch
        %4037 = sbr.rel (%p4035) target = $region56
      $region55: #{wt_bottleneck_forward.2} parent=51 // pred_region
        %p4038 = scmp.lt.s32.totalorder %s18, 1
        %s4039 = scalar_select %p4038, %s18, 1
        %s4040 = smul.addr %s4039, 8
        %s4041 = smul.addr %s4040, 8
        %s4042 = scalar_lea.vmem %s6, %s4041
      $region56: #{wt_bottleneck_forward.2} parent=51 // pred_fallthru
        _
    $region52: #{wt_bottleneck_forward.2} parent=5 // pred_fallthru
      _
  $region6: #{wt_bottleneck_forward.2} parent=0 // loop_footer
    %s16 = sadd.s32 1, %s12
  $region7: #{wt_bottleneck_forward.2} parent=0 // loop_footer_branch
    %11 = sbr.rel target = $region3
  $region8: #{wt_bottleneck_forward.2} parent=0 // loop_exit
    _

</llo_original>
